<compile_context>
chip_gen: v6e
topology: v6e:2x2x1
jax: 0.10.0
libtpu: 0.0.40
codegen_flags: <defaults>
</compile_context>

<pallas_src>
import functools

import numpy as np

import jax
import jax.numpy as jnp
from jax import lax
from jax.experimental import pallas as pl
from jax.experimental.pallas import tpu as pltpu

# ----------------- config (stands in for get_run_config()) -----------------
HIDDEN_DIM = 32          # hidden_dim
K_RATIO = 0.4            # K_ratio
NUM_LEARNER = 2          # num_learner
NUM_COLS = 3             # len(NUM)
CAT_COLS = 2             # len(CAT)
LABEL_COLS = 2           # len(LABEL)
CAT_NUM = [5, 7]         # cardinality of each categorical column
BATCH = 8

EPS = 1e-5


# =============================== packed-parameter layout ===============================

def make_layout(H, C, L, K, num_cols, cat_num, label_cols):
    """Row offsets of every parameter inside the two packed f32 slabs."""
    CH, CL, CLH = C * H, C * L, C * L * H
    TOT = sum(cat_num)

    def up8(x):
        return ((x + 7) // 8) * 8

    lay = {}
    # ---- wide slab: width = C*L*H (= 320) ----
    r = 0
    for name, rows in (("w1_big", CH), ("poolT", CL), ("vec", 13),
                       ("num_w", num_cols), ("cat_block", TOT), ("rep", C)):
        lay[name] = r
        r = up8(r + rows)
    lay["wide_rows"], lay["wide_cols"] = r, CLH
    # ---- small slab: width = H (= 32) ----
    r = 0
    for name, rows in (("gcn_w", CH), ("w1_bot", CH), ("w1_top", K * H),
                       ("wfi_w", CL), ("pred_w2", H), ("w2_big", CLH), ("pool", CLH)):
        lay[name] = r
        r = up8(r + rows)
    lay["small_rows"], lay["small_cols"] = r, H
    return lay


# =============================== fused Pallas kernel ===============================

def fused_kernel(inp_ref, wide_ref, small_ref, out_ref, *,
                 B, H, C, L, K, num_cols, cat_cols, cat_num, label_cols, lay):
    f32 = jnp.float32
    CH, CL, CLH = C * H, C * L, C * L * H
    OUT = label_cols + 1
    TOT = sum(cat_num)
    V = lay["vec"]

    # ---------------- unpack the two parameter slabs (static ref slices, no extra DMA) ----------
    w1_big = wide_ref[lay["w1_big"]:lay["w1_big"] + CH, :]            # (CH, CLH)
    poolT = wide_ref[lay["poolT"]:lay["poolT"] + CL, :]               # (CL, CLH)
    num_w = wide_ref[lay["num_w"]:lay["num_w"] + num_cols, :CH]       # (num_cols, CH)
    cat_block = wide_ref[lay["cat_block"]:lay["cat_block"] + TOT, :CH]
    rep = wide_ref[lay["rep"]:lay["rep"] + C, :CH]                    # (C, CH)

    num_b = wide_ref[V + 0:V + 1, :CH]
    b1w = wide_ref[V + 1:V + 2, :]
    g1w = wide_ref[V + 2:V + 3, :]
    be1w = wide_ref[V + 3:V + 4, :]
    b2w = wide_ref[V + 4:V + 5, :L * C]
    wfi_b = wide_ref[V + 5:V + 6, :L]
    wfi_g = wide_ref[V + 6:V + 7, :L]
    wfi_be = wide_ref[V + 7:V + 8, :L]
    gcn_b = wide_ref[V + 8:V + 9, :H]
    pred_b1 = wide_ref[V + 9:V + 10, :H]
    pred_g = wide_ref[V + 10:V + 11, :H]
    pred_be = wide_ref[V + 11:V + 12, :H]
    pred_b2 = wide_ref[V + 12:V + 13, :OUT]

    gcn_w = small_ref[lay["gcn_w"]:lay["gcn_w"] + CH, :]              # (CH, H)
    w1_bot = small_ref[lay["w1_bot"]:lay["w1_bot"] + CH, :]           # (CH, H)
    wfi_w = small_ref[lay["wfi_w"]:lay["wfi_w"] + CL, :L]             # (CL, L)
    pred_w2 = small_ref[lay["pred_w2"]:lay["pred_w2"] + H, :OUT]      # (H, OUT)
    w2_big = small_ref[lay["w2_big"]:lay["w2_big"] + CLH, :CL]        # (CLH, CL)
    pool = small_ref[lay["pool"]:lay["pool"] + CLH, :CL]              # (CLH, CL)

    inp = inp_ref[...]
    x_num = inp[:, :num_cols]                                         # (B, num_cols)
    x_cat = inp[:, num_cols:]                                         # (B, cat_cols)

    # ---------------- embeddings into lane-dense (B, C*H) slabs -------------------------------
    lane = lax.broadcasted_iota(jnp.int32, (B, CH), 1)
    mask_num = (lane < num_cols * H).astype(f32)
    mask_cat = 1.0 - mask_num

    emb_num = jnp.dot(x_num, num_w, preferred_element_type=f32) + num_b
    emb_num = jnp.maximum(emb_num, 0.0)                               # cat lanes stay exactly 0
    inv_nn = 1.0 / float(B * num_cols * H)
    mu = jnp.sum(emb_num) * inv_nn                                    # independent sum / sumsq
    ex2 = jnp.sum(emb_num * emb_num) * inv_nn
    var = jnp.maximum(ex2 - mu * mu, 0.0)
    emb_num = (emb_num - mu) * lax.rsqrt(var + EPS) * mask_num

    iota_cat = lax.broadcasted_iota(jnp.int32, (B, TOT), 1)
    onehot = jnp.zeros((B, TOT), f32)
    off = 0
    for i in range(cat_cols):
        idx = x_cat[:, i:i + 1].astype(jnp.int32) + off
        onehot = onehot + (iota_cat == idx).astype(f32)
        off += cat_num[i]
    emb_cat = jnp.dot(onehot, cat_block, preferred_element_type=f32)  # numeric lanes exactly 0
    inv_nc = 1.0 / float(B * cat_cols * H)
    mu = jnp.sum(emb_cat) * inv_nc
    ex2 = jnp.sum(emb_cat * emb_cat) * inv_nc
    var = jnp.maximum(ex2 - mu * mu, 0.0)
    emb_cat = (emb_cat - mu) * lax.rsqrt(var + EPS) * mask_cat

    femb = emb_num + emb_cat                                          # (B, C*H)

    # ---------------- feature-importance learners (all (column, learner) pairs, one MXU pass) ---
    hcl = jnp.maximum(jnp.dot(femb, w1_big, preferred_element_type=f32) + b1w, 0.0)   # (B, C*L*H)
    inv_H = 1.0 / float(H)
    sum1 = jnp.dot(hcl, pool, preferred_element_type=f32)             # (B, C*L)  independent
    sum2 = jnp.dot(hcl * hcl, pool, preferred_element_type=f32)       # (B, C*L)  independent
    mean_c = sum1 * inv_H
    var_c = jnp.maximum(sum2 * inv_H - mean_c * mean_c, 0.0)
    rstd_c = lax.rsqrt(var_c + EPS)
    rstd_w = jnp.dot(rstd_c, poolT, preferred_element_type=f32)               # independent expand
    mr_w = jnp.dot(mean_c * rstd_c, poolT, preferred_element_type=f32)        # independent expand
    hn = (hcl * rstd_w - mr_w) * g1w + be1w
    # TODO(synk): Dropout(p=0.5) between the LayerNorm and the final Linear is eval-mode identity.
    fi_flat = jnp.dot(hn, w2_big, preferred_element_type=f32) + b2w   # (B, L*C)
    inv_nf = 1.0 / float(B * L * C)
    mu = jnp.sum(fi_flat) * inv_nf
    ex2 = jnp.sum(fi_flat * fi_flat) * inv_nf
    var = jnp.maximum(ex2 - mu * mu, 0.0)
    fi_flat = (fi_flat - mu) * lax.rsqrt(var + EPS)

    # ---------------- learner weighting: Linear -> ReLU -> LayerNorm(L) -> softmax over L ------
    hw = jnp.maximum(jnp.dot(fi_flat, wfi_w, preferred_element_type=f32) + wfi_b, 0.0)
    inv_L = 1.0 / float(L)
    mu = jnp.sum(hw, axis=-1, keepdims=True) * inv_L
    ex2 = jnp.sum(hw * hw, axis=-1, keepdims=True) * inv_L
    var = jnp.maximum(ex2 - mu * mu, 0.0)
    hw = (hw - mu) * lax.rsqrt(var + EPS) * wfi_g + wfi_be
    hw = hw - jnp.max(hw, axis=-1, keepdims=True)
    ew = jnp.exp(hw)
    fi_w = ew * pl.reciprocal(jnp.sum(ew, axis=-1, keepdims=True), approx=True)   # (B, L)

    fi_final = jnp.zeros((B, C), f32)
    for l in range(L):
        fi_final = fi_final + fi_flat[:, l * C:(l + 1) * C] * fi_w[:, l:l + 1]

    # ---------------- reweight embeddings by per-column importance -----------------------------
    femb_w = femb * jnp.dot(fi_final, rep, preferred_element_type=f32)

    # ---------------- top-K mask via iterative min-index argmax (no MXU) -----------------------
    colf = lax.broadcasted_iota(jnp.int32, (B, C), 1).astype(f32)
    work = fi_final
    sel = jnp.zeros((B, C), f32)
    for _ in range(K):
        rmax = jnp.max(work, axis=1, keepdims=True)
        cand = jnp.where(work >= rmax, colf, float(C))
        amin = jnp.min(cand, axis=1, keepdims=True)
        first = (colf == amin).astype(f32)                            # lowest-index tie break
        sel = sel + first
        work = jnp.where(first > 0.0, -jnp.inf, work)

    # selected columns in ascending-index order (replaces argsort-based gather ordering)
    sel_col = []
    remaining = sel
    for _ in range(K):
        cand = jnp.where(remaining > 0.5, colf, float(C))
        ck = jnp.min(cand, axis=1, keepdims=True)                     # (B, 1)
        sel_col.append(ck)
        remaining = jnp.where(colf == ck, 0.0, remaining)

    # masked softmax over the top-K columns; off top-K is exactly 0
    rmax = jnp.max(jnp.where(sel > 0.5, fi_final, -jnp.inf), axis=1, keepdims=True)
    e = jnp.exp(fi_final - rmax) * sel
    imp = e * pl.reciprocal(jnp.sum(e, axis=1, keepdims=True), approx=True)        # (B, C)

    # ---------------- per-target-column dense GCN (edge softmax, symmetric normalization) -------
    rid = lax.broadcasted_iota(jnp.int32, (B, B), 0)
    cid = lax.broadcasted_iota(jnp.int32, (B, B), 1)
    offdiag = rid != cid
    col_iota = lax.broadcasted_iota(jnp.int32, (B, C), 1)

    # phase 1: Gram + exp per column; edge-row sums batched into (B, C)
    es_list, rs_list = [], []
    for t in range(C):
        p = jnp.where(col_iota == t, 0.0, imp) * sel[:, t:t + 1]      # rows with t in their top-K
        g = lax.dot_general(p, p, (((1,), (1,)), ((), ())),
                            preferred_element_type=f32)               # (B, B) Gram, no transpose
        # rows of `p` lie inside the probability simplex => g <= 1, exp never overflows (no max)
        es = jnp.where(offdiag & (g > 0.0), jnp.exp(g), 0.0)
        es_list.append(es)
        rs_list.append(jnp.sum(es, axis=1, keepdims=True))            # (B, 1)
    RS = jnp.concatenate(rs_list, axis=1)                             # (B, C)
    den = jnp.sum(RS, axis=0, keepdims=True)                          # (1, C) flat-softmax denoms
    inv_den = pl.reciprocal(jnp.maximum(den, 1e-30), approx=True)     # (1, C)
    dinv = lax.rsqrt(RS * inv_den + 1.0)                              # (B, C)  D^{-1/2}, self-loop 1

    # phase 2: aggregation; LN moments batched into (1, C)
    z = jnp.dot(femb_w, gcn_w, preferred_element_type=f32)            # shared X @ W, (B, H)
    o_list, s1_list, s2_list = [], [], []
    for t in range(C):
        dv = dinv[:, t:t + 1]
        zd = dv * z
        agg = dv * (inv_den[:, t:t + 1] *
                    jnp.dot(es_list[t], zd, preferred_element_type=f32) + zd)
        o = jnp.maximum(agg + gcn_b, 0.0)                             # (B, H)
        o_list.append(o)
        om = o * sel[:, t:t + 1]
        s1_list.append(jnp.sum(om, axis=1, keepdims=True))
        s2_list.append(jnp.sum(om * o, axis=1, keepdims=True))
    S1 = jnp.sum(jnp.concatenate(s1_list, axis=1), axis=0, keepdims=True)   # (1, C)
    S2 = jnp.sum(jnp.concatenate(s2_list, axis=1), axis=0, keepdims=True)   # (1, C)
    nsel = jnp.sum(sel, axis=0, keepdims=True)                              # (1, C)
    inv_cnt = pl.reciprocal(jnp.maximum(nsel, 1.0) * float(H), approx=True)
    mu_t = S1 * inv_cnt
    var_t = jnp.maximum(S2 * inv_cnt - mu_t * mu_t, 0.0)
    rstd_t = lax.rsqrt(var_t + EPS)                                         # (1, C)

    # phase 3: normalize + gather by ascending selected-column index
    gath = [jnp.zeros((B, H), f32) for _ in range(K)]
    for t in range(C):
        o_n = (o_list[t] - mu_t[:, t:t + 1]) * rstd_t[:, t:t + 1]
        for k in range(K):
            coef = (sel_col[k] == float(t)).astype(f32)               # (B, 1)
            gath[k] = gath[k] + coef * o_n

    # ---------------- prediction head -----------------------------------------------------------
    ph = jnp.dot(femb_w, w1_bot, preferred_element_type=f32) + pred_b1
    for k in range(K):
        wk = small_ref[lay["w1_top"] + k * H: lay["w1_top"] + (k + 1) * H, :]
        ph = ph + jnp.dot(gath[k], wk, preferred_element_type=f32)
    ph = jnp.maximum(ph, 0.0)
    inv_H = 1.0 / float(H)
    mu = jnp.sum(ph, axis=-1, keepdims=True) * inv_H
    ex2 = jnp.sum(ph * ph, axis=-1, keepdims=True) * inv_H
    var = jnp.maximum(ex2 - mu * mu, 0.0)
    ph = (ph - mu) * lax.rsqrt(var + EPS) * pred_g + pred_be
    out_ref[...] = jnp.dot(ph, pred_w2, preferred_element_type=f32) + pred_b2


def forward(params, input_data, K, lay):
    B = input_data.shape[0]
    OUT = LABEL_COLS + 1
    kernel = functools.partial(
        fused_kernel, B=B, H=HIDDEN_DIM, C=NUM_COLS + CAT_COLS, L=NUM_LEARNER, K=K,
        num_cols=NUM_COLS, cat_cols=CAT_COLS, cat_num=tuple(CAT_NUM),
        label_cols=LABEL_COLS, lay=lay,
    )
    vmem = pl.BlockSpec(memory_space=pltpu.MemorySpace.VMEM)
    return pl.pallas_call(
        kernel,
        out_shape=jax.ShapeDtypeStruct((B, OUT), jnp.float32),
        in_specs=[vmem, vmem, vmem],
        out_specs=vmem,
    )(input_data, params["wide"], params["small"])


# =============================== parameters ===============================

def init_params(key):
    H = HIDDEN_DIM
    C = NUM_COLS + CAT_COLS
    L = NUM_LEARNER
    K = round(C * K_RATIO)
    OUT = LABEL_COLS + 1
    CH, CL, CLH = C * H, C * L, C * L * H
    lay = make_layout(H, C, L, K, NUM_COLS, CAT_NUM, LABEL_COLS)

    keys = jax.random.split(key, 20)

    def nrm(k, shape, scale=0.1):
        return np.asarray(scale * jax.random.normal(k, shape, dtype=jnp.float32))

    # raw parameters (same roles as the torch module)
    num_w = nrm(keys[0], (NUM_COLS, H))                   # Linear(1, H) per numeric column
    num_b = nrm(keys[1], (NUM_COLS, H))
    cat_tables = [nrm(keys[2 + i], (CAT_NUM[i], H), 1.0) for i in range(CAT_COLS)]
    lrn_w1 = nrm(keys[5], (L, H, H))                      # learner Linear(H, H)
    lrn_b1 = nrm(keys[6], (L, H))
    lrn_w2 = nrm(keys[7], (L, H))                         # learner Linear(H, 1)
    lrn_b2 = nrm(keys[8], (L,))
    wfi_w = nrm(keys[9], (CL, L))                         # weight_feature_importance Linear
    wfi_b = nrm(keys[10], (L,))
    gcn_w = nrm(keys[11], (CH, H))                        # GCNConv(C*H, H)
    gcn_b = nrm(keys[12], (H,))
    pred_w1 = nrm(keys[13], ((K + C) * H, H))             # prediction Linear((K+C)*H, H)
    pred_b1 = nrm(keys[14], (H,))
    pred_w2 = nrm(keys[15], (H, OUT))
    pred_b2 = nrm(keys[16], (OUT,))
    lrn_g = np.ones((L, H), np.float32)                   # learner LayerNorm(H) affine (default)
    lrn_be = np.zeros((L, H), np.float32)

    wide = np.zeros((lay["wide_rows"], lay["wide_cols"]), np.float32)
    small = np.zeros((lay["small_rows"], lay["small_cols"]), np.float32)

    # block-diagonal learner matmul + per-chunk bias/affine + Linear(H,1) scatter
    for c in range(C):
        for l in range(L):
            cs = (c * L + l) * H
            wide[lay["w1_big"] + c * H: lay["w1_big"] + (c + 1) * H, cs:cs + H] = lrn_w1[l]
            wide[lay["vec"] + 1, cs:cs + H] = lrn_b1[l]
            wide[lay["vec"] + 2, cs:cs + H] = lrn_g[l]
            wide[lay["vec"] + 3, cs:cs + H] = lrn_be[l]
            wide[lay["vec"] + 4, l * C + c] = lrn_b2[l]
            small[lay["w2_big"] + cs: lay["w2_big"] + cs + H, l * C + c] = lrn_w2[l]

    # per-chunk 0/1 pooling matrices (streamed from VMEM as matmul operands)
    chunk = np.arange(CLH) // H
    poolT = (np.arange(CL)[:, None] == chunk[None, :]).astype(np.float32)   # (C*L, C*L*H)
    wide[lay["poolT"]: lay["poolT"] + CL, :] = poolT
    small[lay["pool"]: lay["pool"] + CLH, :CL] = poolT.T

    # numeric-column Linear(1, H) scattered into lane-dense slabs
    for i in range(NUM_COLS):
        wide[lay["num_w"] + i, i * H:(i + 1) * H] = num_w[i]
        wide[lay["vec"] + 0, i * H:(i + 1) * H] = num_b[i]

    # categorical embedding tables, block placed (numeric lanes stay 0)
    off = 0
    for i in range(CAT_COLS):
        col0 = (NUM_COLS + i) * H
        wide[lay["cat_block"] + off: lay["cat_block"] + off + CAT_NUM[i],
             col0:col0 + H] = cat_tables[i]
        off += CAT_NUM[i]

    # column -> H-lane replication matrix
    repm = (np.arange(CH)[None, :] // H == np.arange(C)[:, None]).astype(np.float32)
    wide[lay["rep"]: lay["rep"] + C, :CH] = repm

    # remaining bias / affine rows
    wide[lay["vec"] + 5, :L] = wfi_b
    wide[lay["vec"] + 6, :L] = np.ones((L,), np.float32)
    wide[lay["vec"] + 7, :L] = np.zeros((L,), np.float32)
    wide[lay["vec"] + 8, :H] = gcn_b
    wide[lay["vec"] + 9, :H] = pred_b1
    wide[lay["vec"] + 10, :H] = np.ones((H,), np.float32)
    wide[lay["vec"] + 11, :H] = np.zeros((H,), np.float32)
    wide[lay["vec"] + 12, :OUT] = pred_b2

    # small-slab matrices
    small[lay["gcn_w"]: lay["gcn_w"] + CH, :] = gcn_w
    small[lay["w1_bot"]: lay["w1_bot"] + CH, :] = pred_w1[K * H:]     # rows for the embeddings
    small[lay["w1_top"]: lay["w1_top"] + K * H, :] = pred_w1[:K * H]  # rows for the GCN features
    small[lay["wfi_w"]: lay["wfi_w"] + CL, :L] = wfi_w
    small[lay["pred_w2"]: lay["pred_w2"] + H, :OUT] = pred_w2

    params = dict(wide=jnp.asarray(wide), small=jnp.asarray(small))
    return params, K, lay


# =============================== main ===============================

if __name__ == "__main__":
    key = jax.random.PRNGKey(0)
    k_in, k_cat, k_par = jax.random.split(key, 3)

    x_num = jax.random.normal(k_in, (BATCH, NUM_COLS), dtype=jnp.float32)
    cat_keys = jax.random.split(k_cat, CAT_COLS)
    x_cat = jnp.stack(
        [jax.random.randint(cat_keys[i], (BATCH,), 0, CAT_NUM[i]).astype(jnp.float32)
         for i in range(CAT_COLS)],
        axis=1,
    )
    input_data = jnp.concatenate([x_num, x_cat], axis=1)   # (B, num_cols + cat_cols)

    params, K, lay = init_params(k_par)
    out = jax.block_until_ready(forward(params, input_data, K, lay))

    assert out.shape == (BATCH, LABEL_COLS + 1), out.shape
    assert bool(jnp.all(jnp.isfinite(out)))
    print("KERNEL_OK")
</pallas_src>

<mosaic_0001>
module attributes {stable_mosaic.version = 11 : i64} {
  func.func @fused_kernel(%arg0: memref<8x5xf32, #tpu.memory_space<vmem>>, %arg1: memref<224x320xf32, #tpu.memory_space<vmem>>, %arg2: memref<1072x32xf32, #tpu.memory_space<vmem>>, %arg3: memref<8x3xf32, #tpu.memory_space<vmem>>) attributes {dimension_semantics = [], scalar_prefetch = 0 : i64, scratch_operands = 0 : i64, tpu.core_type = #tpu.core_type<tc>} {
    %c0 = arith.constant 0 : index
    %c0_0 = arith.constant 0 : index
    %0 = vector.load %arg1[%c0, %c0_0] : memref<224x320xf32, #tpu.memory_space<vmem>>, vector<160x320xf32>
    %c160 = arith.constant 160 : index
    %c0_1 = arith.constant 0 : index
    %1 = vector.load %arg1[%c160, %c0_1] : memref<224x320xf32, #tpu.memory_space<vmem>>, vector<10x320xf32>
    %c192 = arith.constant 192 : index
    %c0_2 = arith.constant 0 : index
    %2 = vector.load %arg1[%c192, %c0_2] : memref<224x320xf32, #tpu.memory_space<vmem>>, vector<3x160xf32>
    %c200 = arith.constant 200 : index
    %c0_3 = arith.constant 0 : index
    %3 = vector.load %arg1[%c200, %c0_3] : memref<224x320xf32, #tpu.memory_space<vmem>>, vector<12x160xf32>
    %c216 = arith.constant 216 : index
    %c0_4 = arith.constant 0 : index
    %4 = vector.load %arg1[%c216, %c0_4] : memref<224x320xf32, #tpu.memory_space<vmem>>, vector<5x160xf32>
    %c176 = arith.constant 176 : index
    %c0_5 = arith.constant 0 : index
    %5 = vector.load %arg1[%c176, %c0_5] : memref<224x320xf32, #tpu.memory_space<vmem>>, vector<1x160xf32>
    %c177 = arith.constant 177 : index
    %c0_6 = arith.constant 0 : index
    %6 = vector.load %arg1[%c177, %c0_6] : memref<224x320xf32, #tpu.memory_space<vmem>>, vector<1x320xf32>
    %c178 = arith.constant 178 : index
    %c0_7 = arith.constant 0 : index
    %7 = vector.load %arg1[%c178, %c0_7] : memref<224x320xf32, #tpu.memory_space<vmem>>, vector<1x320xf32>
    %c179 = arith.constant 179 : index
    %c0_8 = arith.constant 0 : index
    %8 = vector.load %arg1[%c179, %c0_8] : memref<224x320xf32, #tpu.memory_space<vmem>>, vector<1x320xf32>
    %c180 = arith.constant 180 : index
    %c0_9 = arith.constant 0 : index
    %9 = vector.load %arg1[%c180, %c0_9] : memref<224x320xf32, #tpu.memory_space<vmem>>, vector<1x10xf32>
    %c181 = arith.constant 181 : index
    %c0_10 = arith.constant 0 : index
    %10 = vector.load %arg1[%c181, %c0_10] : memref<224x320xf32, #tpu.memory_space<vmem>>, vector<1x2xf32>
    %c182 = arith.constant 182 : index
    %c0_11 = arith.constant 0 : index
    %11 = vector.load %arg1[%c182, %c0_11] : memref<224x320xf32, #tpu.memory_space<vmem>>, vector<1x2xf32>
    %c183 = arith.constant 183 : index
    %c0_12 = arith.constant 0 : index
    %12 = vector.load %arg1[%c183, %c0_12] : memref<224x320xf32, #tpu.memory_space<vmem>>, vector<1x2xf32>
    %c184 = arith.constant 184 : index
    %c0_13 = arith.constant 0 : index
    %13 = vector.load %arg1[%c184, %c0_13] : memref<224x320xf32, #tpu.memory_space<vmem>>, vector<1x32xf32>
    %c185 = arith.constant 185 : index
    %c0_14 = arith.constant 0 : index
    %14 = vector.load %arg1[%c185, %c0_14] : memref<224x320xf32, #tpu.memory_space<vmem>>, vector<1x32xf32>
    %c186 = arith.constant 186 : index
    %c0_15 = arith.constant 0 : index
    %15 = vector.load %arg1[%c186, %c0_15] : memref<224x320xf32, #tpu.memory_space<vmem>>, vector<1x32xf32>
    %c187 = arith.constant 187 : index
    %c0_16 = arith.constant 0 : index
    %16 = vector.load %arg1[%c187, %c0_16] : memref<224x320xf32, #tpu.memory_space<vmem>>, vector<1x32xf32>
    %c188 = arith.constant 188 : index
    %c0_17 = arith.constant 0 : index
    %17 = vector.load %arg1[%c188, %c0_17] : memref<224x320xf32, #tpu.memory_space<vmem>>, vector<1x3xf32>
    %c0_18 = arith.constant 0 : index
    %c0_19 = arith.constant 0 : index
    %18 = vector.load %arg2[%c0_18, %c0_19] : memref<1072x32xf32, #tpu.memory_space<vmem>>, vector<160x32xf32>
    %c160_20 = arith.constant 160 : index
    %c0_21 = arith.constant 0 : index
    %19 = vector.load %arg2[%c160_20, %c0_21] : memref<1072x32xf32, #tpu.memory_space<vmem>>, vector<160x32xf32>
    %c384 = arith.constant 384 : index
    %c0_22 = arith.constant 0 : index
    %20 = vector.load %arg2[%c384, %c0_22] : memref<1072x32xf32, #tpu.memory_space<vmem>>, vector<10x2xf32>
    %c400 = arith.constant 400 : index
    %c0_23 = arith.constant 0 : index
    %21 = vector.load %arg2[%c400, %c0_23] : memref<1072x32xf32, #tpu.memory_space<vmem>>, vector<32x3xf32>
    %c432 = arith.constant 432 : index
    %c0_24 = arith.constant 0 : index
    %22 = vector.load %arg2[%c432, %c0_24] : memref<1072x32xf32, #tpu.memory_space<vmem>>, vector<320x10xf32>
    %c752 = arith.constant 752 : index
    %c0_25 = arith.constant 0 : index
    %23 = vector.load %arg2[%c752, %c0_25] : memref<1072x32xf32, #tpu.memory_space<vmem>>, vector<320x10xf32>
    %c0_26 = arith.constant 0 : index
    %c0_27 = arith.constant 0 : index
    %24 = vector.load %arg0[%c0_26, %c0_27] : memref<8x5xf32, #tpu.memory_space<vmem>>, vector<8x5xf32>
    %25 = vector.extract_strided_slice %24 {offsets = [0, 0], sizes = [8, 3], strides = [1, 1]} : vector<8x5xf32> to vector<8x3xf32>
    %26 = vector.extract_strided_slice %24 {offsets = [0, 3], sizes = [8, 2], strides = [1, 1]} : vector<8x5xf32> to vector<8x2xf32>
    %27 = tpu.iota {dimensions = array<i32: 1>} : vector<8x160xi32>
    %c96_i32 = arith.constant 96 : i32
    %28 = vector.broadcast %c96_i32 : i32 to vector<8x160xi32>
    %29 = arith.cmpi slt, %27, %28 : vector<8x160xi32>
    %30 = arith.extui %29 : vector<8x160xi1> to vector<8x160xi32>
    %31 = arith.sitofp %30 : vector<8x160xi32> to vector<8x160xf32>
    %cst = arith.constant 1.000000e+00 : f32
    %32 = vector.broadcast %cst : f32 to vector<8x160xf32>
    %33 = arith.subf %32, %31 : vector<8x160xf32>
    %cst_28 = arith.constant dense<0.000000e+00> : vector<8x160xf32>
    %34 = tpu.matmul %25, %2, %cst_28 {dimension_numbers = #tpu.dot_dimension_numbers<[1], [0], [0], [1], [0, 0, 1, 1], [], []>} : vector<8x3xf32>, vector<3x160xf32>, vector<8x160xf32> -> vector<8x160xf32>
    %35 = vector.broadcast %5 : vector<1x160xf32> to vector<8x160xf32>
    %36 = arith.addf %34, %35 : vector<8x160xf32>
    %cst_29 = arith.constant 0.000000e+00 : f32
    %37 = vector.broadcast %cst_29 : f32 to vector<8x160xf32>
    %38 = arith.maximumf %36, %37 : vector<8x160xf32>
    %39 = vector.shape_cast %38 : vector<8x160xf32> to vector<1x8x160xf32>
    %cst_30 = arith.constant dense<0.000000e+00> : vector<1xf32>
    %40 = vector.multi_reduction <add>, %39, %cst_30 [1, 2] : vector<1x8x160xf32> to vector<1xf32>
    %41 = vector.shape_cast %40 : vector<1xf32> to vector<1x1x1xf32>
    %42 = vector.extract %41[0, 0, 0] : f32 from vector<1x1x1xf32>
    %cst_31 = arith.constant 0.00130208337 : f32
    %43 = arith.mulf %42, %cst_31 : f32
    %44 = arith.mulf %38, %38 : vector<8x160xf32>
    %45 = vector.shape_cast %44 : vector<8x160xf32> to vector<1x8x160xf32>
    %cst_32 = arith.constant dense<0.000000e+00> : vector<1xf32>
    %46 = vector.multi_reduction <add>, %45, %cst_32 [1, 2] : vector<1x8x160xf32> to vector<1xf32>
    %47 = vector.shape_cast %46 : vector<1xf32> to vector<1x1x1xf32>
    %48 = vector.extract %47[0, 0, 0] : f32 from vector<1x1x1xf32>
    %cst_33 = arith.constant 0.00130208337 : f32
    %49 = arith.mulf %48, %cst_33 : f32
    %50 = arith.mulf %43, %43 : f32
    %51 = arith.subf %49, %50 : f32
    %cst_34 = arith.constant 0.000000e+00 : f32
    %52 = arith.maximumf %51, %cst_34 : f32
    %53 = vector.broadcast %43 : f32 to vector<8x160xf32>
    %54 = arith.subf %38, %53 : vector<8x160xf32>
    %cst_35 = arith.constant 9.99999974E-6 : f32
    %55 = arith.addf %52, %cst_35 : f32
    %56 = math.rsqrt %55 : f32
    %57 = vector.broadcast %56 : f32 to vector<8x160xf32>
    %58 = arith.mulf %54, %57 : vector<8x160xf32>
    %59 = arith.mulf %58, %31 : vector<8x160xf32>
    %60 = tpu.iota {dimensions = array<i32: 1>} : vector<8x12xi32>
    %cst_36 = arith.constant 0.000000e+00 : f32
    %61 = vector.broadcast %cst_36 : f32 to vector<8x12xf32>
    %62 = vector.extract_strided_slice %26 {offsets = [0, 0], sizes = [8, 1], strides = [1, 1]} : vector<8x2xf32> to vector<8x1xf32>
    %63 = arith.fptosi %62 : vector<8x1xf32> to vector<8x1xi32>
    %c0_i32 = arith.constant 0 : i32
    %64 = vector.broadcast %c0_i32 : i32 to vector<8x1xi32>
    %65 = arith.addi %63, %64 : vector<8x1xi32>
    %66 = vector.broadcast %65 : vector<8x1xi32> to vector<8x12xi32>
    %67 = arith.cmpi eq, %60, %66 : vector<8x12xi32>
    %68 = arith.extui %67 : vector<8x12xi1> to vector<8x12xi32>
    %69 = arith.sitofp %68 : vector<8x12xi32> to vector<8x12xf32>
    %70 = arith.addf %61, %69 : vector<8x12xf32>
    %71 = vector.extract_strided_slice %26 {offsets = [0, 1], sizes = [8, 1], strides = [1, 1]} : vector<8x2xf32> to vector<8x1xf32>
    %72 = arith.fptosi %71 : vector<8x1xf32> to vector<8x1xi32>
    %c5_i32 = arith.constant 5 : i32
    %73 = vector.broadcast %c5_i32 : i32 to vector<8x1xi32>
    %74 = arith.addi %72, %73 : vector<8x1xi32>
    %75 = vector.broadcast %74 : vector<8x1xi32> to vector<8x12xi32>
    %76 = arith.cmpi eq, %60, %75 : vector<8x12xi32>
    %77 = arith.extui %76 : vector<8x12xi1> to vector<8x12xi32>
    %78 = arith.sitofp %77 : vector<8x12xi32> to vector<8x12xf32>
    %79 = arith.addf %70, %78 : vector<8x12xf32>
    %cst_37 = arith.constant dense<0.000000e+00> : vector<8x160xf32>
    %80 = tpu.matmul %79, %3, %cst_37 {dimension_numbers = #tpu.dot_dimension_numbers<[1], [0], [0], [1], [0, 0, 1, 1], [], []>} : vector<8x12xf32>, vector<12x160xf32>, vector<8x160xf32> -> vector<8x160xf32>
    %81 = vector.shape_cast %80 : vector<8x160xf32> to vector<1x8x160xf32>
    %cst_38 = arith.constant dense<0.000000e+00> : vector<1xf32>
    %82 = vector.multi_reduction <add>, %81, %cst_38 [1, 2] : vector<1x8x160xf32> to vector<1xf32>
    %83 = vector.shape_cast %82 : vector<1xf32> to vector<1x1x1xf32>
    %84 = vector.extract %83[0, 0, 0] : f32 from vector<1x1x1xf32>
    %cst_39 = arith.constant 0.001953125 : f32
    %85 = arith.mulf %84, %cst_39 : f32
    %86 = arith.mulf %80, %80 : vector<8x160xf32>
    %87 = vector.shape_cast %86 : vector<8x160xf32> to vector<1x8x160xf32>
    %cst_40 = arith.constant dense<0.000000e+00> : vector<1xf32>
    %88 = vector.multi_reduction <add>, %87, %cst_40 [1, 2] : vector<1x8x160xf32> to vector<1xf32>
    %89 = vector.shape_cast %88 : vector<1xf32> to vector<1x1x1xf32>
    %90 = vector.extract %89[0, 0, 0] : f32 from vector<1x1x1xf32>
    %cst_41 = arith.constant 0.001953125 : f32
    %91 = arith.mulf %90, %cst_41 : f32
    %92 = arith.mulf %85, %85 : f32
    %93 = arith.subf %91, %92 : f32
    %cst_42 = arith.constant 0.000000e+00 : f32
    %94 = arith.maximumf %93, %cst_42 : f32
    %95 = vector.broadcast %85 : f32 to vector<8x160xf32>
    %96 = arith.subf %80, %95 : vector<8x160xf32>
    %cst_43 = arith.constant 9.99999974E-6 : f32
    %97 = arith.addf %94, %cst_43 : f32
    %98 = math.rsqrt %97 : f32
    %99 = vector.broadcast %98 : f32 to vector<8x160xf32>
    %100 = arith.mulf %96, %99 : vector<8x160xf32>
    %101 = arith.mulf %100, %33 : vector<8x160xf32>
    %102 = arith.addf %59, %101 : vector<8x160xf32>
    %cst_44 = arith.constant dense<0.000000e+00> : vector<8x320xf32>
    %103 = tpu.matmul %102, %0, %cst_44 {dimension_numbers = #tpu.dot_dimension_numbers<[1], [0], [0], [1], [0, 0, 1, 1], [], []>} : vector<8x160xf32>, vector<160x320xf32>, vector<8x320xf32> -> vector<8x320xf32>
    %104 = vector.broadcast %6 : vector<1x320xf32> to vector<8x320xf32>
    %105 = arith.addf %103, %104 : vector<8x320xf32>
    %cst_45 = arith.constant 0.000000e+00 : f32
    %106 = vector.broadcast %cst_45 : f32 to vector<8x320xf32>
    %107 = arith.maximumf %105, %106 : vector<8x320xf32>
    %cst_46 = arith.constant dense<0.000000e+00> : vector<8x10xf32>
    %108 = tpu.matmul %107, %23, %cst_46 {dimension_numbers = #tpu.dot_dimension_numbers<[1], [0], [0], [1], [0, 0, 1, 1], [], []>} : vector<8x320xf32>, vector<320x10xf32>, vector<8x10xf32> -> vector<8x10xf32>
    %109 = arith.mulf %107, %107 : vector<8x320xf32>
    %cst_47 = arith.constant dense<0.000000e+00> : vector<8x10xf32>
    %110 = tpu.matmul %109, %23, %cst_47 {dimension_numbers = #tpu.dot_dimension_numbers<[1], [0], [0], [1], [0, 0, 1, 1], [], []>} : vector<8x320xf32>, vector<320x10xf32>, vector<8x10xf32> -> vector<8x10xf32>
    %cst_48 = arith.constant 3.125000e-02 : f32
    %111 = vector.broadcast %cst_48 : f32 to vector<8x10xf32>
    %112 = arith.mulf %108, %111 : vector<8x10xf32>
    %cst_49 = arith.constant 3.125000e-02 : f32
    %113 = vector.broadcast %cst_49 : f32 to vector<8x10xf32>
    %114 = arith.mulf %110, %113 : vector<8x10xf32>
    %115 = arith.mulf %112, %112 : vector<8x10xf32>
    %116 = arith.subf %114, %115 : vector<8x10xf32>
    %cst_50 = arith.constant 0.000000e+00 : f32
    %117 = vector.broadcast %cst_50 : f32 to vector<8x10xf32>
    %118 = arith.maximumf %116, %117 : vector<8x10xf32>
    %cst_51 = arith.constant 9.99999974E-6 : f32
    %119 = vector.broadcast %cst_51 : f32 to vector<8x10xf32>
    %120 = arith.addf %118, %119 : vector<8x10xf32>
    %121 = math.rsqrt %120 : vector<8x10xf32>
    %cst_52 = arith.constant dense<0.000000e+00> : vector<8x320xf32>
    %122 = tpu.matmul %121, %1, %cst_52 {dimension_numbers = #tpu.dot_dimension_numbers<[1], [0], [0], [1], [0, 0, 1, 1], [], []>} : vector<8x10xf32>, vector<10x320xf32>, vector<8x320xf32> -> vector<8x320xf32>
    %123 = arith.mulf %112, %121 : vector<8x10xf32>
    %cst_53 = arith.constant dense<0.000000e+00> : vector<8x320xf32>
    %124 = tpu.matmul %123, %1, %cst_53 {dimension_numbers = #tpu.dot_dimension_numbers<[1], [0], [0], [1], [0, 0, 1, 1], [], []>} : vector<8x10xf32>, vector<10x320xf32>, vector<8x320xf32> -> vector<8x320xf32>
    %125 = arith.mulf %107, %122 : vector<8x320xf32>
    %126 = arith.subf %125, %124 : vector<8x320xf32>
    %127 = vector.broadcast %7 : vector<1x320xf32> to vector<8x320xf32>
    %128 = arith.mulf %126, %127 : vector<8x320xf32>
    %129 = vector.broadcast %8 : vector<1x320xf32> to vector<8x320xf32>
    %130 = arith.addf %128, %129 : vector<8x320xf32>
    %cst_54 = arith.constant dense<0.000000e+00> : vector<8x10xf32>
    %131 = tpu.matmul %130, %22, %cst_54 {dimension_numbers = #tpu.dot_dimension_numbers<[1], [0], [0], [1], [0, 0, 1, 1], [], []>} : vector<8x320xf32>, vector<320x10xf32>, vector<8x10xf32> -> vector<8x10xf32>
    %132 = vector.broadcast %9 : vector<1x10xf32> to vector<8x10xf32>
    %133 = arith.addf %131, %132 : vector<8x10xf32>
    %134 = vector.shape_cast %133 : vector<8x10xf32> to vector<1x8x10xf32>
    %cst_55 = arith.constant dense<0.000000e+00> : vector<1xf32>
    %135 = vector.multi_reduction <add>, %134, %cst_55 [1, 2] : vector<1x8x10xf32> to vector<1xf32>
    %136 = vector.shape_cast %135 : vector<1xf32> to vector<1x1x1xf32>
    %137 = vector.extract %136[0, 0, 0] : f32 from vector<1x1x1xf32>
    %cst_56 = arith.constant 1.250000e-02 : f32
    %138 = arith.mulf %137, %cst_56 : f32
    %139 = arith.mulf %133, %133 : vector<8x10xf32>
    %140 = vector.shape_cast %139 : vector<8x10xf32> to vector<1x8x10xf32>
    %cst_57 = arith.constant dense<0.000000e+00> : vector<1xf32>
    %141 = vector.multi_reduction <add>, %140, %cst_57 [1, 2] : vector<1x8x10xf32> to vector<1xf32>
    %142 = vector.shape_cast %141 : vector<1xf32> to vector<1x1x1xf32>
    %143 = vector.extract %142[0, 0, 0] : f32 from vector<1x1x1xf32>
    %cst_58 = arith.constant 1.250000e-02 : f32
    %144 = arith.mulf %143, %cst_58 : f32
    %145 = arith.mulf %138, %138 : f32
    %146 = arith.subf %144, %145 : f32
    %cst_59 = arith.constant 0.000000e+00 : f32
    %147 = arith.maximumf %146, %cst_59 : f32
    %148 = vector.broadcast %138 : f32 to vector<8x10xf32>
    %149 = arith.subf %133, %148 : vector<8x10xf32>
    %cst_60 = arith.constant 9.99999974E-6 : f32
    %150 = arith.addf %147, %cst_60 : f32
    %151 = math.rsqrt %150 : f32
    %152 = vector.broadcast %151 : f32 to vector<8x10xf32>
    %153 = arith.mulf %149, %152 : vector<8x10xf32>
    %cst_61 = arith.constant dense<0.000000e+00> : vector<8x2xf32>
    %154 = tpu.matmul %153, %20, %cst_61 {dimension_numbers = #tpu.dot_dimension_numbers<[1], [0], [0], [1], [0, 0, 1, 1], [], []>} : vector<8x10xf32>, vector<10x2xf32>, vector<8x2xf32> -> vector<8x2xf32>
    %155 = vector.broadcast %10 : vector<1x2xf32> to vector<8x2xf32>
    %156 = arith.addf %154, %155 : vector<8x2xf32>
    %cst_62 = arith.constant 0.000000e+00 : f32
    %157 = vector.broadcast %cst_62 : f32 to vector<8x2xf32>
    %158 = arith.maximumf %156, %157 : vector<8x2xf32>
    %cst_63 = arith.constant dense<0.000000e+00> : vector<8xf32>
    %159 = vector.multi_reduction <add>, %158, %cst_63 [1] : vector<8x2xf32> to vector<8xf32>
    %160 = vector.shape_cast %159 : vector<8xf32> to vector<8x1xf32>
    %cst_64 = arith.constant 5.000000e-01 : f32
    %161 = vector.broadcast %cst_64 : f32 to vector<8x1xf32>
    %162 = arith.mulf %160, %161 : vector<8x1xf32>
    %163 = arith.mulf %158, %158 : vector<8x2xf32>
    %cst_65 = arith.constant dense<0.000000e+00> : vector<8xf32>
    %164 = vector.multi_reduction <add>, %163, %cst_65 [1] : vector<8x2xf32> to vector<8xf32>
    %165 = vector.shape_cast %164 : vector<8xf32> to vector<8x1xf32>
    %cst_66 = arith.constant 5.000000e-01 : f32
    %166 = vector.broadcast %cst_66 : f32 to vector<8x1xf32>
    %167 = arith.mulf %165, %166 : vector<8x1xf32>
    %168 = arith.mulf %162, %162 : vector<8x1xf32>
    %169 = arith.subf %167, %168 : vector<8x1xf32>
    %cst_67 = arith.constant 0.000000e+00 : f32
    %170 = vector.broadcast %cst_67 : f32 to vector<8x1xf32>
    %171 = arith.maximumf %169, %170 : vector<8x1xf32>
    %172 = vector.broadcast %162 : vector<8x1xf32> to vector<8x2xf32>
    %173 = arith.subf %158, %172 : vector<8x2xf32>
    %cst_68 = arith.constant 9.99999974E-6 : f32
    %174 = vector.broadcast %cst_68 : f32 to vector<8x1xf32>
    %175 = arith.addf %171, %174 : vector<8x1xf32>
    %176 = math.rsqrt %175 : vector<8x1xf32>
    %177 = vector.broadcast %176 : vector<8x1xf32> to vector<8x2xf32>
    %178 = arith.mulf %173, %177 : vector<8x2xf32>
    %179 = vector.broadcast %11 : vector<1x2xf32> to vector<8x2xf32>
    %180 = arith.mulf %178, %179 : vector<8x2xf32>
    %181 = vector.broadcast %12 : vector<1x2xf32> to vector<8x2xf32>
    %182 = arith.addf %180, %181 : vector<8x2xf32>
    %cst_69 = arith.constant dense<0xFF800000> : vector<8xf32>
    %183 = vector.multi_reduction <maximumf>, %182, %cst_69 [1] : vector<8x2xf32> to vector<8xf32>
    %184 = vector.shape_cast %183 : vector<8xf32> to vector<8x1xf32>
    %185 = vector.broadcast %184 : vector<8x1xf32> to vector<8x2xf32>
    %186 = arith.subf %182, %185 : vector<8x2xf32>
    %187 = math.exp %186 : vector<8x2xf32>
    %cst_70 = arith.constant dense<0.000000e+00> : vector<8xf32>
    %188 = vector.multi_reduction <add>, %187, %cst_70 [1] : vector<8x2xf32> to vector<8xf32>
    %189 = vector.shape_cast %188 : vector<8xf32> to vector<8x1xf32>
    %190 = tpu.reciprocal %189 {approx = true} : vector<8x1xf32> -> vector<8x1xf32>
    %191 = vector.broadcast %190 : vector<8x1xf32> to vector<8x2xf32>
    %192 = arith.mulf %187, %191 : vector<8x2xf32>
    %cst_71 = arith.constant 0.000000e+00 : f32
    %193 = vector.broadcast %cst_71 : f32 to vector<8x5xf32>
    %194 = vector.extract_strided_slice %153 {offsets = [0, 0], sizes = [8, 5], strides = [1, 1]} : vector<8x10xf32> to vector<8x5xf32>
    %195 = vector.extract_strided_slice %192 {offsets = [0, 0], sizes = [8, 1], strides = [1, 1]} : vector<8x2xf32> to vector<8x1xf32>
    %196 = vector.broadcast %195 : vector<8x1xf32> to vector<8x5xf32>
    %197 = arith.mulf %194, %196 : vector<8x5xf32>
    %198 = arith.addf %193, %197 : vector<8x5xf32>
    %199 = vector.extract_strided_slice %153 {offsets = [0, 5], sizes = [8, 5], strides = [1, 1]} : vector<8x10xf32> to vector<8x5xf32>
    %200 = vector.extract_strided_slice %192 {offsets = [0, 1], sizes = [8, 1], strides = [1, 1]} : vector<8x2xf32> to vector<8x1xf32>
    %201 = vector.broadcast %200 : vector<8x1xf32> to vector<8x5xf32>
    %202 = arith.mulf %199, %201 : vector<8x5xf32>
    %203 = arith.addf %198, %202 : vector<8x5xf32>
    %cst_72 = arith.constant dense<0.000000e+00> : vector<8x160xf32>
    %204 = tpu.matmul %203, %4, %cst_72 {dimension_numbers = #tpu.dot_dimension_numbers<[1], [0], [0], [1], [0, 0, 1, 1], [], []>} : vector<8x5xf32>, vector<5x160xf32>, vector<8x160xf32> -> vector<8x160xf32>
    %205 = arith.mulf %102, %204 : vector<8x160xf32>
    %206 = tpu.iota {dimensions = array<i32: 1>} : vector<8x5xi32>
    %207 = arith.sitofp %206 : vector<8x5xi32> to vector<8x5xf32>
    %cst_73 = arith.constant 0.000000e+00 : f32
    %208 = vector.broadcast %cst_73 : f32 to vector<8x5xf32>
    %cst_74 = arith.constant dense<0xFF800000> : vector<8xf32>
    %209 = vector.multi_reduction <maximumf>, %203, %cst_74 [1] : vector<8x5xf32> to vector<8xf32>
    %210 = vector.shape_cast %209 : vector<8xf32> to vector<8x1xf32>
    %211 = vector.broadcast %210 : vector<8x1xf32> to vector<8x5xf32>
    %212 = arith.cmpf oge, %203, %211 : vector<8x5xf32>
    %cst_75 = arith.constant 5.000000e+00 : f32
    %213 = vector.broadcast %cst_75 : f32 to vector<8x5xf32>
    %214 = arith.select %212, %207, %213 : vector<8x5xi1>, vector<8x5xf32>
    %cst_76 = arith.constant dense<0x7F800000> : vector<8xf32>
    %215 = vector.multi_reduction <minimumf>, %214, %cst_76 [1] : vector<8x5xf32> to vector<8xf32>
    %216 = vector.shape_cast %215 : vector<8xf32> to vector<8x1xf32>
    %217 = vector.broadcast %216 : vector<8x1xf32> to vector<8x5xf32>
    %218 = arith.cmpf oeq, %207, %217 : vector<8x5xf32>
    %219 = arith.extui %218 : vector<8x5xi1> to vector<8x5xi32>
    %220 = arith.sitofp %219 : vector<8x5xi32> to vector<8x5xf32>
    %221 = arith.addf %208, %220 : vector<8x5xf32>
    %cst_77 = arith.constant 0.000000e+00 : f32
    %222 = vector.broadcast %cst_77 : f32 to vector<8x5xf32>
    %223 = arith.cmpf ogt, %220, %222 : vector<8x5xf32>
    %cst_78 = arith.constant 0xFF800000 : f32
    %224 = vector.broadcast %cst_78 : f32 to vector<8x5xf32>
    %225 = arith.select %223, %224, %203 : vector<8x5xi1>, vector<8x5xf32>
    %cst_79 = arith.constant dense<0xFF800000> : vector<8xf32>
    %226 = vector.multi_reduction <maximumf>, %225, %cst_79 [1] : vector<8x5xf32> to vector<8xf32>
    %227 = vector.shape_cast %226 : vector<8xf32> to vector<8x1xf32>
    %228 = vector.broadcast %227 : vector<8x1xf32> to vector<8x5xf32>
    %229 = arith.cmpf oge, %225, %228 : vector<8x5xf32>
    %cst_80 = arith.constant 5.000000e+00 : f32
    %230 = vector.broadcast %cst_80 : f32 to vector<8x5xf32>
    %231 = arith.select %229, %207, %230 : vector<8x5xi1>, vector<8x5xf32>
    %cst_81 = arith.constant dense<0x7F800000> : vector<8xf32>
    %232 = vector.multi_reduction <minimumf>, %231, %cst_81 [1] : vector<8x5xf32> to vector<8xf32>
    %233 = vector.shape_cast %232 : vector<8xf32> to vector<8x1xf32>
    %234 = vector.broadcast %233 : vector<8x1xf32> to vector<8x5xf32>
    %235 = arith.cmpf oeq, %207, %234 : vector<8x5xf32>
    %236 = arith.extui %235 : vector<8x5xi1> to vector<8x5xi32>
    %237 = arith.sitofp %236 : vector<8x5xi32> to vector<8x5xf32>
    %238 = arith.addf %221, %237 : vector<8x5xf32>
    %cst_82 = arith.constant 5.000000e-01 : f32
    %239 = vector.broadcast %cst_82 : f32 to vector<8x5xf32>
    %240 = arith.cmpf ogt, %238, %239 : vector<8x5xf32>
    %cst_83 = arith.constant 5.000000e+00 : f32
    %241 = vector.broadcast %cst_83 : f32 to vector<8x5xf32>
    %242 = arith.select %240, %207, %241 : vector<8x5xi1>, vector<8x5xf32>
    %cst_84 = arith.constant dense<0x7F800000> : vector<8xf32>
    %243 = vector.multi_reduction <minimumf>, %242, %cst_84 [1] : vector<8x5xf32> to vector<8xf32>
    %244 = vector.shape_cast %243 : vector<8xf32> to vector<8x1xf32>
    %245 = vector.broadcast %244 : vector<8x1xf32> to vector<8x5xf32>
    %246 = arith.cmpf oeq, %207, %245 : vector<8x5xf32>
    %cst_85 = arith.constant 0.000000e+00 : f32
    %247 = vector.broadcast %cst_85 : f32 to vector<8x5xf32>
    %248 = arith.select %246, %247, %238 : vector<8x5xi1>, vector<8x5xf32>
    %cst_86 = arith.constant 5.000000e-01 : f32
    %249 = vector.broadcast %cst_86 : f32 to vector<8x5xf32>
    %250 = arith.cmpf ogt, %248, %249 : vector<8x5xf32>
    %cst_87 = arith.constant 5.000000e+00 : f32
    %251 = vector.broadcast %cst_87 : f32 to vector<8x5xf32>
    %252 = arith.select %250, %207, %251 : vector<8x5xi1>, vector<8x5xf32>
    %cst_88 = arith.constant dense<0x7F800000> : vector<8xf32>
    %253 = vector.multi_reduction <minimumf>, %252, %cst_88 [1] : vector<8x5xf32> to vector<8xf32>
    %254 = vector.shape_cast %253 : vector<8xf32> to vector<8x1xf32>
    %cst_89 = arith.constant 5.000000e-01 : f32
    %255 = vector.broadcast %cst_89 : f32 to vector<8x5xf32>
    %256 = arith.cmpf ogt, %238, %255 : vector<8x5xf32>
    %cst_90 = arith.constant 0xFF800000 : f32
    %257 = vector.broadcast %cst_90 : f32 to vector<8x5xf32>
    %258 = arith.select %256, %203, %257 : vector<8x5xi1>, vector<8x5xf32>
    %cst_91 = arith.constant dense<0xFF800000> : vector<8xf32>
    %259 = vector.multi_reduction <maximumf>, %258, %cst_91 [1] : vector<8x5xf32> to vector<8xf32>
    %260 = vector.shape_cast %259 : vector<8xf32> to vector<8x1xf32>
    %261 = vector.broadcast %260 : vector<8x1xf32> to vector<8x5xf32>
    %262 = arith.subf %203, %261 : vector<8x5xf32>
    %263 = math.exp %262 : vector<8x5xf32>
    %264 = arith.mulf %263, %238 : vector<8x5xf32>
    %cst_92 = arith.constant dense<0.000000e+00> : vector<8xf32>
    %265 = vector.multi_reduction <add>, %264, %cst_92 [1] : vector<8x5xf32> to vector<8xf32>
    %266 = vector.shape_cast %265 : vector<8xf32> to vector<8x1xf32>
    %267 = tpu.reciprocal %266 {approx = true} : vector<8x1xf32> -> vector<8x1xf32>
    %268 = vector.broadcast %267 : vector<8x1xf32> to vector<8x5xf32>
    %269 = arith.mulf %264, %268 : vector<8x5xf32>
    %270 = tpu.iota {dimensions = array<i32: 0>} : vector<8x8xi32>
    %271 = tpu.iota {dimensions = array<i32: 1>} : vector<8x8xi32>
    %272 = arith.cmpi ne, %270, %271 : vector<8x8xi32>
    %273 = tpu.iota {dimensions = array<i32: 1>} : vector<8x5xi32>
    %c0_i32_93 = arith.constant 0 : i32
    %274 = vector.broadcast %c0_i32_93 : i32 to vector<8x5xi32>
    %275 = arith.cmpi eq, %273, %274 : vector<8x5xi32>
    %cst_94 = arith.constant 0.000000e+00 : f32
    %276 = vector.broadcast %cst_94 : f32 to vector<8x5xf32>
    %277 = arith.select %275, %276, %269 : vector<8x5xi1>, vector<8x5xf32>
    %278 = vector.extract_strided_slice %238 {offsets = [0, 0], sizes = [8, 1], strides = [1, 1]} : vector<8x5xf32> to vector<8x1xf32>
    %279 = vector.broadcast %278 : vector<8x1xf32> to vector<8x5xf32>
    %280 = arith.mulf %277, %279 : vector<8x5xf32>
    %cst_95 = arith.constant dense<0.000000e+00> : vector<8x8xf32>
    %281 = tpu.matmul %280, %280, %cst_95 {dimension_numbers = #tpu.dot_dimension_numbers<[1], [1], [0], [0], [0, 0, 1, 0], [], []>} : vector<8x5xf32>, vector<8x5xf32>, vector<8x8xf32> -> vector<8x8xf32>
    %cst_96 = arith.constant 0.000000e+00 : f32
    %282 = vector.broadcast %cst_96 : f32 to vector<8x8xf32>
    %283 = arith.cmpf ogt, %281, %282 : vector<8x8xf32>
    %284 = arith.andi %272, %283 : vector<8x8xi1>
    %285 = math.exp %281 : vector<8x8xf32>
    %cst_97 = arith.constant 0.000000e+00 : f32
    %286 = vector.broadcast %cst_97 : f32 to vector<8x8xf32>
    %287 = arith.select %284, %285, %286 : vector<8x8xi1>, vector<8x8xf32>
    %cst_98 = arith.constant dense<0.000000e+00> : vector<8xf32>
    %288 = vector.multi_reduction <add>, %287, %cst_98 [1] : vector<8x8xf32> to vector<8xf32>
    %289 = vector.shape_cast %288 : vector<8xf32> to vector<8x1xf32>
    %c1_i32 = arith.constant 1 : i32
    %290 = vector.broadcast %c1_i32 : i32 to vector<8x5xi32>
    %291 = arith.cmpi eq, %273, %290 : vector<8x5xi32>
    %cst_99 = arith.constant 0.000000e+00 : f32
    %292 = vector.broadcast %cst_99 : f32 to vector<8x5xf32>
    %293 = arith.select %291, %292, %269 : vector<8x5xi1>, vector<8x5xf32>
    %294 = vector.extract_strided_slice %238 {offsets = [0, 1], sizes = [8, 1], strides = [1, 1]} : vector<8x5xf32> to vector<8x1xf32>
    %295 = vector.broadcast %294 : vector<8x1xf32> to vector<8x5xf32>
    %296 = arith.mulf %293, %295 : vector<8x5xf32>
    %cst_100 = arith.constant dense<0.000000e+00> : vector<8x8xf32>
    %297 = tpu.matmul %296, %296, %cst_100 {dimension_numbers = #tpu.dot_dimension_numbers<[1], [1], [0], [0], [0, 0, 1, 0], [], []>} : vector<8x5xf32>, vector<8x5xf32>, vector<8x8xf32> -> vector<8x8xf32>
    %cst_101 = arith.constant 0.000000e+00 : f32
    %298 = vector.broadcast %cst_101 : f32 to vector<8x8xf32>
    %299 = arith.cmpf ogt, %297, %298 : vector<8x8xf32>
    %300 = arith.andi %272, %299 : vector<8x8xi1>
    %301 = math.exp %297 : vector<8x8xf32>
    %cst_102 = arith.constant 0.000000e+00 : f32
    %302 = vector.broadcast %cst_102 : f32 to vector<8x8xf32>
    %303 = arith.select %300, %301, %302 : vector<8x8xi1>, vector<8x8xf32>
    %cst_103 = arith.constant dense<0.000000e+00> : vector<8xf32>
    %304 = vector.multi_reduction <add>, %303, %cst_103 [1] : vector<8x8xf32> to vector<8xf32>
    %305 = vector.shape_cast %304 : vector<8xf32> to vector<8x1xf32>
    %c2_i32 = arith.constant 2 : i32
    %306 = vector.broadcast %c2_i32 : i32 to vector<8x5xi32>
    %307 = arith.cmpi eq, %273, %306 : vector<8x5xi32>
    %cst_104 = arith.constant 0.000000e+00 : f32
    %308 = vector.broadcast %cst_104 : f32 to vector<8x5xf32>
    %309 = arith.select %307, %308, %269 : vector<8x5xi1>, vector<8x5xf32>
    %310 = vector.extract_strided_slice %238 {offsets = [0, 2], sizes = [8, 1], strides = [1, 1]} : vector<8x5xf32> to vector<8x1xf32>
    %311 = vector.broadcast %310 : vector<8x1xf32> to vector<8x5xf32>
    %312 = arith.mulf %309, %311 : vector<8x5xf32>
    %cst_105 = arith.constant dense<0.000000e+00> : vector<8x8xf32>
    %313 = tpu.matmul %312, %312, %cst_105 {dimension_numbers = #tpu.dot_dimension_numbers<[1], [1], [0], [0], [0, 0, 1, 0], [], []>} : vector<8x5xf32>, vector<8x5xf32>, vector<8x8xf32> -> vector<8x8xf32>
    %cst_106 = arith.constant 0.000000e+00 : f32
    %314 = vector.broadcast %cst_106 : f32 to vector<8x8xf32>
    %315 = arith.cmpf ogt, %313, %314 : vector<8x8xf32>
    %316 = arith.andi %272, %315 : vector<8x8xi1>
    %317 = math.exp %313 : vector<8x8xf32>
    %cst_107 = arith.constant 0.000000e+00 : f32
    %318 = vector.broadcast %cst_107 : f32 to vector<8x8xf32>
    %319 = arith.select %316, %317, %318 : vector<8x8xi1>, vector<8x8xf32>
    %cst_108 = arith.constant dense<0.000000e+00> : vector<8xf32>
    %320 = vector.multi_reduction <add>, %319, %cst_108 [1] : vector<8x8xf32> to vector<8xf32>
    %321 = vector.shape_cast %320 : vector<8xf32> to vector<8x1xf32>
    %c3_i32 = arith.constant 3 : i32
    %322 = vector.broadcast %c3_i32 : i32 to vector<8x5xi32>
    %323 = arith.cmpi eq, %273, %322 : vector<8x5xi32>
    %cst_109 = arith.constant 0.000000e+00 : f32
    %324 = vector.broadcast %cst_109 : f32 to vector<8x5xf32>
    %325 = arith.select %323, %324, %269 : vector<8x5xi1>, vector<8x5xf32>
    %326 = vector.extract_strided_slice %238 {offsets = [0, 3], sizes = [8, 1], strides = [1, 1]} : vector<8x5xf32> to vector<8x1xf32>
    %327 = vector.broadcast %326 : vector<8x1xf32> to vector<8x5xf32>
    %328 = arith.mulf %325, %327 : vector<8x5xf32>
    %cst_110 = arith.constant dense<0.000000e+00> : vector<8x8xf32>
    %329 = tpu.matmul %328, %328, %cst_110 {dimension_numbers = #tpu.dot_dimension_numbers<[1], [1], [0], [0], [0, 0, 1, 0], [], []>} : vector<8x5xf32>, vector<8x5xf32>, vector<8x8xf32> -> vector<8x8xf32>
    %cst_111 = arith.constant 0.000000e+00 : f32
    %330 = vector.broadcast %cst_111 : f32 to vector<8x8xf32>
    %331 = arith.cmpf ogt, %329, %330 : vector<8x8xf32>
    %332 = arith.andi %272, %331 : vector<8x8xi1>
    %333 = math.exp %329 : vector<8x8xf32>
    %cst_112 = arith.constant 0.000000e+00 : f32
    %334 = vector.broadcast %cst_112 : f32 to vector<8x8xf32>
    %335 = arith.select %332, %333, %334 : vector<8x8xi1>, vector<8x8xf32>
    %cst_113 = arith.constant dense<0.000000e+00> : vector<8xf32>
    %336 = vector.multi_reduction <add>, %335, %cst_113 [1] : vector<8x8xf32> to vector<8xf32>
    %337 = vector.shape_cast %336 : vector<8xf32> to vector<8x1xf32>
    %c4_i32 = arith.constant 4 : i32
    %338 = vector.broadcast %c4_i32 : i32 to vector<8x5xi32>
    %339 = arith.cmpi eq, %273, %338 : vector<8x5xi32>
    %cst_114 = arith.constant 0.000000e+00 : f32
    %340 = vector.broadcast %cst_114 : f32 to vector<8x5xf32>
    %341 = arith.select %339, %340, %269 : vector<8x5xi1>, vector<8x5xf32>
    %342 = vector.extract_strided_slice %238 {offsets = [0, 4], sizes = [8, 1], strides = [1, 1]} : vector<8x5xf32> to vector<8x1xf32>
    %343 = vector.broadcast %342 : vector<8x1xf32> to vector<8x5xf32>
    %344 = arith.mulf %341, %343 : vector<8x5xf32>
    %cst_115 = arith.constant dense<0.000000e+00> : vector<8x8xf32>
    %345 = tpu.matmul %344, %344, %cst_115 {dimension_numbers = #tpu.dot_dimension_numbers<[1], [1], [0], [0], [0, 0, 1, 0], [], []>} : vector<8x5xf32>, vector<8x5xf32>, vector<8x8xf32> -> vector<8x8xf32>
    %cst_116 = arith.constant 0.000000e+00 : f32
    %346 = vector.broadcast %cst_116 : f32 to vector<8x8xf32>
    %347 = arith.cmpf ogt, %345, %346 : vector<8x8xf32>
    %348 = arith.andi %272, %347 : vector<8x8xi1>
    %349 = math.exp %345 : vector<8x8xf32>
    %cst_117 = arith.constant 0.000000e+00 : f32
    %350 = vector.broadcast %cst_117 : f32 to vector<8x8xf32>
    %351 = arith.select %348, %349, %350 : vector<8x8xi1>, vector<8x8xf32>
    %cst_118 = arith.constant dense<0.000000e+00> : vector<8xf32>
    %352 = vector.multi_reduction <add>, %351, %cst_118 [1] : vector<8x8xf32> to vector<8xf32>
    %353 = vector.shape_cast %352 : vector<8xf32> to vector<8x1xf32>
    %354 = tpu.concatenate %289, %305, %321, %337, %353 in 1 : vector<8x1xf32>, vector<8x1xf32>, vector<8x1xf32>, vector<8x1xf32>, vector<8x1xf32> -> vector<8x5xf32>
    %cst_119 = arith.constant dense<0.000000e+00> : vector<5xf32>
    %355 = vector.multi_reduction <add>, %354, %cst_119 [0] : vector<8x5xf32> to vector<5xf32>
    %356 = vector.shape_cast %355 : vector<5xf32> to vector<1x5xf32>
    %cst_120 = arith.constant 1.000000e-30 : f32
    %357 = vector.broadcast %cst_120 : f32 to vector<1x5xf32>
    %358 = arith.maximumf %356, %357 : vector<1x5xf32>
    %359 = tpu.reciprocal %358 {approx = true} : vector<1x5xf32> -> vector<1x5xf32>
    %360 = vector.broadcast %359 : vector<1x5xf32> to vector<8x5xf32>
    %361 = arith.mulf %354, %360 : vector<8x5xf32>
    %cst_121 = arith.constant 1.000000e+00 : f32
    %362 = vector.broadcast %cst_121 : f32 to vector<8x5xf32>
    %363 = arith.addf %361, %362 : vector<8x5xf32>
    %364 = math.rsqrt %363 : vector<8x5xf32>
    %cst_122 = arith.constant dense<0.000000e+00> : vector<8x32xf32>
    %365 = tpu.matmul %205, %18, %cst_122 {dimension_numbers = #tpu.dot_dimension_numbers<[1], [0], [0], [1], [0, 0, 1, 1], [], []>} : vector<8x160xf32>, vector<160x32xf32>, vector<8x32xf32> -> vector<8x32xf32>
    %366 = vector.extract_strided_slice %364 {offsets = [0, 0], sizes = [8, 1], strides = [1, 1]} : vector<8x5xf32> to vector<8x1xf32>
    %367 = vector.broadcast %366 : vector<8x1xf32> to vector<8x32xf32>
    %368 = arith.mulf %367, %365 : vector<8x32xf32>
    %369 = vector.extract_strided_slice %359 {offsets = [0, 0], sizes = [1, 1], strides = [1, 1]} : vector<1x5xf32> to vector<1x1xf32>
    %cst_123 = arith.constant dense<0.000000e+00> : vector<8x32xf32>
    %370 = tpu.matmul %287, %368, %cst_123 {dimension_numbers = #tpu.dot_dimension_numbers<[1], [0], [0], [1], [0, 0, 1, 1], [], []>} : vector<8x8xf32>, vector<8x32xf32>, vector<8x32xf32> -> vector<8x32xf32>
    %371 = vector.broadcast %369 : vector<1x1xf32> to vector<8x32xf32>
    %372 = arith.mulf %371, %370 : vector<8x32xf32>
    %373 = arith.addf %372, %368 : vector<8x32xf32>
    %374 = vector.broadcast %366 : vector<8x1xf32> to vector<8x32xf32>
    %375 = arith.mulf %374, %373 : vector<8x32xf32>
    %376 = vector.broadcast %13 : vector<1x32xf32> to vector<8x32xf32>
    %377 = arith.addf %375, %376 : vector<8x32xf32>
    %cst_124 = arith.constant 0.000000e+00 : f32
    %378 = vector.broadcast %cst_124 : f32 to vector<8x32xf32>
    %379 = arith.maximumf %377, %378 : vector<8x32xf32>
    %380 = vector.extract_strided_slice %238 {offsets = [0, 0], sizes = [8, 1], strides = [1, 1]} : vector<8x5xf32> to vector<8x1xf32>
    %381 = vector.broadcast %380 : vector<8x1xf32> to vector<8x32xf32>
    %382 = arith.mulf %379, %381 : vector<8x32xf32>
    %cst_125 = arith.constant dense<0.000000e+00> : vector<8xf32>
    %383 = vector.multi_reduction <add>, %382, %cst_125 [1] : vector<8x32xf32> to vector<8xf32>
    %384 = vector.shape_cast %383 : vector<8xf32> to vector<8x1xf32>
    %385 = arith.mulf %382, %379 : vector<8x32xf32>
    %cst_126 = arith.constant dense<0.000000e+00> : vector<8xf32>
    %386 = vector.multi_reduction <add>, %385, %cst_126 [1] : vector<8x32xf32> to vector<8xf32>
    %387 = vector.shape_cast %386 : vector<8xf32> to vector<8x1xf32>
    %388 = vector.extract_strided_slice %364 {offsets = [0, 1], sizes = [8, 1], strides = [1, 1]} : vector<8x5xf32> to vector<8x1xf32>
    %389 = vector.broadcast %388 : vector<8x1xf32> to vector<8x32xf32>
    %390 = arith.mulf %389, %365 : vector<8x32xf32>
    %391 = vector.extract_strided_slice %359 {offsets = [0, 1], sizes = [1, 1], strides = [1, 1]} : vector<1x5xf32> to vector<1x1xf32>
    %cst_127 = arith.constant dense<0.000000e+00> : vector<8x32xf32>
    %392 = tpu.matmul %303, %390, %cst_127 {dimension_numbers = #tpu.dot_dimension_numbers<[1], [0], [0], [1], [0, 0, 1, 1], [], []>} : vector<8x8xf32>, vector<8x32xf32>, vector<8x32xf32> -> vector<8x32xf32>
    %393 = vector.broadcast %391 : vector<1x1xf32> to vector<8x32xf32>
    %394 = arith.mulf %393, %392 : vector<8x32xf32>
    %395 = arith.addf %394, %390 : vector<8x32xf32>
    %396 = vector.broadcast %388 : vector<8x1xf32> to vector<8x32xf32>
    %397 = arith.mulf %396, %395 : vector<8x32xf32>
    %398 = vector.broadcast %13 : vector<1x32xf32> to vector<8x32xf32>
    %399 = arith.addf %397, %398 : vector<8x32xf32>
    %cst_128 = arith.constant 0.000000e+00 : f32
    %400 = vector.broadcast %cst_128 : f32 to vector<8x32xf32>
    %401 = arith.maximumf %399, %400 : vector<8x32xf32>
    %402 = vector.extract_strided_slice %238 {offsets = [0, 1], sizes = [8, 1], strides = [1, 1]} : vector<8x5xf32> to vector<8x1xf32>
    %403 = vector.broadcast %402 : vector<8x1xf32> to vector<8x32xf32>
    %404 = arith.mulf %401, %403 : vector<8x32xf32>
    %cst_129 = arith.constant dense<0.000000e+00> : vector<8xf32>
    %405 = vector.multi_reduction <add>, %404, %cst_129 [1] : vector<8x32xf32> to vector<8xf32>
    %406 = vector.shape_cast %405 : vector<8xf32> to vector<8x1xf32>
    %407 = arith.mulf %404, %401 : vector<8x32xf32>
    %cst_130 = arith.constant dense<0.000000e+00> : vector<8xf32>
    %408 = vector.multi_reduction <add>, %407, %cst_130 [1] : vector<8x32xf32> to vector<8xf32>
    %409 = vector.shape_cast %408 : vector<8xf32> to vector<8x1xf32>
    %410 = vector.extract_strided_slice %364 {offsets = [0, 2], sizes = [8, 1], strides = [1, 1]} : vector<8x5xf32> to vector<8x1xf32>
    %411 = vector.broadcast %410 : vector<8x1xf32> to vector<8x32xf32>
    %412 = arith.mulf %411, %365 : vector<8x32xf32>
    %413 = vector.extract_strided_slice %359 {offsets = [0, 2], sizes = [1, 1], strides = [1, 1]} : vector<1x5xf32> to vector<1x1xf32>
    %cst_131 = arith.constant dense<0.000000e+00> : vector<8x32xf32>
    %414 = tpu.matmul %319, %412, %cst_131 {dimension_numbers = #tpu.dot_dimension_numbers<[1], [0], [0], [1], [0, 0, 1, 1], [], []>} : vector<8x8xf32>, vector<8x32xf32>, vector<8x32xf32> -> vector<8x32xf32>
    %415 = vector.broadcast %413 : vector<1x1xf32> to vector<8x32xf32>
    %416 = arith.mulf %415, %414 : vector<8x32xf32>
    %417 = arith.addf %416, %412 : vector<8x32xf32>
    %418 = vector.broadcast %410 : vector<8x1xf32> to vector<8x32xf32>
    %419 = arith.mulf %418, %417 : vector<8x32xf32>
    %420 = vector.broadcast %13 : vector<1x32xf32> to vector<8x32xf32>
    %421 = arith.addf %419, %420 : vector<8x32xf32>
    %cst_132 = arith.constant 0.000000e+00 : f32
    %422 = vector.broadcast %cst_132 : f32 to vector<8x32xf32>
    %423 = arith.maximumf %421, %422 : vector<8x32xf32>
    %424 = vector.extract_strided_slice %238 {offsets = [0, 2], sizes = [8, 1], strides = [1, 1]} : vector<8x5xf32> to vector<8x1xf32>
    %425 = vector.broadcast %424 : vector<8x1xf32> to vector<8x32xf32>
    %426 = arith.mulf %423, %425 : vector<8x32xf32>
    %cst_133 = arith.constant dense<0.000000e+00> : vector<8xf32>
    %427 = vector.multi_reduction <add>, %426, %cst_133 [1] : vector<8x32xf32> to vector<8xf32>
    %428 = vector.shape_cast %427 : vector<8xf32> to vector<8x1xf32>
    %429 = arith.mulf %426, %423 : vector<8x32xf32>
    %cst_134 = arith.constant dense<0.000000e+00> : vector<8xf32>
    %430 = vector.multi_reduction <add>, %429, %cst_134 [1] : vector<8x32xf32> to vector<8xf32>
    %431 = vector.shape_cast %430 : vector<8xf32> to vector<8x1xf32>
    %432 = vector.extract_strided_slice %364 {offsets = [0, 3], sizes = [8, 1], strides = [1, 1]} : vector<8x5xf32> to vector<8x1xf32>
    %433 = vector.broadcast %432 : vector<8x1xf32> to vector<8x32xf32>
    %434 = arith.mulf %433, %365 : vector<8x32xf32>
    %435 = vector.extract_strided_slice %359 {offsets = [0, 3], sizes = [1, 1], strides = [1, 1]} : vector<1x5xf32> to vector<1x1xf32>
    %cst_135 = arith.constant dense<0.000000e+00> : vector<8x32xf32>
    %436 = tpu.matmul %335, %434, %cst_135 {dimension_numbers = #tpu.dot_dimension_numbers<[1], [0], [0], [1], [0, 0, 1, 1], [], []>} : vector<8x8xf32>, vector<8x32xf32>, vector<8x32xf32> -> vector<8x32xf32>
    %437 = vector.broadcast %435 : vector<1x1xf32> to vector<8x32xf32>
    %438 = arith.mulf %437, %436 : vector<8x32xf32>
    %439 = arith.addf %438, %434 : vector<8x32xf32>
    %440 = vector.broadcast %432 : vector<8x1xf32> to vector<8x32xf32>
    %441 = arith.mulf %440, %439 : vector<8x32xf32>
    %442 = vector.broadcast %13 : vector<1x32xf32> to vector<8x32xf32>
    %443 = arith.addf %441, %442 : vector<8x32xf32>
    %cst_136 = arith.constant 0.000000e+00 : f32
    %444 = vector.broadcast %cst_136 : f32 to vector<8x32xf32>
    %445 = arith.maximumf %443, %444 : vector<8x32xf32>
    %446 = vector.extract_strided_slice %238 {offsets = [0, 3], sizes = [8, 1], strides = [1, 1]} : vector<8x5xf32> to vector<8x1xf32>
    %447 = vector.broadcast %446 : vector<8x1xf32> to vector<8x32xf32>
    %448 = arith.mulf %445, %447 : vector<8x32xf32>
    %cst_137 = arith.constant dense<0.000000e+00> : vector<8xf32>
    %449 = vector.multi_reduction <add>, %448, %cst_137 [1] : vector<8x32xf32> to vector<8xf32>
    %450 = vector.shape_cast %449 : vector<8xf32> to vector<8x1xf32>
    %451 = arith.mulf %448, %445 : vector<8x32xf32>
    %cst_138 = arith.constant dense<0.000000e+00> : vector<8xf32>
    %452 = vector.multi_reduction <add>, %451, %cst_138 [1] : vector<8x32xf32> to vector<8xf32>
    %453 = vector.shape_cast %452 : vector<8xf32> to vector<8x1xf32>
    %454 = vector.extract_strided_slice %364 {offsets = [0, 4], sizes = [8, 1], strides = [1, 1]} : vector<8x5xf32> to vector<8x1xf32>
    %455 = vector.broadcast %454 : vector<8x1xf32> to vector<8x32xf32>
    %456 = arith.mulf %455, %365 : vector<8x32xf32>
    %457 = vector.extract_strided_slice %359 {offsets = [0, 4], sizes = [1, 1], strides = [1, 1]} : vector<1x5xf32> to vector<1x1xf32>
    %cst_139 = arith.constant dense<0.000000e+00> : vector<8x32xf32>
    %458 = tpu.matmul %351, %456, %cst_139 {dimension_numbers = #tpu.dot_dimension_numbers<[1], [0], [0], [1], [0, 0, 1, 1], [], []>} : vector<8x8xf32>, vector<8x32xf32>, vector<8x32xf32> -> vector<8x32xf32>
    %459 = vector.broadcast %457 : vector<1x1xf32> to vector<8x32xf32>
    %460 = arith.mulf %459, %458 : vector<8x32xf32>
    %461 = arith.addf %460, %456 : vector<8x32xf32>
    %462 = vector.broadcast %454 : vector<8x1xf32> to vector<8x32xf32>
    %463 = arith.mulf %462, %461 : vector<8x32xf32>
    %464 = vector.broadcast %13 : vector<1x32xf32> to vector<8x32xf32>
    %465 = arith.addf %463, %464 : vector<8x32xf32>
    %cst_140 = arith.constant 0.000000e+00 : f32
    %466 = vector.broadcast %cst_140 : f32 to vector<8x32xf32>
    %467 = arith.maximumf %465, %466 : vector<8x32xf32>
    %468 = vector.extract_strided_slice %238 {offsets = [0, 4], sizes = [8, 1], strides = [1, 1]} : vector<8x5xf32> to vector<8x1xf32>
    %469 = vector.broadcast %468 : vector<8x1xf32> to vector<8x32xf32>
    %470 = arith.mulf %467, %469 : vector<8x32xf32>
    %cst_141 = arith.constant dense<0.000000e+00> : vector<8xf32>
    %471 = vector.multi_reduction <add>, %470, %cst_141 [1] : vector<8x32xf32> to vector<8xf32>
    %472 = vector.shape_cast %471 : vector<8xf32> to vector<8x1xf32>
    %473 = arith.mulf %470, %467 : vector<8x32xf32>
    %cst_142 = arith.constant dense<0.000000e+00> : vector<8xf32>
    %474 = vector.multi_reduction <add>, %473, %cst_142 [1] : vector<8x32xf32> to vector<8xf32>
    %475 = vector.shape_cast %474 : vector<8xf32> to vector<8x1xf32>
    %476 = tpu.concatenate %384, %406, %428, %450, %472 in 1 : vector<8x1xf32>, vector<8x1xf32>, vector<8x1xf32>, vector<8x1xf32>, vector<8x1xf32> -> vector<8x5xf32>
    %cst_143 = arith.constant dense<0.000000e+00> : vector<5xf32>
    %477 = vector.multi_reduction <add>, %476, %cst_143 [0] : vector<8x5xf32> to vector<5xf32>
    %478 = vector.shape_cast %477 : vector<5xf32> to vector<1x5xf32>
    %479 = tpu.concatenate %387, %409, %431, %453, %475 in 1 : vector<8x1xf32>, vector<8x1xf32>, vector<8x1xf32>, vector<8x1xf32>, vector<8x1xf32> -> vector<8x5xf32>
    %cst_144 = arith.constant dense<0.000000e+00> : vector<5xf32>
    %480 = vector.multi_reduction <add>, %479, %cst_144 [0] : vector<8x5xf32> to vector<5xf32>
    %481 = vector.shape_cast %480 : vector<5xf32> to vector<1x5xf32>
    %cst_145 = arith.constant dense<0.000000e+00> : vector<5xf32>
    %482 = vector.multi_reduction <add>, %238, %cst_145 [0] : vector<8x5xf32> to vector<5xf32>
    %483 = vector.shape_cast %482 : vector<5xf32> to vector<1x5xf32>
    %cst_146 = arith.constant 1.000000e+00 : f32
    %484 = vector.broadcast %cst_146 : f32 to vector<1x5xf32>
    %485 = arith.maximumf %483, %484 : vector<1x5xf32>
    %cst_147 = arith.constant 3.200000e+01 : f32
    %486 = vector.broadcast %cst_147 : f32 to vector<1x5xf32>
    %487 = arith.mulf %485, %486 : vector<1x5xf32>
    %488 = tpu.reciprocal %487 {approx = true} : vector<1x5xf32> -> vector<1x5xf32>
    %489 = arith.mulf %478, %488 : vector<1x5xf32>
    %490 = arith.mulf %481, %488 : vector<1x5xf32>
    %491 = arith.mulf %489, %489 : vector<1x5xf32>
    %492 = arith.subf %490, %491 : vector<1x5xf32>
    %cst_148 = arith.constant 0.000000e+00 : f32
    %493 = vector.broadcast %cst_148 : f32 to vector<1x5xf32>
    %494 = arith.maximumf %492, %493 : vector<1x5xf32>
    %cst_149 = arith.constant 9.99999974E-6 : f32
    %495 = vector.broadcast %cst_149 : f32 to vector<1x5xf32>
    %496 = arith.addf %494, %495 : vector<1x5xf32>
    %497 = math.rsqrt %496 : vector<1x5xf32>
    %cst_150 = arith.constant 0.000000e+00 : f32
    %498 = vector.broadcast %cst_150 : f32 to vector<8x32xf32>
    %cst_151 = arith.constant 0.000000e+00 : f32
    %499 = vector.broadcast %cst_151 : f32 to vector<8x32xf32>
    %500 = vector.extract_strided_slice %489 {offsets = [0, 0], sizes = [1, 1], strides = [1, 1]} : vector<1x5xf32> to vector<1x1xf32>
    %501 = vector.broadcast %500 : vector<1x1xf32> to vector<8x32xf32>
    %502 = arith.subf %379, %501 : vector<8x32xf32>
    %503 = vector.extract_strided_slice %497 {offsets = [0, 0], sizes = [1, 1], strides = [1, 1]} : vector<1x5xf32> to vector<1x1xf32>
    %504 = vector.broadcast %503 : vector<1x1xf32> to vector<8x32xf32>
    %505 = arith.mulf %502, %504 : vector<8x32xf32>
    %cst_152 = arith.constant 0.000000e+00 : f32
    %506 = vector.broadcast %cst_152 : f32 to vector<8x1xf32>
    %507 = arith.cmpf oeq, %244, %506 : vector<8x1xf32>
    %508 = arith.extui %507 : vector<8x1xi1> to vector<8x1xi32>
    %509 = arith.sitofp %508 : vector<8x1xi32> to vector<8x1xf32>
    %510 = vector.broadcast %509 : vector<8x1xf32> to vector<8x32xf32>
    %511 = arith.mulf %510, %505 : vector<8x32xf32>
    %512 = arith.addf %498, %511 : vector<8x32xf32>
    %cst_153 = arith.constant 0.000000e+00 : f32
    %513 = vector.broadcast %cst_153 : f32 to vector<8x1xf32>
    %514 = arith.cmpf oeq, %254, %513 : vector<8x1xf32>
    %515 = arith.extui %514 : vector<8x1xi1> to vector<8x1xi32>
    %516 = arith.sitofp %515 : vector<8x1xi32> to vector<8x1xf32>
    %517 = vector.broadcast %516 : vector<8x1xf32> to vector<8x32xf32>
    %518 = arith.mulf %517, %505 : vector<8x32xf32>
    %519 = arith.addf %499, %518 : vector<8x32xf32>
    %520 = vector.extract_strided_slice %489 {offsets = [0, 1], sizes = [1, 1], strides = [1, 1]} : vector<1x5xf32> to vector<1x1xf32>
    %521 = vector.broadcast %520 : vector<1x1xf32> to vector<8x32xf32>
    %522 = arith.subf %401, %521 : vector<8x32xf32>
    %523 = vector.extract_strided_slice %497 {offsets = [0, 1], sizes = [1, 1], strides = [1, 1]} : vector<1x5xf32> to vector<1x1xf32>
    %524 = vector.broadcast %523 : vector<1x1xf32> to vector<8x32xf32>
    %525 = arith.mulf %522, %524 : vector<8x32xf32>
    %cst_154 = arith.constant 1.000000e+00 : f32
    %526 = vector.broadcast %cst_154 : f32 to vector<8x1xf32>
    %527 = arith.cmpf oeq, %244, %526 : vector<8x1xf32>
    %528 = arith.extui %527 : vector<8x1xi1> to vector<8x1xi32>
    %529 = arith.sitofp %528 : vector<8x1xi32> to vector<8x1xf32>
    %530 = vector.broadcast %529 : vector<8x1xf32> to vector<8x32xf32>
    %531 = arith.mulf %530, %525 : vector<8x32xf32>
    %532 = arith.addf %512, %531 : vector<8x32xf32>
    %cst_155 = arith.constant 1.000000e+00 : f32
    %533 = vector.broadcast %cst_155 : f32 to vector<8x1xf32>
    %534 = arith.cmpf oeq, %254, %533 : vector<8x1xf32>
    %535 = arith.extui %534 : vector<8x1xi1> to vector<8x1xi32>
    %536 = arith.sitofp %535 : vector<8x1xi32> to vector<8x1xf32>
    %537 = vector.broadcast %536 : vector<8x1xf32> to vector<8x32xf32>
    %538 = arith.mulf %537, %525 : vector<8x32xf32>
    %539 = arith.addf %519, %538 : vector<8x32xf32>
    %540 = vector.extract_strided_slice %489 {offsets = [0, 2], sizes = [1, 1], strides = [1, 1]} : vector<1x5xf32> to vector<1x1xf32>
    %541 = vector.broadcast %540 : vector<1x1xf32> to vector<8x32xf32>
    %542 = arith.subf %423, %541 : vector<8x32xf32>
    %543 = vector.extract_strided_slice %497 {offsets = [0, 2], sizes = [1, 1], strides = [1, 1]} : vector<1x5xf32> to vector<1x1xf32>
    %544 = vector.broadcast %543 : vector<1x1xf32> to vector<8x32xf32>
    %545 = arith.mulf %542, %544 : vector<8x32xf32>
    %cst_156 = arith.constant 2.000000e+00 : f32
    %546 = vector.broadcast %cst_156 : f32 to vector<8x1xf32>
    %547 = arith.cmpf oeq, %244, %546 : vector<8x1xf32>
    %548 = arith.extui %547 : vector<8x1xi1> to vector<8x1xi32>
    %549 = arith.sitofp %548 : vector<8x1xi32> to vector<8x1xf32>
    %550 = vector.broadcast %549 : vector<8x1xf32> to vector<8x32xf32>
    %551 = arith.mulf %550, %545 : vector<8x32xf32>
    %552 = arith.addf %532, %551 : vector<8x32xf32>
    %cst_157 = arith.constant 2.000000e+00 : f32
    %553 = vector.broadcast %cst_157 : f32 to vector<8x1xf32>
    %554 = arith.cmpf oeq, %254, %553 : vector<8x1xf32>
    %555 = arith.extui %554 : vector<8x1xi1> to vector<8x1xi32>
    %556 = arith.sitofp %555 : vector<8x1xi32> to vector<8x1xf32>
    %557 = vector.broadcast %556 : vector<8x1xf32> to vector<8x32xf32>
    %558 = arith.mulf %557, %545 : vector<8x32xf32>
    %559 = arith.addf %539, %558 : vector<8x32xf32>
    %560 = vector.extract_strided_slice %489 {offsets = [0, 3], sizes = [1, 1], strides = [1, 1]} : vector<1x5xf32> to vector<1x1xf32>
    %561 = vector.broadcast %560 : vector<1x1xf32> to vector<8x32xf32>
    %562 = arith.subf %445, %561 : vector<8x32xf32>
    %563 = vector.extract_strided_slice %497 {offsets = [0, 3], sizes = [1, 1], strides = [1, 1]} : vector<1x5xf32> to vector<1x1xf32>
    %564 = vector.broadcast %563 : vector<1x1xf32> to vector<8x32xf32>
    %565 = arith.mulf %562, %564 : vector<8x32xf32>
    %cst_158 = arith.constant 3.000000e+00 : f32
    %566 = vector.broadcast %cst_158 : f32 to vector<8x1xf32>
    %567 = arith.cmpf oeq, %244, %566 : vector<8x1xf32>
    %568 = arith.extui %567 : vector<8x1xi1> to vector<8x1xi32>
    %569 = arith.sitofp %568 : vector<8x1xi32> to vector<8x1xf32>
    %570 = vector.broadcast %569 : vector<8x1xf32> to vector<8x32xf32>
    %571 = arith.mulf %570, %565 : vector<8x32xf32>
    %572 = arith.addf %552, %571 : vector<8x32xf32>
    %cst_159 = arith.constant 3.000000e+00 : f32
    %573 = vector.broadcast %cst_159 : f32 to vector<8x1xf32>
    %574 = arith.cmpf oeq, %254, %573 : vector<8x1xf32>
    %575 = arith.extui %574 : vector<8x1xi1> to vector<8x1xi32>
    %576 = arith.sitofp %575 : vector<8x1xi32> to vector<8x1xf32>
    %577 = vector.broadcast %576 : vector<8x1xf32> to vector<8x32xf32>
    %578 = arith.mulf %577, %565 : vector<8x32xf32>
    %579 = arith.addf %559, %578 : vector<8x32xf32>
    %580 = vector.extract_strided_slice %489 {offsets = [0, 4], sizes = [1, 1], strides = [1, 1]} : vector<1x5xf32> to vector<1x1xf32>
    %581 = vector.broadcast %580 : vector<1x1xf32> to vector<8x32xf32>
    %582 = arith.subf %467, %581 : vector<8x32xf32>
    %583 = vector.extract_strided_slice %497 {offsets = [0, 4], sizes = [1, 1], strides = [1, 1]} : vector<1x5xf32> to vector<1x1xf32>
    %584 = vector.broadcast %583 : vector<1x1xf32> to vector<8x32xf32>
    %585 = arith.mulf %582, %584 : vector<8x32xf32>
    %cst_160 = arith.constant 4.000000e+00 : f32
    %586 = vector.broadcast %cst_160 : f32 to vector<8x1xf32>
    %587 = arith.cmpf oeq, %244, %586 : vector<8x1xf32>
    %588 = arith.extui %587 : vector<8x1xi1> to vector<8x1xi32>
    %589 = arith.sitofp %588 : vector<8x1xi32> to vector<8x1xf32>
    %590 = vector.broadcast %589 : vector<8x1xf32> to vector<8x32xf32>
    %591 = arith.mulf %590, %585 : vector<8x32xf32>
    %592 = arith.addf %572, %591 : vector<8x32xf32>
    %cst_161 = arith.constant 4.000000e+00 : f32
    %593 = vector.broadcast %cst_161 : f32 to vector<8x1xf32>
    %594 = arith.cmpf oeq, %254, %593 : vector<8x1xf32>
    %595 = arith.extui %594 : vector<8x1xi1> to vector<8x1xi32>
    %596 = arith.sitofp %595 : vector<8x1xi32> to vector<8x1xf32>
    %597 = vector.broadcast %596 : vector<8x1xf32> to vector<8x32xf32>
    %598 = arith.mulf %597, %585 : vector<8x32xf32>
    %599 = arith.addf %579, %598 : vector<8x32xf32>
    %cst_162 = arith.constant dense<0.000000e+00> : vector<8x32xf32>
    %600 = tpu.matmul %205, %19, %cst_162 {dimension_numbers = #tpu.dot_dimension_numbers<[1], [0], [0], [1], [0, 0, 1, 1], [], []>} : vector<8x160xf32>, vector<160x32xf32>, vector<8x32xf32> -> vector<8x32xf32>
    %601 = vector.broadcast %14 : vector<1x32xf32> to vector<8x32xf32>
    %602 = arith.addf %600, %601 : vector<8x32xf32>
    %c320 = arith.constant 320 : index
    %c0_163 = arith.constant 0 : index
    %603 = vector.load %arg2[%c320, %c0_163] : memref<1072x32xf32, #tpu.memory_space<vmem>>, vector<32x32xf32>
    %cst_164 = arith.constant dense<0.000000e+00> : vector<8x32xf32>
    %604 = tpu.matmul %592, %603, %cst_164 {dimension_numbers = #tpu.dot_dimension_numbers<[1], [0], [0], [1], [0, 0, 1, 1], [], []>} : vector<8x32xf32>, vector<32x32xf32>, vector<8x32xf32> -> vector<8x32xf32>
    %605 = arith.addf %602, %604 : vector<8x32xf32>
    %c352 = arith.constant 352 : index
    %c0_165 = arith.constant 0 : index
    %606 = vector.load %arg2[%c352, %c0_165] : memref<1072x32xf32, #tpu.memory_space<vmem>>, vector<32x32xf32>
    %cst_166 = arith.constant dense<0.000000e+00> : vector<8x32xf32>
    %607 = tpu.matmul %599, %606, %cst_166 {dimension_numbers = #tpu.dot_dimension_numbers<[1], [0], [0], [1], [0, 0, 1, 1], [], []>} : vector<8x32xf32>, vector<32x32xf32>, vector<8x32xf32> -> vector<8x32xf32>
    %608 = arith.addf %605, %607 : vector<8x32xf32>
    %cst_167 = arith.constant 0.000000e+00 : f32
    %609 = vector.broadcast %cst_167 : f32 to vector<8x32xf32>
    %610 = arith.maximumf %608, %609 : vector<8x32xf32>
    %cst_168 = arith.constant dense<0.000000e+00> : vector<8xf32>
    %611 = vector.multi_reduction <add>, %610, %cst_168 [1] : vector<8x32xf32> to vector<8xf32>
    %612 = vector.shape_cast %611 : vector<8xf32> to vector<8x1xf32>
    %cst_169 = arith.constant 3.125000e-02 : f32
    %613 = vector.broadcast %cst_169 : f32 to vector<8x1xf32>
    %614 = arith.mulf %612, %613 : vector<8x1xf32>
    %615 = arith.mulf %610, %610 : vector<8x32xf32>
    %cst_170 = arith.constant dense<0.000000e+00> : vector<8xf32>
    %616 = vector.multi_reduction <add>, %615, %cst_170 [1] : vector<8x32xf32> to vector<8xf32>
    %617 = vector.shape_cast %616 : vector<8xf32> to vector<8x1xf32>
    %cst_171 = arith.constant 3.125000e-02 : f32
    %618 = vector.broadcast %cst_171 : f32 to vector<8x1xf32>
    %619 = arith.mulf %617, %618 : vector<8x1xf32>
    %620 = arith.mulf %614, %614 : vector<8x1xf32>
    %621 = arith.subf %619, %620 : vector<8x1xf32>
    %cst_172 = arith.constant 0.000000e+00 : f32
    %622 = vector.broadcast %cst_172 : f32 to vector<8x1xf32>
    %623 = arith.maximumf %621, %622 : vector<8x1xf32>
    %624 = vector.broadcast %614 : vector<8x1xf32> to vector<8x32xf32>
    %625 = arith.subf %610, %624 : vector<8x32xf32>
    %cst_173 = arith.constant 9.99999974E-6 : f32
    %626 = vector.broadcast %cst_173 : f32 to vector<8x1xf32>
    %627 = arith.addf %623, %626 : vector<8x1xf32>
    %628 = math.rsqrt %627 : vector<8x1xf32>
    %629 = vector.broadcast %628 : vector<8x1xf32> to vector<8x32xf32>
    %630 = arith.mulf %625, %629 : vector<8x32xf32>
    %631 = vector.broadcast %15 : vector<1x32xf32> to vector<8x32xf32>
    %632 = arith.mulf %630, %631 : vector<8x32xf32>
    %633 = vector.broadcast %16 : vector<1x32xf32> to vector<8x32xf32>
    %634 = arith.addf %632, %633 : vector<8x32xf32>
    %cst_174 = arith.constant dense<0.000000e+00> : vector<8x3xf32>
    %635 = tpu.matmul %634, %21, %cst_174 {dimension_numbers = #tpu.dot_dimension_numbers<[1], [0], [0], [1], [0, 0, 1, 1], [], []>} : vector<8x32xf32>, vector<32x3xf32>, vector<8x3xf32> -> vector<8x3xf32>
    %636 = vector.broadcast %17 : vector<1x3xf32> to vector<8x3xf32>
    %637 = arith.addf %635, %636 : vector<8x3xf32>
    %c0_175 = arith.constant 0 : index
    %c0_176 = arith.constant 0 : index
    %638 = vector.load %arg3[%c0_175, %c0_176] : memref<8x3xf32, #tpu.memory_space<vmem>>, vector<8x3xf32>
    tpu.vector_store %arg3[%c0_175, %c0_176], %637 {strides = array<i32>} : memref<8x3xf32, #tpu.memory_space<vmem>>, vector<8x3xf32>,
    return
  }
}

</mosaic_0001>

<llo_original>
// kernel: tpu_custom_call.1
$region0: #{tpu_custom_call.1}
  #allocation0 [shape = 'u32[]', space=smem, size = 0x4, offset = 0x4, fixed_abs, tag = 'smem constant byte address 0x4 - core index']
  #allocation1 [shape = 'u32[144,128]{1,0:T(1,128)}', space=vmem, size = 0x12000, scoped, tag = 'internal scratch']
  %s0 = inlined_call_operand.vmem [shape: f32[8,5], index: 0, kind: input, shape index: {}]
  %s1 = inlined_call_operand.vmem [shape: f32[224,320], index: 1, kind: input, shape index: {}]
  %s2 = inlined_call_operand.vmem [shape: f32[1072,32], index: 2, kind: input, shape index: {}]
  %s3 = inlined_call_operand.vmem [shape: f32[8,3], index: 3, kind: output, shape index: {}]
  %s4 = sld [smem:[#allocation0]]
  $region22: #{tpu_custom_call.1} parent=0
    _
  %s6 = ssub.s32 1, %s4
  %s7 = scalar_select 0, %s6, %s4
  // Predicated region
  $region2: #{tpu_custom_call.1} parent=0 // pred_check
    _
  $region3: #{tpu_custom_call.1} parent=0 // pred_check_branch
    %9 = sbr.rel (0) target = $region5
  $region4: #{tpu_custom_call.1} parent=0 // pred_region
    _
  $region5: #{tpu_custom_call.1} parent=0 // pred_fallthru
    _
  // Predicated region
  $region6: #{tpu_custom_call.1} parent=0 // pred_check
    _
  $region7: #{tpu_custom_call.1} parent=0 // pred_check_branch
    %11 = sbr.rel (0) target = $region9
  $region8: #{tpu_custom_call.1} parent=0 // pred_region
    _
  $region9: #{tpu_custom_call.1} parent=0 // pred_fallthru
    _
  // Predicated region
  $region10: #{tpu_custom_call.1} parent=0 // pred_check
    _
  $region11: #{tpu_custom_call.1} parent=0 // pred_check_branch
    %13 = sbr.rel (0) target = $region13
  $region12: #{tpu_custom_call.1} parent=0 // pred_region
    _
  $region13: #{tpu_custom_call.1} parent=0 // pred_fallthru
    _
  %v14 = vld [vmem:[%s1] sm:$0xff]
  %v15 = vld [vmem:[%s1 + $0x8] sm:$0xff]
  %v16 = vld [vmem:[%s1 + $0x10] sm:$0xff]
  %v17 = vld [vmem:[%s1 + $0x18] sm:$0xff]
  %v18 = vld [vmem:[%s1 + $0x20] sm:$0xff]
  %v19 = vld [vmem:[%s1 + $0x28] sm:$0xff]
  %v20 = vld [vmem:[%s1 + $0x30] sm:$0xff]
  %v21 = vld [vmem:[%s1 + $0x38] sm:$0xff]
  %v22 = vld [vmem:[%s1 + $0x40] sm:$0xff]
  %v23 = vld [vmem:[%s1 + $0x48] sm:$0xff]
  %v24 = vld [vmem:[%s1 + $0x50] sm:$0xff]
  %v25 = vld [vmem:[%s1 + $0x58] sm:$0xff]
  %v26 = vld [vmem:[%s1 + $0x60] sm:$0xff]
  %v27 = vld [vmem:[%s1 + $0x68] sm:$0xff]
  %v28 = vld [vmem:[%s1 + $0x70] sm:$0xff]
  %v29 = vld [vmem:[%s1 + $0x78] sm:$0xff]
  %v30 = vld [vmem:[%s1 + $0x80] sm:$0xff]
  %v31 = vld [vmem:[%s1 + $0x88] sm:$0xff]
  %v32 = vld [vmem:[%s1 + $0x90] sm:$0xff]
  %v33 = vld [vmem:[%s1 + $0x98] sm:$0xff]
  %v34 = vld [vmem:[%s1 + $0xa0] sm:$0xff]
  %v35 = vld [vmem:[%s1 + $0xa8] sm:$0xff]
  %v36 = vld [vmem:[%s1 + $0xb0] sm:$0xff]
  %v37 = vld [vmem:[%s1 + $0xb8] sm:$0xff]
  %v38 = vld [vmem:[%s1 + $0xc0] sm:$0xff]
  %v39 = vld [vmem:[%s1 + $0xc8] sm:$0xff]
  %v40 = vld [vmem:[%s1 + $0xd0] sm:$0xff]
  %v41 = vld [vmem:[%s1 + $0xd8] sm:$0xff]
  %v42 = vld [vmem:[%s1 + $0xe0] sm:$0xff]
  %v43 = vld [vmem:[%s1 + $0xe8] sm:$0xff]
  %v44 = vld [vmem:[%s1 + $0xf0] sm:$0xff]
  %v45 = vld [vmem:[%s1 + $0xf8] sm:$0xff]
  %v46 = vld [vmem:[%s1 + $0x100] sm:$0xff]
  %v47 = vld [vmem:[%s1 + $0x108] sm:$0xff]
  %v48 = vld [vmem:[%s1 + $0x110] sm:$0xff]
  %v49 = vld [vmem:[%s1 + $0x118] sm:$0xff]
  %v50 = vld [vmem:[%s1 + $0x120] sm:$0xff]
  %v51 = vld [vmem:[%s1 + $0x128] sm:$0xff]
  %v52 = vld [vmem:[%s1 + $0x130] sm:$0xff]
  %v53 = vld [vmem:[%s1 + $0x138] sm:$0xff]
  %v54 = vld [vmem:[%s1 + $0x140] sm:$0xff]
  %v55 = vld [vmem:[%s1 + $0x148] sm:$0xff]
  %v56 = vld [vmem:[%s1 + $0x150] sm:$0xff]
  %v57 = vld [vmem:[%s1 + $0x158] sm:$0xff]
  %v58 = vld [vmem:[%s1 + $0x160] sm:$0xff]
  %v59 = vld [vmem:[%s1 + $0x168] sm:$0xff]
  %v60 = vld [vmem:[%s1 + $0x170] sm:$0xff]
  %v61 = vld [vmem:[%s1 + $0x178] sm:$0xff]
  %v62 = vld [vmem:[%s1 + $0x180] sm:$0xff]
  %v63 = vld [vmem:[%s1 + $0x188] sm:$0xff]
  %v64 = vld [vmem:[%s1 + $0x190] sm:$0xff]
  %v65 = vld [vmem:[%s1 + $0x198] sm:$0xff]
  %v66 = vld [vmem:[%s1 + $0x1a0] sm:$0xff]
  %v67 = vld [vmem:[%s1 + $0x1a8] sm:$0xff]
  %v68 = vld [vmem:[%s1 + $0x1b0] sm:$0xff]
  %v69 = vld [vmem:[%s1 + $0x1b8] sm:$0xff]
  %v70 = vld [vmem:[%s1 + $0x1c0] sm:$0xff]
  %v71 = vld [vmem:[%s1 + $0x1c8] sm:$0xff]
  %v72 = vld [vmem:[%s1 + $0x1d0] sm:$0xff]
  %v73 = vld [vmem:[%s1 + $0x1d8] sm:$0xff]
  %v74 = vld [vmem:[%s1 + $0x1e0] sm:$0xff]
  %v75 = vld [vmem:[%s1 + $0x1e8] sm:$0xff]
  %v76 = vld [vmem:[%s1 + $0x1f0] sm:$0xff]
  %v77 = vld [vmem:[%s1 + $0x1f8] sm:$0x3]
  %v78 = vld [vmem:[%s1 + $0x200] sm:$0x3]
  %v79 = vld [vmem:[%s1 + $0x208] sm:$0x3]
  %v80 = vld [vmem:[%s1 + $0x240] sm:$0x7]
  %v81 = vld [vmem:[%s1 + $0x248] sm:$0x7]
  %v82 = vld [vmem:[%s1 + $0x258] sm:$0xff]
  %v83 = vld [vmem:[%s1 + $0x260] sm:$0xff]
  %v84 = vld [vmem:[%s1 + $0x270] sm:$0xf]
  %v85 = vld [vmem:[%s1 + $0x278] sm:$0xf]
  %v86 = vld [vmem:[%s1 + $0x288] sm:$0x1f]
  %v87 = vld [vmem:[%s1 + $0x290] sm:$0x1f]
  %s88 = scalar_lea.vmem %s1, 528
  %v89 = vld [vmem:[%s88] ss:$8 sm:$0x3]
  %s90 = scalar_lea.vmem %s1, 529
  %v91 = vld [vmem:[%s90] ss:$8 sm:$0x7]
  %s92 = scalar_lea.vmem %s1, 530
  %v93 = vld [vmem:[%s92] ss:$8 sm:$0x7]
  %s94 = scalar_lea.vmem %s1, 531
  %v95 = vld [vmem:[%s94] ss:$8 sm:$0x7]
  %v96 = vld [vmem:[%s1 + $0x214] ss:$0 sm:$0xff]
  %v97 = vld [vmem:[%s1 + $0x215] ss:$0 sm:$0xff]
  %v98 = vld [vmem:[%s1 + $0x216] ss:$0 sm:$0xff]
  %v99 = vld [vmem:[%s1 + $0x217] ss:$0 sm:$0xff]
  %v100 = vld [vmem:[%s1 + $0x228] ss:$0 sm:$0xff]
  %v101 = vld [vmem:[%s1 + $0x229] ss:$0 sm:$0xff]
  %v102 = vld [vmem:[%s1 + $0x22a] ss:$0 sm:$0xff]
  %v103 = vld [vmem:[%s1 + $0x22b] ss:$0 sm:$0xff]
  %v104 = vld [vmem:[%s1 + $0x22c] ss:$0 sm:$0xff]
  %v105 = vld [vmem:[%s2] sm:$0xff]
  %v106 = vld [vmem:[%s2 + $0x8] sm:$0xff]
  %v107 = vld [vmem:[%s2 + $0x10] sm:$0xff]
  %v108 = vld [vmem:[%s2 + $0x18] sm:$0xff]
  %v109 = vld [vmem:[%s2 + $0x20] sm:$0xff]
  %v110 = vld [vmem:[%s2 + $0x28] sm:$0xff]
  %v111 = vld [vmem:[%s2 + $0x30] sm:$0xff]
  %v112 = vld [vmem:[%s2 + $0x38] sm:$0xff]
  %v113 = vld [vmem:[%s2 + $0x40] sm:$0xff]
  %v114 = vld [vmem:[%s2 + $0x48] sm:$0xff]
  %v115 = vld [vmem:[%s2 + $0x50] sm:$0xff]
  %v116 = vld [vmem:[%s2 + $0x58] sm:$0xff]
  %v117 = vld [vmem:[%s2 + $0x60] sm:$0xff]
  %v118 = vld [vmem:[%s2 + $0x68] sm:$0xff]
  %v119 = vld [vmem:[%s2 + $0x70] sm:$0xff]
  %v120 = vld [vmem:[%s2 + $0x78] sm:$0xff]
  %v121 = vld [vmem:[%s2 + $0x80] sm:$0xff]
  %v122 = vld [vmem:[%s2 + $0x88] sm:$0xff]
  %v123 = vld [vmem:[%s2 + $0x90] sm:$0xff]
  %v124 = vld [vmem:[%s2 + $0x98] sm:$0xff]
  %v125 = vld [vmem:[%s2 + $0xa0] sm:$0xff]
  %v126 = vld [vmem:[%s2 + $0xa8] sm:$0xff]
  %v127 = vld [vmem:[%s2 + $0xb0] sm:$0xff]
  %v128 = vld [vmem:[%s2 + $0xb8] sm:$0xff]
  %v129 = vld [vmem:[%s2 + $0xc0] sm:$0xff]
  %v130 = vld [vmem:[%s2 + $0xc8] sm:$0xff]
  %v131 = vld [vmem:[%s2 + $0xd0] sm:$0xff]
  %v132 = vld [vmem:[%s2 + $0xd8] sm:$0xff]
  %v133 = vld [vmem:[%s2 + $0xe0] sm:$0xff]
  %v134 = vld [vmem:[%s2 + $0xe8] sm:$0xff]
  %v135 = vld [vmem:[%s2 + $0xf0] sm:$0xff]
  %v136 = vld [vmem:[%s2 + $0xf8] sm:$0xff]
  %v137 = vld [vmem:[%s2 + $0x100] sm:$0xff]
  %v138 = vld [vmem:[%s2 + $0x108] sm:$0xff]
  %v139 = vld [vmem:[%s2 + $0x110] sm:$0xff]
  %v140 = vld [vmem:[%s2 + $0x118] sm:$0xff]
  %v141 = vld [vmem:[%s2 + $0x120] sm:$0xff]
  %v142 = vld [vmem:[%s2 + $0x128] sm:$0xff]
  %v143 = vld [vmem:[%s2 + $0x130] sm:$0xff]
  %v144 = vld [vmem:[%s2 + $0x138] sm:$0xff]
  %v145 = vld [vmem:[%s2 + $0x180] sm:$0xff]
  %v146 = vld [vmem:[%s2 + $0x188] sm:$0x3]
  %v147 = vld [vmem:[%s2 + $0x190] sm:$0xff]
  %v148 = vld [vmem:[%s2 + $0x198] sm:$0xff]
  %v149 = vld [vmem:[%s2 + $0x1a0] sm:$0xff]
  %v150 = vld [vmem:[%s2 + $0x1a8] sm:$0xff]
  %v151 = vld [vmem:[%s2 + $0x1b0] sm:$0xff]
  %v152 = vld [vmem:[%s2 + $0x1b8] sm:$0xff]
  %v153 = vld [vmem:[%s2 + $0x1c0] sm:$0xff]
  %v154 = vld [vmem:[%s2 + $0x1c8] sm:$0xff]
  %v155 = vld [vmem:[%s2 + $0x1d0] sm:$0xff]
  %v156 = vld [vmem:[%s2 + $0x1d8] sm:$0xff]
  %v157 = vld [vmem:[%s2 + $0x1e0] sm:$0xff]
  %v158 = vld [vmem:[%s2 + $0x1e8] sm:$0xff]
  %v159 = vld [vmem:[%s2 + $0x1f0] sm:$0xff]
  %v160 = vld [vmem:[%s2 + $0x1f8] sm:$0xff]
  %v161 = vld [vmem:[%s2 + $0x200] sm:$0xff]
  %v162 = vld [vmem:[%s2 + $0x208] sm:$0xff]
  %v163 = vld [vmem:[%s2 + $0x210] sm:$0xff]
  %v164 = vld [vmem:[%s2 + $0x218] sm:$0xff]
  %v165 = vld [vmem:[%s2 + $0x220] sm:$0xff]
  %v166 = vld [vmem:[%s2 + $0x228] sm:$0xff]
  %v167 = vld [vmem:[%s2 + $0x230] sm:$0xff]
  %v168 = vld [vmem:[%s2 + $0x238] sm:$0xff]
  %v169 = vld [vmem:[%s2 + $0x240] sm:$0xff]
  %v170 = vld [vmem:[%s2 + $0x248] sm:$0xff]
  %v171 = vld [vmem:[%s2 + $0x250] sm:$0xff]
  %v172 = vld [vmem:[%s2 + $0x258] sm:$0xff]
  %v173 = vld [vmem:[%s2 + $0x260] sm:$0xff]
  %v174 = vld [vmem:[%s2 + $0x268] sm:$0xff]
  %v175 = vld [vmem:[%s2 + $0x270] sm:$0xff]
  %v176 = vld [vmem:[%s2 + $0x278] sm:$0xff]
  %v177 = vld [vmem:[%s2 + $0x280] sm:$0xff]
  %v178 = vld [vmem:[%s2 + $0x288] sm:$0xff]
  %v179 = vld [vmem:[%s2 + $0x290] sm:$0xff]
  %v180 = vld [vmem:[%s2 + $0x298] sm:$0xff]
  %v181 = vld [vmem:[%s2 + $0x2a0] sm:$0xff]
  %v182 = vld [vmem:[%s2 + $0x2a8] sm:$0xff]
  %v183 = vld [vmem:[%s2 + $0x2b0] sm:$0xff]
  %v184 = vld [vmem:[%s2 + $0x2b8] sm:$0xff]
  %v185 = vld [vmem:[%s2 + $0x2c0] sm:$0xff]
  %v186 = vld [vmem:[%s2 + $0x2c8] sm:$0xff]
  %v187 = vld [vmem:[%s2 + $0x2d0] sm:$0xff]
  %v188 = vld [vmem:[%s2 + $0x2d8] sm:$0xff]
  %v189 = vld [vmem:[%s2 + $0x2e0] sm:$0xff]
  %v190 = vld [vmem:[%s2 + $0x2e8] sm:$0xff]
  %v191 = vld [vmem:[%s2 + $0x2f0] sm:$0xff]
  %v192 = vld [vmem:[%s2 + $0x2f8] sm:$0xff]
  %v193 = vld [vmem:[%s2 + $0x300] sm:$0xff]
  %v194 = vld [vmem:[%s2 + $0x308] sm:$0xff]
  %v195 = vld [vmem:[%s2 + $0x310] sm:$0xff]
  %v196 = vld [vmem:[%s2 + $0x318] sm:$0xff]
  %v197 = vld [vmem:[%s2 + $0x320] sm:$0xff]
  %v198 = vld [vmem:[%s2 + $0x328] sm:$0xff]
  %v199 = vld [vmem:[%s2 + $0x330] sm:$0xff]
  %v200 = vld [vmem:[%s2 + $0x338] sm:$0xff]
  %v201 = vld [vmem:[%s2 + $0x340] sm:$0xff]
  %v202 = vld [vmem:[%s2 + $0x348] sm:$0xff]
  %v203 = vld [vmem:[%s2 + $0x350] sm:$0xff]
  %v204 = vld [vmem:[%s2 + $0x358] sm:$0xff]
  %v205 = vld [vmem:[%s2 + $0x360] sm:$0xff]
  %v206 = vld [vmem:[%s2 + $0x368] sm:$0xff]
  %v207 = vld [vmem:[%s2 + $0x370] sm:$0xff]
  %v208 = vld [vmem:[%s2 + $0x378] sm:$0xff]
  %v209 = vld [vmem:[%s2 + $0x380] sm:$0xff]
  %v210 = vld [vmem:[%s2 + $0x388] sm:$0xff]
  %v211 = vld [vmem:[%s2 + $0x390] sm:$0xff]
  %v212 = vld [vmem:[%s2 + $0x398] sm:$0xff]
  %v213 = vld [vmem:[%s2 + $0x3a0] sm:$0xff]
  %v214 = vld [vmem:[%s2 + $0x3a8] sm:$0xff]
  %v215 = vld [vmem:[%s2 + $0x3b0] sm:$0xff]
  %v216 = vld [vmem:[%s2 + $0x3b8] sm:$0xff]
  %v217 = vld [vmem:[%s2 + $0x3c0] sm:$0xff]
  %v218 = vld [vmem:[%s2 + $0x3c8] sm:$0xff]
  %v219 = vld [vmem:[%s2 + $0x3d0] sm:$0xff]
  %v220 = vld [vmem:[%s2 + $0x3d8] sm:$0xff]
  %v221 = vld [vmem:[%s2 + $0x3e0] sm:$0xff]
  %v222 = vld [vmem:[%s2 + $0x3e8] sm:$0xff]
  %v223 = vld [vmem:[%s2 + $0x3f0] sm:$0xff]
  %v224 = vld [vmem:[%s2 + $0x3f8] sm:$0xff]
  %v225 = vld [vmem:[%s2 + $0x400] sm:$0xff]
  %v226 = vld [vmem:[%s2 + $0x408] sm:$0xff]
  %v227 = vld [vmem:[%s2 + $0x410] sm:$0xff]
  %v228 = vld [vmem:[%s2 + $0x418] sm:$0xff]
  %v229 = vld [vmem:[%s2 + $0x420] sm:$0xff]
  %v230 = vld [vmem:[%s2 + $0x428] sm:$0xff]
  %v231 = vld [vmem:[%s0] sm:$0xff]
  %v232 = vlaneseq
  %v233 = vand.u32 %v232, 127
  %v234 = vadd.s32 %v233, 128
  %vm235 = vcmp.lt.s32.totalorder %v233, 96
  %vm236 = vcmp.lt.s32.totalorder %v234, 96
  %v237 = vsel %vm235, 1, 0
  %v238 = vsel %vm236, 1, 0
  %v239 = vcvt.s32.f32 %v237
  %v240 = vcvt.s32.f32 %v238
  %v241 = vsub.f32 1.0, %v239
  %v242 = vsub.f32 1.0, %v240
  %v244 = vlaneseq
  %v245 = vshrl.u32 %v244, 7
  %v246 = vsub.s32 0, %v245
  %v247 = vrot.slane %v89, %v246
  %v248 = vlaneseq
  %v249 = vshrl.u32 %v248, 7
  %v250 = vsub.s32 1, %v249
  %v251 = vrot.slane %v89, %v250
  %vm254 = vcmask 23552
  %v256 = vsel %vm254, %v231, 0
  %vm258 = vcmask 1042432
  %v260 = vsel %vm258, %v80, 0
  %v263 = vsel %vm258, %v81, 0
  %265 = vmatprep.subr.mxu0 0.0
  %266 = vmatpush1.msra.mxu0 0.0
  %267 = vmatprep.subr.mxu0 0.0
  %268 = vmatpush1.msra.mxu0 0.0
  %269 = vmatprep.subr.mxu0 0.0
  %270 = vmatpush1.msra.mxu0 0.0
  %271 = vmatprep.subr.mxu0 0.0
  %272 = vmatpush1.msra.mxu0 0.0
  %273 = vmatprep.subr.mxu0 0.0
  %274 = vmatpush1.msra.mxu0 0.0
  %275 = vmatprep.subr.mxu0 0.0
  %276 = vmatpush1.msra.mxu0 0.0
  %277 = vmatprep.subr.mxu0 0.0
  %278 = vmatpush1.msra.mxu0 0.0
  %279 = vmatprep.subr.mxu0 0.0
  %280 = vmatpush1.msra.mxu0 0.0
  %281 = vmatprep.subr.mxu0 0.0
  %282 = vmatpush1.msra.mxu0 0.0
  %283 = vmatprep.subr.mxu0 0.0
  %284 = vmatpush1.msra.mxu0 0.0
  %285 = vmatprep.subr.mxu0 0.0
  %286 = vmatpush1.msra.mxu0 0.0
  %287 = vmatprep.subr.mxu0 0.0
  %288 = vmatpush1.msra.mxu0 0.0
  %289 = vmatprep.subr.mxu0 0.0
  %290 = vmatpush1.msra.mxu0 0.0
  %291 = vmatprep.subr.mxu0 0.0
  %292 = vmatpush1.msra.mxu0 0.0
  %293 = vmatprep.subr.mxu0 0.0
  %294 = vmatpush1.msra.mxu0 0.0
  %295 = vmatprep.subr.mxu0 %v263
  %296 = vmatpush1.msra.mxu0 %v260
  %297 = vmatprep.subr.mxu0 0.0
  %298 = vmatpush2.msra.mxu0 0.0
  %299 = vmatprep.subr.mxu0 0.0
  %300 = vmatpush2.msra.mxu0 0.0
  %301 = vmatprep.subr.mxu0 0.0
  %302 = vmatpush2.msra.mxu0 0.0
  %303 = vmatprep.subr.mxu0 0.0
  %304 = vmatpush2.msra.mxu0 0.0
  %305 = vmatprep.subr.mxu0 0.0
  %306 = vmatpush2.msra.mxu0 0.0
  %307 = vmatprep.subr.mxu0 0.0
  %308 = vmatpush2.msra.mxu0 0.0
  %309 = vmatprep.subr.mxu0 0.0
  %310 = vmatpush2.msra.mxu0 0.0
  %311 = vmatprep.subr.mxu0 0.0
  %312 = vmatpush2.msra.mxu0 0.0
  %313 = vmatprep.subr.mxu0 0.0
  %314 = vmatpush2.msra.mxu0 0.0
  %315 = vmatprep.subr.mxu0 0.0
  %316 = vmatpush2.msra.mxu0 0.0
  %317 = vmatprep.subr.mxu0 0.0
  %318 = vmatpush2.msra.mxu0 0.0
  %319 = vmatprep.subr.mxu0 0.0
  %320 = vmatpush2.msra.mxu0 0.0
  %321 = vmatprep.subr.mxu0 0.0
  %322 = vmatpush2.msra.mxu0 0.0
  %323 = vmatprep.subr.mxu0 0.0
  %324 = vmatpush2.msra.mxu0 0.0
  %325 = vmatprep.subr.mxu0 0.0
  %326 = vmatpush2.msra.mxu0 0.0
  %327 = vmatprep.subr.mxu0 0.0
  %328 = vmatpush2.msra.mxu0 0.0
  %329 = vmatprep.mubr.f32.mxu0 0.0
  %330 = vmatmul.mubr.f32.gmra.mxu0 %v256
  %v331 = vpop.f32.mrf.mxu0
  %v332 = vadd.f32 %v247, %v331
  %v333 = vpop.f32.mrf.mxu0
  %v334 = vadd.f32 %v251, %v333
  %335 = vdwg.mxu0
  %v336 = vmax.f32 %v332, 0.0
  %v337 = vmax.f32 %v334, 0.0
  %vm338 = vcmask 261120
  %v339 = vsel %vm338, %v337, 0.0
  %v340 = vadd.f32 %v336, %v339
  %341 = vadd.xlane.f32.xlu0 %v340
  %v342 = vpop.xlane.xlu0 %341
  %v343 = vrot.slane %v342, 4
  %v344 = vadd.f32 %v342, %v343
  %v345 = vrot.slane %v344, 2
  %v346 = vadd.f32 %v344, %v345
  %v347 = vrot.slane %v346, 1
  %v348 = vadd.f32 %v346, %v347
  %s349 = vtos %v348
  %s350 = smul.f32 %s349, 0.0013020834
  %v351 = vmul.f32 %v336, %v336
  %v352 = vmul.f32 %v337, %v337
  %v353 = vsel %vm338, %v352, 0.0
  %v354 = vadd.f32 %v351, %v353
  %355 = vadd.xlane.f32.xlu0 %v354
  %v356 = vpop.xlane.xlu0 %355
  %v357 = vrot.slane %v356, 4
  %v358 = vadd.f32 %v356, %v357
  %v359 = vrot.slane %v358, 2
  %v360 = vadd.f32 %v358, %v359
  %v361 = vrot.slane %v360, 1
  %v362 = vadd.f32 %v360, %v361
  %s363 = vtos %v362
  %s364 = smul.f32 %s363, 0.0013020834
  %s365 = smul.f32 %s350, %s350
  %s366 = ssub.f32 %s364, %s365
  %s367 = smax.f32 %s366, 0.0
  %v368 = vstv %s350
  %v369 = vsub.f32 %v336, %v368
  %v370 = vsub.f32 %v337, %v368
  %s371 = sadd.f32 %s367, 1e-05
  %v372 = vstv %s371
  %v373 = vrsqrt.pop %v372
  %s374 = vtos %v373
  %v375 = vstv %s374
  %v376 = vmul.f32 %v369, %v375
  %v377 = vmul.f32 %v370, %v375
  %v378 = vmul.f32 %v376, %v239
  %v379 = vmul.f32 %v377, %v240
  %v380 = vcvt.f32.s32.to.zero.pseudo %v231
  %381 = vset.pattern.permute.xlu0 3
  %382 = vperm.xlu0 %381, %v380
  %v383 = vpop.permute.xlu0 %382
  %vm384 = vcmp.eq.s32.totalorder %v233, %v383
  %v385 = vsel %vm384, 1, 0
  %v386 = vcvt.s32.f32 %v385
  %v387 = vadd.f32 %v386, 0.0
  %v388 = vadd.s32 %v380, 5
  %389 = vset.pattern.permute.xlu0 4
  %390 = vperm.xlu0 %389, %v388
  %v391 = vpop.permute.xlu0 %390
  %vm392 = vcmp.eq.s32.totalorder %v233, %v391
  %v393 = vsel %vm392, 1, 0
  %v394 = vcvt.s32.f32 %v393
  %v395 = vadd.f32 %v387, %v394
  %vm396 = vcmask 97280
  %v398 = vsel %vm396, %v395, 0
  %vm400 = vcmask 1043456
  %v402 = vsel %vm400, %v84, 0
  %v405 = vsel %vm400, %v85, 0
  %407 = vmatprep.subr.mxu0 0.0
  %408 = vmatpush1.msra.mxu0 0.0
  %409 = vmatprep.subr.mxu0 0.0
  %410 = vmatpush1.msra.mxu0 0.0
  %411 = vmatprep.subr.mxu0 0.0
  %412 = vmatpush1.msra.mxu0 0.0
  %413 = vmatprep.subr.mxu0 0.0
  %414 = vmatpush1.msra.mxu0 0.0
  %415 = vmatprep.subr.mxu0 0.0
  %416 = vmatpush1.msra.mxu0 0.0
  %417 = vmatprep.subr.mxu0 0.0
  %418 = vmatpush1.msra.mxu0 0.0
  %419 = vmatprep.subr.mxu0 0.0
  %420 = vmatpush1.msra.mxu0 0.0
  %421 = vmatprep.subr.mxu0 0.0
  %422 = vmatpush1.msra.mxu0 0.0
  %423 = vmatprep.subr.mxu0 0.0
  %424 = vmatpush1.msra.mxu0 0.0
  %425 = vmatprep.subr.mxu0 0.0
  %426 = vmatpush1.msra.mxu0 0.0
  %427 = vmatprep.subr.mxu0 0.0
  %428 = vmatpush1.msra.mxu0 0.0
  %429 = vmatprep.subr.mxu0 0.0
  %430 = vmatpush1.msra.mxu0 0.0
  %431 = vmatprep.subr.mxu0 0.0
  %432 = vmatpush1.msra.mxu0 0.0
  %433 = vmatprep.subr.mxu0 0.0
  %434 = vmatpush1.msra.mxu0 0.0
  %435 = vmatprep.subr.mxu0 %v405
  %436 = vmatpush1.msra.mxu0 %v402
  %437 = vmatprep.subr.mxu0 %v83
  %438 = vmatpush1.msra.mxu0 %v82
  %439 = vmatprep.subr.mxu0 0.0
  %440 = vmatpush2.msra.mxu0 0.0
  %441 = vmatprep.subr.mxu0 0.0
  %442 = vmatpush2.msra.mxu0 0.0
  %443 = vmatprep.subr.mxu0 0.0
  %444 = vmatpush2.msra.mxu0 0.0
  %445 = vmatprep.subr.mxu0 0.0
  %446 = vmatpush2.msra.mxu0 0.0
  %447 = vmatprep.subr.mxu0 0.0
  %448 = vmatpush2.msra.mxu0 0.0
  %449 = vmatprep.subr.mxu0 0.0
  %450 = vmatpush2.msra.mxu0 0.0
  %451 = vmatprep.subr.mxu0 0.0
  %452 = vmatpush2.msra.mxu0 0.0
  %453 = vmatprep.subr.mxu0 0.0
  %454 = vmatpush2.msra.mxu0 0.0
  %455 = vmatprep.subr.mxu0 0.0
  %456 = vmatpush2.msra.mxu0 0.0
  %457 = vmatprep.subr.mxu0 0.0
  %458 = vmatpush2.msra.mxu0 0.0
  %459 = vmatprep.subr.mxu0 0.0
  %460 = vmatpush2.msra.mxu0 0.0
  %461 = vmatprep.subr.mxu0 0.0
  %462 = vmatpush2.msra.mxu0 0.0
  %463 = vmatprep.subr.mxu0 0.0
  %464 = vmatpush2.msra.mxu0 0.0
  %465 = vmatprep.subr.mxu0 0.0
  %466 = vmatpush2.msra.mxu0 0.0
  %467 = vmatprep.subr.mxu0 0.0
  %468 = vmatpush2.msra.mxu0 0.0
  %469 = vmatprep.subr.mxu0 0.0
  %470 = vmatpush2.msra.mxu0 0.0
  %471 = vmatprep.mubr.f32.mxu0 0.0
  %472 = vmatmul.mubr.f32.gmra.mxu0 %v398
  %v473 = vpop.f32.mrf.mxu0
  %v474 = vadd.f32 0.0, %v473
  %v475 = vpop.f32.mrf.mxu0
  %v476 = vadd.f32 0.0, %v475
  %477 = vdwg.mxu0
  %v478 = vsel %vm338, %v476, 0.0
  %v479 = vadd.f32 %v474, %v478
  %480 = vadd.xlane.f32.xlu0 %v479
  %v481 = vpop.xlane.xlu0 %480
  %v482 = vrot.slane %v481, 4
  %v483 = vadd.f32 %v481, %v482
  %v484 = vrot.slane %v483, 2
  %v485 = vadd.f32 %v483, %v484
  %v486 = vrot.slane %v485, 1
  %v487 = vadd.f32 %v485, %v486
  %s488 = vtos %v487
  %s489 = smul.f32 %s488, 0.001953125
  %v490 = vmul.f32 %v474, %v474
  %v491 = vmul.f32 %v476, %v476
  %v492 = vsel %vm338, %v491, 0.0
  %v493 = vadd.f32 %v490, %v492
  %494 = vadd.xlane.f32.xlu0 %v493
  %v495 = vpop.xlane.xlu0 %494
  %v496 = vrot.slane %v495, 4
  %v497 = vadd.f32 %v495, %v496
  %v498 = vrot.slane %v497, 2
  %v499 = vadd.f32 %v497, %v498
  %v500 = vrot.slane %v499, 1
  %v501 = vadd.f32 %v499, %v500
  %s502 = vtos %v501
  %s503 = smul.f32 %s502, 0.001953125
  %s504 = smul.f32 %s489, %s489
  %s505 = ssub.f32 %s503, %s504
  %s506 = smax.f32 %s505, 0.0
  %v507 = vstv %s489
  %v508 = vsub.f32 %v474, %v507
  %v509 = vsub.f32 %v476, %v507
  %s510 = sadd.f32 %s506, 1e-05
  %v511 = vstv %s510
  %v512 = vrsqrt.pop %v511
  %s513 = vtos %v512
  %v514 = vstv %s513
  %v515 = vmul.f32 %v508, %v514
  %v516 = vmul.f32 %v509, %v514
  %v517 = vmul.f32 %v515, %v241
  %v518 = vmul.f32 %v516, %v242
  %v519 = vadd.f32 %v378, %v517
  %v520 = vadd.f32 %v379, %v518
  %v522 = vlaneseq
  %v523 = vshrl.u32 %v522, 7
  %v524 = vsub.s32 0, %v523
  %v525 = vrot.slane %v91, %v524
  %v526 = vlaneseq
  %v527 = vshrl.u32 %v526, 7
  %v528 = vsub.s32 1, %v527
  %v529 = vrot.slane %v91, %v528
  %v530 = vlaneseq
  %v531 = vshrl.u32 %v530, 7
  %v532 = vsub.s32 2, %v531
  %v533 = vrot.slane %v91, %v532
  %v538 = vsel %vm338, %v520, 0
  %540 = vmatprep.subr.mxu0 %v60
  %541 = vmatpush1.msra.mxu0 %v59
  %542 = vmatprep.subr.mxu0 %v57
  %543 = vmatpush1.msra.mxu0 %v56
  %544 = vmatprep.subr.mxu0 %v54
  %545 = vmatpush1.msra.mxu0 %v53
  %546 = vmatprep.subr.mxu0 %v51
  %547 = vmatpush1.msra.mxu0 %v50
  %548 = vmatprep.subr.mxu0 %v48
  %549 = vmatpush1.msra.mxu0 %v47
  %550 = vmatprep.subr.mxu0 %v45
  %551 = vmatpush1.msra.mxu0 %v44
  %552 = vmatprep.subr.mxu0 %v42
  %553 = vmatpush1.msra.mxu0 %v41
  %554 = vmatprep.subr.mxu0 %v39
  %555 = vmatpush1.msra.mxu0 %v38
  %556 = vmatprep.subr.mxu0 %v36
  %557 = vmatpush1.msra.mxu0 %v35
  %558 = vmatprep.subr.mxu0 %v33
  %559 = vmatpush1.msra.mxu0 %v32
  %560 = vmatprep.subr.mxu0 %v30
  %561 = vmatpush1.msra.mxu0 %v29
  %562 = vmatprep.subr.mxu0 %v27
  %563 = vmatpush1.msra.mxu0 %v26
  %564 = vmatprep.subr.mxu0 %v24
  %565 = vmatpush1.msra.mxu0 %v23
  %566 = vmatprep.subr.mxu0 %v21
  %567 = vmatpush1.msra.mxu0 %v20
  %568 = vmatprep.subr.mxu0 %v18
  %569 = vmatpush1.msra.mxu0 %v17
  %570 = vmatprep.subr.mxu0 %v15
  %571 = vmatpush1.msra.mxu0 %v14
  %572 = vmatprep.subr.mxu0 0.0
  %573 = vmatpush2.msra.mxu0 0.0
  %574 = vmatprep.subr.mxu0 0.0
  %575 = vmatpush2.msra.mxu0 0.0
  %576 = vmatprep.subr.mxu0 0.0
  %577 = vmatpush2.msra.mxu0 0.0
  %578 = vmatprep.subr.mxu0 0.0
  %579 = vmatpush2.msra.mxu0 0.0
  %580 = vmatprep.subr.mxu0 0.0
  %581 = vmatpush2.msra.mxu0 0.0
  %582 = vmatprep.subr.mxu0 0.0
  %583 = vmatpush2.msra.mxu0 0.0
  %584 = vmatprep.subr.mxu0 0.0
  %585 = vmatpush2.msra.mxu0 0.0
  %586 = vmatprep.subr.mxu0 0.0
  %587 = vmatpush2.msra.mxu0 0.0
  %588 = vmatprep.subr.mxu0 0.0
  %589 = vmatpush2.msra.mxu0 0.0
  %590 = vmatprep.subr.mxu0 0.0
  %591 = vmatpush2.msra.mxu0 0.0
  %592 = vmatprep.subr.mxu0 0.0
  %593 = vmatpush2.msra.mxu0 0.0
  %594 = vmatprep.subr.mxu0 0.0
  %595 = vmatpush2.msra.mxu0 0.0
  %596 = vmatprep.subr.mxu0 %v72
  %597 = vmatpush2.msra.mxu0 %v71
  %598 = vmatprep.subr.mxu0 %v69
  %599 = vmatpush2.msra.mxu0 %v68
  %600 = vmatprep.subr.mxu0 %v66
  %601 = vmatpush2.msra.mxu0 %v65
  %602 = vmatprep.subr.mxu0 %v63
  %603 = vmatpush2.msra.mxu0 %v62
  %604 = vmatprep.mubr.f32.mxu0 %v538
  %605 = vmatmul.mubr.f32.gmra.mxu0 %v519
  %v606 = vpop.f32.mrf.mxu0
  %v607 = vadd.f32 %v525, %v606
  %v608 = vpop.f32.mrf.mxu0
  %v609 = vadd.f32 %v529, %v608
  %610 = vdwg.mxu0
  %611 = vmatprep.subr.mxu0 0.0
  %612 = vmatpush1.msra.mxu0 %v61
  %613 = vmatprep.subr.mxu0 0.0
  %614 = vmatpush1.msra.mxu0 %v58
  %615 = vmatprep.subr.mxu0 0.0
  %616 = vmatpush1.msra.mxu0 %v55
  %617 = vmatprep.subr.mxu0 0.0
  %618 = vmatpush1.msra.mxu0 %v52
  %619 = vmatprep.subr.mxu0 0.0
  %620 = vmatpush1.msra.mxu0 %v49
  %621 = vmatprep.subr.mxu0 0.0
  %622 = vmatpush1.msra.mxu0 %v46
  %623 = vmatprep.subr.mxu0 0.0
  %624 = vmatpush1.msra.mxu0 %v43
  %625 = vmatprep.subr.mxu0 0.0
  %626 = vmatpush1.msra.mxu0 %v40
  %627 = vmatprep.subr.mxu0 0.0
  %628 = vmatpush1.msra.mxu0 %v37
  %629 = vmatprep.subr.mxu0 0.0
  %630 = vmatpush1.msra.mxu0 %v34
  %631 = vmatprep.subr.mxu0 0.0
  %632 = vmatpush1.msra.mxu0 %v31
  %633 = vmatprep.subr.mxu0 0.0
  %634 = vmatpush1.msra.mxu0 %v28
  %635 = vmatprep.subr.mxu0 0.0
  %636 = vmatpush1.msra.mxu0 %v25
  %637 = vmatprep.subr.mxu0 0.0
  %638 = vmatpush1.msra.mxu0 %v22
  %639 = vmatprep.subr.mxu0 0.0
  %640 = vmatpush1.msra.mxu0 %v19
  %641 = vmatprep.subr.mxu0 0.0
  %642 = vmatpush1.msra.mxu0 %v16
  %643 = vmatprep.subr.mxu0 0.0
  %644 = vmatpush2.msra.mxu0 0.0
  %645 = vmatprep.subr.mxu0 0.0
  %646 = vmatpush2.msra.mxu0 0.0
  %647 = vmatprep.subr.mxu0 0.0
  %648 = vmatpush2.msra.mxu0 0.0
  %649 = vmatprep.subr.mxu0 0.0
  %650 = vmatpush2.msra.mxu0 0.0
  %651 = vmatprep.subr.mxu0 0.0
  %652 = vmatpush2.msra.mxu0 0.0
  %653 = vmatprep.subr.mxu0 0.0
  %654 = vmatpush2.msra.mxu0 0.0
  %655 = vmatprep.subr.mxu0 0.0
  %656 = vmatpush2.msra.mxu0 0.0
  %657 = vmatprep.subr.mxu0 0.0
  %658 = vmatpush2.msra.mxu0 0.0
  %659 = vmatprep.subr.mxu0 0.0
  %660 = vmatpush2.msra.mxu0 0.0
  %661 = vmatprep.subr.mxu0 0.0
  %662 = vmatpush2.msra.mxu0 0.0
  %663 = vmatprep.subr.mxu0 0.0
  %664 = vmatpush2.msra.mxu0 0.0
  %665 = vmatprep.subr.mxu0 0.0
  %666 = vmatpush2.msra.mxu0 0.0
  %667 = vmatprep.subr.mxu0 0.0
  %668 = vmatpush2.msra.mxu0 %v73
  %669 = vmatprep.subr.mxu0 0.0
  %670 = vmatpush2.msra.mxu0 %v70
  %671 = vmatprep.subr.mxu0 0.0
  %672 = vmatpush2.msra.mxu0 %v67
  %673 = vmatprep.subr.mxu0 0.0
  %674 = vmatpush2.msra.mxu0 %v64
  %675 = vmatprep.mubr.f32.mxu0 %v538
  %676 = vmatmul.mubr.f32.gmra.mxu0 %v519
  %v677 = vpop.f32.mrf.mxu0
  %v678 = vadd.f32 %v533, %v677
  %v679 = vpop.f32.mrf.mxu0
  %680 = vdwg.mxu0
  %v681 = vmax.f32 %v607, 0.0
  %v682 = vmax.f32 %v609, 0.0
  %v683 = vmax.f32 %v678, 0.0
  %vm684 = vcmask 523264
  %v686 = vsel %vm684, %v683, 0
  %688 = vmatprep.subr.mxu0 0.0
  %689 = vmatpush1.msra.mxu0 %v206
  %690 = vmatprep.subr.mxu0 0.0
  %691 = vmatpush1.msra.mxu0 %v205
  %692 = vmatprep.subr.mxu0 0.0
  %693 = vmatpush1.msra.mxu0 %v204
  %694 = vmatprep.subr.mxu0 0.0
  %695 = vmatpush1.msra.mxu0 %v203
  %696 = vmatprep.subr.mxu0 0.0
  %697 = vmatpush1.msra.mxu0 %v202
  %698 = vmatprep.subr.mxu0 0.0
  %699 = vmatpush1.msra.mxu0 %v201
  %700 = vmatprep.subr.mxu0 0.0
  %701 = vmatpush1.msra.mxu0 %v200
  %702 = vmatprep.subr.mxu0 0.0
  %703 = vmatpush1.msra.mxu0 %v199
  %704 = vmatprep.subr.mxu0 0.0
  %705 = vmatpush1.msra.mxu0 %v198
  %706 = vmatprep.subr.mxu0 0.0
  %707 = vmatpush1.msra.mxu0 %v197
  %708 = vmatprep.subr.mxu0 0.0
  %709 = vmatpush1.msra.mxu0 %v196
  %710 = vmatprep.subr.mxu0 0.0
  %711 = vmatpush1.msra.mxu0 %v195
  %712 = vmatprep.subr.mxu0 0.0
  %713 = vmatpush1.msra.mxu0 %v194
  %714 = vmatprep.subr.mxu0 0.0
  %715 = vmatpush1.msra.mxu0 %v193
  %716 = vmatprep.subr.mxu0 0.0
  %717 = vmatpush1.msra.mxu0 %v192
  %718 = vmatprep.subr.mxu0 0.0
  %719 = vmatpush1.msra.mxu0 %v191
  %720 = vmatprep.subr.mxu0 0.0
  %721 = vmatpush2.msra.mxu0 %v222
  %722 = vmatprep.subr.mxu0 0.0
  %723 = vmatpush2.msra.mxu0 %v221
  %724 = vmatprep.subr.mxu0 0.0
  %725 = vmatpush2.msra.mxu0 %v220
  %726 = vmatprep.subr.mxu0 0.0
  %727 = vmatpush2.msra.mxu0 %v219
  %728 = vmatprep.subr.mxu0 0.0
  %729 = vmatpush2.msra.mxu0 %v218
  %730 = vmatprep.subr.mxu0 0.0
  %731 = vmatpush2.msra.mxu0 %v217
  %732 = vmatprep.subr.mxu0 0.0
  %733 = vmatpush2.msra.mxu0 %v216
  %734 = vmatprep.subr.mxu0 0.0
  %735 = vmatpush2.msra.mxu0 %v215
  %736 = vmatprep.subr.mxu0 0.0
  %737 = vmatpush2.msra.mxu0 %v214
  %738 = vmatprep.subr.mxu0 0.0
  %739 = vmatpush2.msra.mxu0 %v213
  %740 = vmatprep.subr.mxu0 0.0
  %741 = vmatpush2.msra.mxu0 %v212
  %742 = vmatprep.subr.mxu0 0.0
  %743 = vmatpush2.msra.mxu0 %v211
  %744 = vmatprep.subr.mxu0 0.0
  %745 = vmatpush2.msra.mxu0 %v210
  %746 = vmatprep.subr.mxu0 0.0
  %747 = vmatpush2.msra.mxu0 %v209
  %748 = vmatprep.subr.mxu0 0.0
  %749 = vmatpush2.msra.mxu0 %v208
  %750 = vmatprep.subr.mxu0 0.0
  %751 = vmatpush2.msra.mxu0 %v207
  %752 = vmatprep.mubr.f32.mxu0 %v682
  %753 = vmatmul.mubr.f32.gmra.mxu0 %v681
  %v754 = vpop.f32.mrf.mxu0
  %v755 = vadd.f32 0.0, %v754
  %v756 = vpop.f32.mrf.mxu0
  %757 = vdwg.mxu0
  %758 = vmatprep.subr.mxu0 0.0
  %759 = vmatpush1.msra.mxu0 0.0
  %760 = vmatprep.subr.mxu0 0.0
  %761 = vmatpush1.msra.mxu0 0.0
  %762 = vmatprep.subr.mxu0 0.0
  %763 = vmatpush1.msra.mxu0 0.0
  %764 = vmatprep.subr.mxu0 0.0
  %765 = vmatpush1.msra.mxu0 0.0
  %766 = vmatprep.subr.mxu0 0.0
  %767 = vmatpush1.msra.mxu0 0.0
  %768 = vmatprep.subr.mxu0 0.0
  %769 = vmatpush1.msra.mxu0 0.0
  %770 = vmatprep.subr.mxu0 0.0
  %771 = vmatpush1.msra.mxu0 0.0
  %772 = vmatprep.subr.mxu0 0.0
  %773 = vmatpush1.msra.mxu0 0.0
  %774 = vmatprep.subr.mxu0 0.0
  %775 = vmatpush1.msra.mxu0 %v230
  %776 = vmatprep.subr.mxu0 0.0
  %777 = vmatpush1.msra.mxu0 %v229
  %778 = vmatprep.subr.mxu0 0.0
  %779 = vmatpush1.msra.mxu0 %v228
  %780 = vmatprep.subr.mxu0 0.0
  %781 = vmatpush1.msra.mxu0 %v227
  %782 = vmatprep.subr.mxu0 0.0
  %783 = vmatpush1.msra.mxu0 %v226
  %784 = vmatprep.subr.mxu0 0.0
  %785 = vmatpush1.msra.mxu0 %v225
  %786 = vmatprep.subr.mxu0 0.0
  %787 = vmatpush1.msra.mxu0 %v224
  %788 = vmatprep.subr.mxu0 0.0
  %789 = vmatpush1.msra.mxu0 %v223
  %790 = vmatprep.subr.mxu0 0.0
  %791 = vmatpush2.msra.mxu0 0.0
  %792 = vmatprep.subr.mxu0 0.0
  %793 = vmatpush2.msra.mxu0 0.0
  %794 = vmatprep.subr.mxu0 0.0
  %795 = vmatpush2.msra.mxu0 0.0
  %796 = vmatprep.subr.mxu0 0.0
  %797 = vmatpush2.msra.mxu0 0.0
  %798 = vmatprep.subr.mxu0 0.0
  %799 = vmatpush2.msra.mxu0 0.0
  %800 = vmatprep.subr.mxu0 0.0
  %801 = vmatpush2.msra.mxu0 0.0
  %802 = vmatprep.subr.mxu0 0.0
  %803 = vmatpush2.msra.mxu0 0.0
  %804 = vmatprep.subr.mxu0 0.0
  %805 = vmatpush2.msra.mxu0 0.0
  %806 = vmatprep.subr.mxu0 0.0
  %807 = vmatpush2.msra.mxu0 0.0
  %808 = vmatprep.subr.mxu0 0.0
  %809 = vmatpush2.msra.mxu0 0.0
  %810 = vmatprep.subr.mxu0 0.0
  %811 = vmatpush2.msra.mxu0 0.0
  %812 = vmatprep.subr.mxu0 0.0
  %813 = vmatpush2.msra.mxu0 0.0
  %814 = vmatprep.subr.mxu0 0.0
  %815 = vmatpush2.msra.mxu0 0.0
  %816 = vmatprep.subr.mxu0 0.0
  %817 = vmatpush2.msra.mxu0 0.0
  %818 = vmatprep.subr.mxu0 0.0
  %819 = vmatpush2.msra.mxu0 0.0
  %820 = vmatprep.subr.mxu0 0.0
  %821 = vmatpush2.msra.mxu0 0.0
  %822 = vmatprep.mubr.f32.mxu0 0.0
  %823 = vmatmul.mubr.f32.gmra.mxu0 %v686
  %v824 = vpop.f32.mrf.mxu0
  %v825 = vadd.f32 %v755, %v824
  %v826 = vpop.f32.mrf.mxu0
  %827 = vdwg.mxu0
  %v828 = vmul.f32 %v681, %v681
  %v829 = vmul.f32 %v682, %v682
  %v830 = vmul.f32 %v683, %v683
  %v832 = vsel %vm684, %v830, 0
  %834 = vmatprep.subr.mxu0 0.0
  %835 = vmatpush1.msra.mxu0 %v206
  %836 = vmatprep.subr.mxu0 0.0
  %837 = vmatpush1.msra.mxu0 %v205
  %838 = vmatprep.subr.mxu0 0.0
  %839 = vmatpush1.msra.mxu0 %v204
  %840 = vmatprep.subr.mxu0 0.0
  %841 = vmatpush1.msra.mxu0 %v203
  %842 = vmatprep.subr.mxu0 0.0
  %843 = vmatpush1.msra.mxu0 %v202
  %844 = vmatprep.subr.mxu0 0.0
  %845 = vmatpush1.msra.mxu0 %v201
  %846 = vmatprep.subr.mxu0 0.0
  %847 = vmatpush1.msra.mxu0 %v200
  %848 = vmatprep.subr.mxu0 0.0
  %849 = vmatpush1.msra.mxu0 %v199
  %850 = vmatprep.subr.mxu0 0.0
  %851 = vmatpush1.msra.mxu0 %v198
  %852 = vmatprep.subr.mxu0 0.0
  %853 = vmatpush1.msra.mxu0 %v197
  %854 = vmatprep.subr.mxu0 0.0
  %855 = vmatpush1.msra.mxu0 %v196
  %856 = vmatprep.subr.mxu0 0.0
  %857 = vmatpush1.msra.mxu0 %v195
  %858 = vmatprep.subr.mxu0 0.0
  %859 = vmatpush1.msra.mxu0 %v194
  %860 = vmatprep.subr.mxu0 0.0
  %861 = vmatpush1.msra.mxu0 %v193
  %862 = vmatprep.subr.mxu0 0.0
  %863 = vmatpush1.msra.mxu0 %v192
  %864 = vmatprep.subr.mxu0 0.0
  %865 = vmatpush1.msra.mxu0 %v191
  %866 = vmatprep.subr.mxu0 0.0
  %867 = vmatpush2.msra.mxu0 %v222
  %868 = vmatprep.subr.mxu0 0.0
  %869 = vmatpush2.msra.mxu0 %v221
  %870 = vmatprep.subr.mxu0 0.0
  %871 = vmatpush2.msra.mxu0 %v220
  %872 = vmatprep.subr.mxu0 0.0
  %873 = vmatpush2.msra.mxu0 %v219
  %874 = vmatprep.subr.mxu0 0.0
  %875 = vmatpush2.msra.mxu0 %v218
  %876 = vmatprep.subr.mxu0 0.0
  %877 = vmatpush2.msra.mxu0 %v217
  %878 = vmatprep.subr.mxu0 0.0
  %879 = vmatpush2.msra.mxu0 %v216
  %880 = vmatprep.subr.mxu0 0.0
  %881 = vmatpush2.msra.mxu0 %v215
  %882 = vmatprep.subr.mxu0 0.0
  %883 = vmatpush2.msra.mxu0 %v214
  %884 = vmatprep.subr.mxu0 0.0
  %885 = vmatpush2.msra.mxu0 %v213
  %886 = vmatprep.subr.mxu0 0.0
  %887 = vmatpush2.msra.mxu0 %v212
  %888 = vmatprep.subr.mxu0 0.0
  %889 = vmatpush2.msra.mxu0 %v211
  %890 = vmatprep.subr.mxu0 0.0
  %891 = vmatpush2.msra.mxu0 %v210
  %892 = vmatprep.subr.mxu0 0.0
  %893 = vmatpush2.msra.mxu0 %v209
  %894 = vmatprep.subr.mxu0 0.0
  %895 = vmatpush2.msra.mxu0 %v208
  %896 = vmatprep.subr.mxu0 0.0
  %897 = vmatpush2.msra.mxu0 %v207
  %898 = vmatprep.mubr.f32.mxu0 %v829
  %899 = vmatmul.mubr.f32.gmra.mxu0 %v828
  %v900 = vpop.f32.mrf.mxu0
  %v901 = vadd.f32 0.0, %v900
  %v902 = vpop.f32.mrf.mxu0
  %903 = vdwg.mxu0
  %904 = vmatprep.subr.mxu0 0.0
  %905 = vmatpush1.msra.mxu0 0.0
  %906 = vmatprep.subr.mxu0 0.0
  %907 = vmatpush1.msra.mxu0 0.0
  %908 = vmatprep.subr.mxu0 0.0
  %909 = vmatpush1.msra.mxu0 0.0
  %910 = vmatprep.subr.mxu0 0.0
  %911 = vmatpush1.msra.mxu0 0.0
  %912 = vmatprep.subr.mxu0 0.0
  %913 = vmatpush1.msra.mxu0 0.0
  %914 = vmatprep.subr.mxu0 0.0
  %915 = vmatpush1.msra.mxu0 0.0
  %916 = vmatprep.subr.mxu0 0.0
  %917 = vmatpush1.msra.mxu0 0.0
  %918 = vmatprep.subr.mxu0 0.0
  %919 = vmatpush1.msra.mxu0 0.0
  %920 = vmatprep.subr.mxu0 0.0
  %921 = vmatpush1.msra.mxu0 %v230
  %922 = vmatprep.subr.mxu0 0.0
  %923 = vmatpush1.msra.mxu0 %v229
  %924 = vmatprep.subr.mxu0 0.0
  %925 = vmatpush1.msra.mxu0 %v228
  %926 = vmatprep.subr.mxu0 0.0
  %927 = vmatpush1.msra.mxu0 %v227
  %928 = vmatprep.subr.mxu0 0.0
  %929 = vmatpush1.msra.mxu0 %v226
  %930 = vmatprep.subr.mxu0 0.0
  %931 = vmatpush1.msra.mxu0 %v225
  %932 = vmatprep.subr.mxu0 0.0
  %933 = vmatpush1.msra.mxu0 %v224
  %934 = vmatprep.subr.mxu0 0.0
  %935 = vmatpush1.msra.mxu0 %v223
  %936 = vmatprep.subr.mxu0 0.0
  %937 = vmatpush2.msra.mxu0 0.0
  %938 = vmatprep.subr.mxu0 0.0
  %939 = vmatpush2.msra.mxu0 0.0
  %940 = vmatprep.subr.mxu0 0.0
  %941 = vmatpush2.msra.mxu0 0.0
  %942 = vmatprep.subr.mxu0 0.0
  %943 = vmatpush2.msra.mxu0 0.0
  %944 = vmatprep.subr.mxu0 0.0
  %945 = vmatpush2.msra.mxu0 0.0
  %946 = vmatprep.subr.mxu0 0.0
  %947 = vmatpush2.msra.mxu0 0.0
  %948 = vmatprep.subr.mxu0 0.0
  %949 = vmatpush2.msra.mxu0 0.0
  %950 = vmatprep.subr.mxu0 0.0
  %951 = vmatpush2.msra.mxu0 0.0
  %952 = vmatprep.subr.mxu0 0.0
  %953 = vmatpush2.msra.mxu0 0.0
  %954 = vmatprep.subr.mxu0 0.0
  %955 = vmatpush2.msra.mxu0 0.0
  %956 = vmatprep.subr.mxu0 0.0
  %957 = vmatpush2.msra.mxu0 0.0
  %958 = vmatprep.subr.mxu0 0.0
  %959 = vmatpush2.msra.mxu0 0.0
  %960 = vmatprep.subr.mxu0 0.0
  %961 = vmatpush2.msra.mxu0 0.0
  %962 = vmatprep.subr.mxu0 0.0
  %963 = vmatpush2.msra.mxu0 0.0
  %964 = vmatprep.subr.mxu0 0.0
  %965 = vmatpush2.msra.mxu0 0.0
  %966 = vmatprep.subr.mxu0 0.0
  %967 = vmatpush2.msra.mxu0 0.0
  %968 = vmatprep.mubr.f32.mxu0 0.0
  %969 = vmatmul.mubr.f32.gmra.mxu0 %v832
  %v970 = vpop.f32.mrf.mxu0
  %v971 = vadd.f32 %v901, %v970
  %v972 = vpop.f32.mrf.mxu0
  %973 = vdwg.mxu0
  %v974 = vmul.f32 %v825, 0.03125
  %v975 = vmul.f32 %v971, 0.03125
  %v976 = vmul.f32 %v974, %v974
  %v977 = vsub.f32 %v975, %v976
  %v978 = vmax.f32 %v977, 0.0
  %v979 = vadd.f32 %v978, 1e-05
  %v980 = vrsqrt.pop %v979
  %vm981 = vcmask 80896
  %v983 = vsel %vm981, %v980, 0
  %vm985 = vcmask 1041408
  %v987 = vsel %vm985, %v77, 0
  %v990 = vsel %vm985, %v78, 0
  %v993 = vsel %vm985, %v79, 0
  %995 = vmatprep.subr.mxu0 0.0
  %996 = vmatpush1.msra.mxu0 0.0
  %997 = vmatprep.subr.mxu0 0.0
  %998 = vmatpush1.msra.mxu0 0.0
  %999 = vmatprep.subr.mxu0 0.0
  %1000 = vmatpush1.msra.mxu0 0.0
  %1001 = vmatprep.subr.mxu0 0.0
  %1002 = vmatpush1.msra.mxu0 0.0
  %1003 = vmatprep.subr.mxu0 0.0
  %1004 = vmatpush1.msra.mxu0 0.0
  %1005 = vmatprep.subr.mxu0 0.0
  %1006 = vmatpush1.msra.mxu0 0.0
  %1007 = vmatprep.subr.mxu0 0.0
  %1008 = vmatpush1.msra.mxu0 0.0
  %1009 = vmatprep.subr.mxu0 0.0
  %1010 = vmatpush1.msra.mxu0 0.0
  %1011 = vmatprep.subr.mxu0 0.0
  %1012 = vmatpush1.msra.mxu0 0.0
  %1013 = vmatprep.subr.mxu0 0.0
  %1014 = vmatpush1.msra.mxu0 0.0
  %1015 = vmatprep.subr.mxu0 0.0
  %1016 = vmatpush1.msra.mxu0 0.0
  %1017 = vmatprep.subr.mxu0 0.0
  %1018 = vmatpush1.msra.mxu0 0.0
  %1019 = vmatprep.subr.mxu0 0.0
  %1020 = vmatpush1.msra.mxu0 0.0
  %1021 = vmatprep.subr.mxu0 0.0
  %1022 = vmatpush1.msra.mxu0 0.0
  %1023 = vmatprep.subr.mxu0 %v990
  %1024 = vmatpush1.msra.mxu0 %v987
  %1025 = vmatprep.subr.mxu0 %v75
  %1026 = vmatpush1.msra.mxu0 %v74
  %1027 = vmatprep.subr.mxu0 0.0
  %1028 = vmatpush2.msra.mxu0 0.0
  %1029 = vmatprep.subr.mxu0 0.0
  %1030 = vmatpush2.msra.mxu0 0.0
  %1031 = vmatprep.subr.mxu0 0.0
  %1032 = vmatpush2.msra.mxu0 0.0
  %1033 = vmatprep.subr.mxu0 0.0
  %1034 = vmatpush2.msra.mxu0 0.0
  %1035 = vmatprep.subr.mxu0 0.0
  %1036 = vmatpush2.msra.mxu0 0.0
  %1037 = vmatprep.subr.mxu0 0.0
  %1038 = vmatpush2.msra.mxu0 0.0
  %1039 = vmatprep.subr.mxu0 0.0
  %1040 = vmatpush2.msra.mxu0 0.0
  %1041 = vmatprep.subr.mxu0 0.0
  %1042 = vmatpush2.msra.mxu0 0.0
  %1043 = vmatprep.subr.mxu0 0.0
  %1044 = vmatpush2.msra.mxu0 0.0
  %1045 = vmatprep.subr.mxu0 0.0
  %1046 = vmatpush2.msra.mxu0 0.0
  %1047 = vmatprep.subr.mxu0 0.0
  %1048 = vmatpush2.msra.mxu0 0.0
  %1049 = vmatprep.subr.mxu0 0.0
  %1050 = vmatpush2.msra.mxu0 0.0
  %1051 = vmatprep.subr.mxu0 0.0
  %1052 = vmatpush2.msra.mxu0 0.0
  %1053 = vmatprep.subr.mxu0 0.0
  %1054 = vmatpush2.msra.mxu0 0.0
  %1055 = vmatprep.subr.mxu0 0.0
  %1056 = vmatpush2.msra.mxu0 0.0
  %1057 = vmatprep.subr.mxu0 0.0
  %1058 = vmatpush2.msra.mxu0 0.0
  %1059 = vmatprep.mubr.f32.mxu0 0.0
  %1060 = vmatmul.mubr.f32.gmra.mxu0 %v983
  %v1061 = vpop.f32.mrf.mxu0
  %v1062 = vadd.f32 0.0, %v1061
  %v1063 = vpop.f32.mrf.mxu0
  %v1064 = vadd.f32 0.0, %v1063
  %1065 = vdwg.mxu0
  %1066 = vmatprep.subr.mxu0 0.0
  %1067 = vmatpush1.msra.mxu0 0.0
  %1068 = vmatprep.subr.mxu0 0.0
  %1069 = vmatpush1.msra.mxu0 0.0
  %1070 = vmatprep.subr.mxu0 0.0
  %1071 = vmatpush1.msra.mxu0 0.0
  %1072 = vmatprep.subr.mxu0 0.0
  %1073 = vmatpush1.msra.mxu0 0.0
  %1074 = vmatprep.subr.mxu0 0.0
  %1075 = vmatpush1.msra.mxu0 0.0
  %1076 = vmatprep.subr.mxu0 0.0
  %1077 = vmatpush1.msra.mxu0 0.0
  %1078 = vmatprep.subr.mxu0 0.0
  %1079 = vmatpush1.msra.mxu0 0.0
  %1080 = vmatprep.subr.mxu0 0.0
  %1081 = vmatpush1.msra.mxu0 0.0
  %1082 = vmatprep.subr.mxu0 0.0
  %1083 = vmatpush1.msra.mxu0 0.0
  %1084 = vmatprep.subr.mxu0 0.0
  %1085 = vmatpush1.msra.mxu0 0.0
  %1086 = vmatprep.subr.mxu0 0.0
  %1087 = vmatpush1.msra.mxu0 0.0
  %1088 = vmatprep.subr.mxu0 0.0
  %1089 = vmatpush1.msra.mxu0 0.0
  %1090 = vmatprep.subr.mxu0 0.0
  %1091 = vmatpush1.msra.mxu0 0.0
  %1092 = vmatprep.subr.mxu0 0.0
  %1093 = vmatpush1.msra.mxu0 0.0
  %1094 = vmatprep.subr.mxu0 0.0
  %1095 = vmatpush1.msra.mxu0 %v993
  %1096 = vmatprep.subr.mxu0 0.0
  %1097 = vmatpush1.msra.mxu0 %v76
  %1098 = vmatprep.subr.mxu0 0.0
  %1099 = vmatpush2.msra.mxu0 0.0
  %1100 = vmatprep.subr.mxu0 0.0
  %1101 = vmatpush2.msra.mxu0 0.0
  %1102 = vmatprep.subr.mxu0 0.0
  %1103 = vmatpush2.msra.mxu0 0.0
  %1104 = vmatprep.subr.mxu0 0.0
  %1105 = vmatpush2.msra.mxu0 0.0
  %1106 = vmatprep.subr.mxu0 0.0
  %1107 = vmatpush2.msra.mxu0 0.0
  %1108 = vmatprep.subr.mxu0 0.0
  %1109 = vmatpush2.msra.mxu0 0.0
  %1110 = vmatprep.subr.mxu0 0.0
  %1111 = vmatpush2.msra.mxu0 0.0
  %1112 = vmatprep.subr.mxu0 0.0
  %1113 = vmatpush2.msra.mxu0 0.0
  %1114 = vmatprep.subr.mxu0 0.0
  %1115 = vmatpush2.msra.mxu0 0.0
  %1116 = vmatprep.subr.mxu0 0.0
  %1117 = vmatpush2.msra.mxu0 0.0
  %1118 = vmatprep.subr.mxu0 0.0
  %1119 = vmatpush2.msra.mxu0 0.0
  %1120 = vmatprep.subr.mxu0 0.0
  %1121 = vmatpush2.msra.mxu0 0.0
  %1122 = vmatprep.subr.mxu0 0.0
  %1123 = vmatpush2.msra.mxu0 0.0
  %1124 = vmatprep.subr.mxu0 0.0
  %1125 = vmatpush2.msra.mxu0 0.0
  %1126 = vmatprep.subr.mxu0 0.0
  %1127 = vmatpush2.msra.mxu0 0.0
  %1128 = vmatprep.subr.mxu0 0.0
  %1129 = vmatpush2.msra.mxu0 0.0
  %1130 = vmatprep.mubr.f32.mxu0 0.0
  %1131 = vmatmul.mubr.f32.gmra.mxu0 %v983
  %v1132 = vpop.f32.mrf.mxu0
  %v1133 = vadd.f32 0.0, %v1132
  %v1134 = vpop.f32.mrf.mxu0
  %1135 = vdwg.mxu0
  %v1136 = vmul.f32 %v974, %v980
  %v1138 = vsel %vm981, %v1136, 0
  %1140 = vmatprep.subr.mxu0 0.0
  %1141 = vmatpush1.msra.mxu0 0.0
  %1142 = vmatprep.subr.mxu0 0.0
  %1143 = vmatpush1.msra.mxu0 0.0
  %1144 = vmatprep.subr.mxu0 0.0
  %1145 = vmatpush1.msra.mxu0 0.0
  %1146 = vmatprep.subr.mxu0 0.0
  %1147 = vmatpush1.msra.mxu0 0.0
  %1148 = vmatprep.subr.mxu0 0.0
  %1149 = vmatpush1.msra.mxu0 0.0
  %1150 = vmatprep.subr.mxu0 0.0
  %1151 = vmatpush1.msra.mxu0 0.0
  %1152 = vmatprep.subr.mxu0 0.0
  %1153 = vmatpush1.msra.mxu0 0.0
  %1154 = vmatprep.subr.mxu0 0.0
  %1155 = vmatpush1.msra.mxu0 0.0
  %1156 = vmatprep.subr.mxu0 0.0
  %1157 = vmatpush1.msra.mxu0 0.0
  %1158 = vmatprep.subr.mxu0 0.0
  %1159 = vmatpush1.msra.mxu0 0.0
  %1160 = vmatprep.subr.mxu0 0.0
  %1161 = vmatpush1.msra.mxu0 0.0
  %1162 = vmatprep.subr.mxu0 0.0
  %1163 = vmatpush1.msra.mxu0 0.0
  %1164 = vmatprep.subr.mxu0 0.0
  %1165 = vmatpush1.msra.mxu0 0.0
  %1166 = vmatprep.subr.mxu0 0.0
  %1167 = vmatpush1.msra.mxu0 0.0
  %1168 = vmatprep.subr.mxu0 %v990
  %1169 = vmatpush1.msra.mxu0 %v987
  %1170 = vmatprep.subr.mxu0 %v75
  %1171 = vmatpush1.msra.mxu0 %v74
  %1172 = vmatprep.subr.mxu0 0.0
  %1173 = vmatpush2.msra.mxu0 0.0
  %1174 = vmatprep.subr.mxu0 0.0
  %1175 = vmatpush2.msra.mxu0 0.0
  %1176 = vmatprep.subr.mxu0 0.0
  %1177 = vmatpush2.msra.mxu0 0.0
  %1178 = vmatprep.subr.mxu0 0.0
  %1179 = vmatpush2.msra.mxu0 0.0
  %1180 = vmatprep.subr.mxu0 0.0
  %1181 = vmatpush2.msra.mxu0 0.0
  %1182 = vmatprep.subr.mxu0 0.0
  %1183 = vmatpush2.msra.mxu0 0.0
  %1184 = vmatprep.subr.mxu0 0.0
  %1185 = vmatpush2.msra.mxu0 0.0
  %1186 = vmatprep.subr.mxu0 0.0
  %1187 = vmatpush2.msra.mxu0 0.0
  %1188 = vmatprep.subr.mxu0 0.0
  %1189 = vmatpush2.msra.mxu0 0.0
  %1190 = vmatprep.subr.mxu0 0.0
  %1191 = vmatpush2.msra.mxu0 0.0
  %1192 = vmatprep.subr.mxu0 0.0
  %1193 = vmatpush2.msra.mxu0 0.0
  %1194 = vmatprep.subr.mxu0 0.0
  %1195 = vmatpush2.msra.mxu0 0.0
  %1196 = vmatprep.subr.mxu0 0.0
  %1197 = vmatpush2.msra.mxu0 0.0
  %1198 = vmatprep.subr.mxu0 0.0
  %1199 = vmatpush2.msra.mxu0 0.0
  %1200 = vmatprep.subr.mxu0 0.0
  %1201 = vmatpush2.msra.mxu0 0.0
  %1202 = vmatprep.subr.mxu0 0.0
  %1203 = vmatpush2.msra.mxu0 0.0
  %1204 = vmatprep.mubr.f32.mxu0 0.0
  %1205 = vmatmul.mubr.f32.gmra.mxu0 %v1138
  %v1206 = vpop.f32.mrf.mxu0
  %v1207 = vadd.f32 0.0, %v1206
  %v1208 = vpop.f32.mrf.mxu0
  %v1209 = vadd.f32 0.0, %v1208
  %1210 = vdwg.mxu0
  %1211 = vmatprep.subr.mxu0 0.0
  %1212 = vmatpush1.msra.mxu0 0.0
  %1213 = vmatprep.subr.mxu0 0.0
  %1214 = vmatpush1.msra.mxu0 0.0
  %1215 = vmatprep.subr.mxu0 0.0
  %1216 = vmatpush1.msra.mxu0 0.0
  %1217 = vmatprep.subr.mxu0 0.0
  %1218 = vmatpush1.msra.mxu0 0.0
  %1219 = vmatprep.subr.mxu0 0.0
  %1220 = vmatpush1.msra.mxu0 0.0
  %1221 = vmatprep.subr.mxu0 0.0
  %1222 = vmatpush1.msra.mxu0 0.0
  %1223 = vmatprep.subr.mxu0 0.0
  %1224 = vmatpush1.msra.mxu0 0.0
  %1225 = vmatprep.subr.mxu0 0.0
  %1226 = vmatpush1.msra.mxu0 0.0
  %1227 = vmatprep.subr.mxu0 0.0
  %1228 = vmatpush1.msra.mxu0 0.0
  %1229 = vmatprep.subr.mxu0 0.0
  %1230 = vmatpush1.msra.mxu0 0.0
  %1231 = vmatprep.subr.mxu0 0.0
  %1232 = vmatpush1.msra.mxu0 0.0
  %1233 = vmatprep.subr.mxu0 0.0
  %1234 = vmatpush1.msra.mxu0 0.0
  %1235 = vmatprep.subr.mxu0 0.0
  %1236 = vmatpush1.msra.mxu0 0.0
  %1237 = vmatprep.subr.mxu0 0.0
  %1238 = vmatpush1.msra.mxu0 0.0
  %1239 = vmatprep.subr.mxu0 0.0
  %1240 = vmatpush1.msra.mxu0 %v993
  %1241 = vmatprep.subr.mxu0 0.0
  %1242 = vmatpush1.msra.mxu0 %v76
  %1243 = vmatprep.subr.mxu0 0.0
  %1244 = vmatpush2.msra.mxu0 0.0
  %1245 = vmatprep.subr.mxu0 0.0
  %1246 = vmatpush2.msra.mxu0 0.0
  %1247 = vmatprep.subr.mxu0 0.0
  %1248 = vmatpush2.msra.mxu0 0.0
  %1249 = vmatprep.subr.mxu0 0.0
  %1250 = vmatpush2.msra.mxu0 0.0
  %1251 = vmatprep.subr.mxu0 0.0
  %1252 = vmatpush2.msra.mxu0 0.0
  %1253 = vmatprep.subr.mxu0 0.0
  %1254 = vmatpush2.msra.mxu0 0.0
  %1255 = vmatprep.subr.mxu0 0.0
  %1256 = vmatpush2.msra.mxu0 0.0
  %1257 = vmatprep.subr.mxu0 0.0
  %1258 = vmatpush2.msra.mxu0 0.0
  %1259 = vmatprep.subr.mxu0 0.0
  %1260 = vmatpush2.msra.mxu0 0.0
  %1261 = vmatprep.subr.mxu0 0.0
  %1262 = vmatpush2.msra.mxu0 0.0
  %1263 = vmatprep.subr.mxu0 0.0
  %1264 = vmatpush2.msra.mxu0 0.0
  %1265 = vmatprep.subr.mxu0 0.0
  %1266 = vmatpush2.msra.mxu0 0.0
  %1267 = vmatprep.subr.mxu0 0.0
  %1268 = vmatpush2.msra.mxu0 0.0
  %1269 = vmatprep.subr.mxu0 0.0
  %1270 = vmatpush2.msra.mxu0 0.0
  %1271 = vmatprep.subr.mxu0 0.0
  %1272 = vmatpush2.msra.mxu0 0.0
  %1273 = vmatprep.subr.mxu0 0.0
  %1274 = vmatpush2.msra.mxu0 0.0
  %1275 = vmatprep.mubr.f32.mxu0 0.0
  %1276 = vmatmul.mubr.f32.gmra.mxu0 %v1138
  %v1277 = vpop.f32.mrf.mxu0
  %v1278 = vadd.f32 0.0, %v1277
  %v1279 = vpop.f32.mrf.mxu0
  %1280 = vdwg.mxu0
  %v1281 = vmul.f32 %v681, %v1062
  %v1282 = vmul.f32 %v682, %v1064
  %v1283 = vmul.f32 %v683, %v1133
  %v1284 = vsub.f32 %v1281, %v1207
  %v1285 = vsub.f32 %v1282, %v1209
  %v1286 = vsub.f32 %v1283, %v1278
  %v1288 = vlaneseq
  %v1289 = vshrl.u32 %v1288, 7
  %v1290 = vsub.s32 0, %v1289
  %v1291 = vrot.slane %v93, %v1290
  %v1292 = vlaneseq
  %v1293 = vshrl.u32 %v1292, 7
  %v1294 = vsub.s32 1, %v1293
  %v1295 = vrot.slane %v93, %v1294
  %v1296 = vlaneseq
  %v1297 = vshrl.u32 %v1296, 7
  %v1298 = vsub.s32 2, %v1297
  %v1299 = vrot.slane %v93, %v1298
  %v1303 = vmul.f32 %v1284, %v1291
  %v1304 = vmul.f32 %v1285, %v1295
  %v1305 = vmul.f32 %v1286, %v1299
  %v1307 = vlaneseq
  %v1308 = vshrl.u32 %v1307, 7
  %v1309 = vsub.s32 0, %v1308
  %v1310 = vrot.slane %v95, %v1309
  %v1311 = vlaneseq
  %v1312 = vshrl.u32 %v1311, 7
  %v1313 = vsub.s32 1, %v1312
  %v1314 = vrot.slane %v95, %v1313
  %v1315 = vlaneseq
  %v1316 = vshrl.u32 %v1315, 7
  %v1317 = vsub.s32 2, %v1316
  %v1318 = vrot.slane %v95, %v1317
  %v1322 = vadd.f32 %v1303, %v1310
  %v1323 = vadd.f32 %v1304, %v1314
  %v1324 = vadd.f32 %v1305, %v1318
  %v1326 = vsel %vm684, %v1324, 0
  %1328 = vmatprep.subr.mxu0 0.0
  %1329 = vmatpush1.msra.mxu0 %v166
  %1330 = vmatprep.subr.mxu0 0.0
  %1331 = vmatpush1.msra.mxu0 %v165
  %1332 = vmatprep.subr.mxu0 0.0
  %1333 = vmatpush1.msra.mxu0 %v164
  %1334 = vmatprep.subr.mxu0 0.0
  %1335 = vmatpush1.msra.mxu0 %v163
  %1336 = vmatprep.subr.mxu0 0.0
  %1337 = vmatpush1.msra.mxu0 %v162
  %1338 = vmatprep.subr.mxu0 0.0
  %1339 = vmatpush1.msra.mxu0 %v161
  %1340 = vmatprep.subr.mxu0 0.0
  %1341 = vmatpush1.msra.mxu0 %v160
  %1342 = vmatprep.subr.mxu0 0.0
  %1343 = vmatpush1.msra.mxu0 %v159
  %1344 = vmatprep.subr.mxu0 0.0
  %1345 = vmatpush1.msra.mxu0 %v158
  %1346 = vmatprep.subr.mxu0 0.0
  %1347 = vmatpush1.msra.mxu0 %v157
  %1348 = vmatprep.subr.mxu0 0.0
  %1349 = vmatpush1.msra.mxu0 %v156
  %1350 = vmatprep.subr.mxu0 0.0
  %1351 = vmatpush1.msra.mxu0 %v155
  %1352 = vmatprep.subr.mxu0 0.0
  %1353 = vmatpush1.msra.mxu0 %v154
  %1354 = vmatprep.subr.mxu0 0.0
  %1355 = vmatpush1.msra.mxu0 %v153
  %1356 = vmatprep.subr.mxu0 0.0
  %1357 = vmatpush1.msra.mxu0 %v152
  %1358 = vmatprep.subr.mxu0 0.0
  %1359 = vmatpush1.msra.mxu0 %v151
  %1360 = vmatprep.subr.mxu0 0.0
  %1361 = vmatpush2.msra.mxu0 %v182
  %1362 = vmatprep.subr.mxu0 0.0
  %1363 = vmatpush2.msra.mxu0 %v181
  %1364 = vmatprep.subr.mxu0 0.0
  %1365 = vmatpush2.msra.mxu0 %v180
  %1366 = vmatprep.subr.mxu0 0.0
  %1367 = vmatpush2.msra.mxu0 %v179
  %1368 = vmatprep.subr.mxu0 0.0
  %1369 = vmatpush2.msra.mxu0 %v178
  %1370 = vmatprep.subr.mxu0 0.0
  %1371 = vmatpush2.msra.mxu0 %v177
  %1372 = vmatprep.subr.mxu0 0.0
  %1373 = vmatpush2.msra.mxu0 %v176
  %1374 = vmatprep.subr.mxu0 0.0
  %1375 = vmatpush2.msra.mxu0 %v175
  %1376 = vmatprep.subr.mxu0 0.0
  %1377 = vmatpush2.msra.mxu0 %v174
  %1378 = vmatprep.subr.mxu0 0.0
  %1379 = vmatpush2.msra.mxu0 %v173
  %1380 = vmatprep.subr.mxu0 0.0
  %1381 = vmatpush2.msra.mxu0 %v172
  %1382 = vmatprep.subr.mxu0 0.0
  %1383 = vmatpush2.msra.mxu0 %v171
  %1384 = vmatprep.subr.mxu0 0.0
  %1385 = vmatpush2.msra.mxu0 %v170
  %1386 = vmatprep.subr.mxu0 0.0
  %1387 = vmatpush2.msra.mxu0 %v169
  %1388 = vmatprep.subr.mxu0 0.0
  %1389 = vmatpush2.msra.mxu0 %v168
  %1390 = vmatprep.subr.mxu0 0.0
  %1391 = vmatpush2.msra.mxu0 %v167
  %1392 = vmatprep.mubr.f32.mxu0 %v1323
  %1393 = vmatmul.mubr.f32.gmra.mxu0 %v1322
  %v1394 = vpop.f32.mrf.mxu0
  %v1395 = vadd.f32 %v96, %v1394
  %v1396 = vpop.f32.mrf.mxu0
  %1397 = vdwg.mxu0
  %1398 = vmatprep.subr.mxu0 0.0
  %1399 = vmatpush1.msra.mxu0 0.0
  %1400 = vmatprep.subr.mxu0 0.0
  %1401 = vmatpush1.msra.mxu0 0.0
  %1402 = vmatprep.subr.mxu0 0.0
  %1403 = vmatpush1.msra.mxu0 0.0
  %1404 = vmatprep.subr.mxu0 0.0
  %1405 = vmatpush1.msra.mxu0 0.0
  %1406 = vmatprep.subr.mxu0 0.0
  %1407 = vmatpush1.msra.mxu0 0.0
  %1408 = vmatprep.subr.mxu0 0.0
  %1409 = vmatpush1.msra.mxu0 0.0
  %1410 = vmatprep.subr.mxu0 0.0
  %1411 = vmatpush1.msra.mxu0 0.0
  %1412 = vmatprep.subr.mxu0 0.0
  %1413 = vmatpush1.msra.mxu0 0.0
  %1414 = vmatprep.subr.mxu0 0.0
  %1415 = vmatpush1.msra.mxu0 %v190
  %1416 = vmatprep.subr.mxu0 0.0
  %1417 = vmatpush1.msra.mxu0 %v189
  %1418 = vmatprep.subr.mxu0 0.0
  %1419 = vmatpush1.msra.mxu0 %v188
  %1420 = vmatprep.subr.mxu0 0.0
  %1421 = vmatpush1.msra.mxu0 %v187
  %1422 = vmatprep.subr.mxu0 0.0
  %1423 = vmatpush1.msra.mxu0 %v186
  %1424 = vmatprep.subr.mxu0 0.0
  %1425 = vmatpush1.msra.mxu0 %v185
  %1426 = vmatprep.subr.mxu0 0.0
  %1427 = vmatpush1.msra.mxu0 %v184
  %1428 = vmatprep.subr.mxu0 0.0
  %1429 = vmatpush1.msra.mxu0 %v183
  %1430 = vmatprep.subr.mxu0 0.0
  %1431 = vmatpush2.msra.mxu0 0.0
  %1432 = vmatprep.subr.mxu0 0.0
  %1433 = vmatpush2.msra.mxu0 0.0
  %1434 = vmatprep.subr.mxu0 0.0
  %1435 = vmatpush2.msra.mxu0 0.0
  %1436 = vmatprep.subr.mxu0 0.0
  %1437 = vmatpush2.msra.mxu0 0.0
  %1438 = vmatprep.subr.mxu0 0.0
  %1439 = vmatpush2.msra.mxu0 0.0
  %1440 = vmatprep.subr.mxu0 0.0
  %1441 = vmatpush2.msra.mxu0 0.0
  %1442 = vmatprep.subr.mxu0 0.0
  %1443 = vmatpush2.msra.mxu0 0.0
  %1444 = vmatprep.subr.mxu0 0.0
  %1445 = vmatpush2.msra.mxu0 0.0
  %1446 = vmatprep.subr.mxu0 0.0
  %1447 = vmatpush2.msra.mxu0 0.0
  %1448 = vmatprep.subr.mxu0 0.0
  %1449 = vmatpush2.msra.mxu0 0.0
  %1450 = vmatprep.subr.mxu0 0.0
  %1451 = vmatpush2.msra.mxu0 0.0
  %1452 = vmatprep.subr.mxu0 0.0
  %1453 = vmatpush2.msra.mxu0 0.0
  %1454 = vmatprep.subr.mxu0 0.0
  %1455 = vmatpush2.msra.mxu0 0.0
  %1456 = vmatprep.subr.mxu0 0.0
  %1457 = vmatpush2.msra.mxu0 0.0
  %1458 = vmatprep.subr.mxu0 0.0
  %1459 = vmatpush2.msra.mxu0 0.0
  %1460 = vmatprep.subr.mxu0 0.0
  %1461 = vmatpush2.msra.mxu0 0.0
  %1462 = vmatprep.mubr.f32.mxu0 0.0
  %1463 = vmatmul.mubr.f32.gmra.mxu0 %v1326
  %v1464 = vpop.f32.mrf.mxu0
  %v1465 = vadd.f32 %v1395, %v1464
  %v1466 = vpop.f32.mrf.mxu0
  %1467 = vdwg.mxu0
  %v1468 = vsel %vm981, %v1465, 0.0
  %1469 = vadd.xlane.f32.xlu0 %v1468
  %v1470 = vpop.xlane.xlu0 %1469
  %v1471 = vrot.slane %v1470, 4
  %v1472 = vadd.f32 %v1470, %v1471
  %v1473 = vrot.slane %v1472, 2
  %v1474 = vadd.f32 %v1472, %v1473
  %v1475 = vrot.slane %v1474, 1
  %v1476 = vadd.f32 %v1474, %v1475
  %s1477 = vtos %v1476
  %s1478 = smul.f32 %s1477, 0.0125
  %v1479 = vmul.f32 %v1465, %v1465
  %v1480 = vsel %vm981, %v1479, 0.0
  %1481 = vadd.xlane.f32.xlu0 %v1480
  %v1482 = vpop.xlane.xlu0 %1481
  %v1483 = vrot.slane %v1482, 4
  %v1484 = vadd.f32 %v1482, %v1483
  %v1485 = vrot.slane %v1484, 2
  %v1486 = vadd.f32 %v1484, %v1485
  %v1487 = vrot.slane %v1486, 1
  %v1488 = vadd.f32 %v1486, %v1487
  %s1489 = vtos %v1488
  %s1490 = smul.f32 %s1489, 0.0125
  %s1491 = smul.f32 %s1478, %s1478
  %s1492 = ssub.f32 %s1490, %s1491
  %s1493 = smax.f32 %s1492, 0.0
  %v1494 = vstv %s1478
  %v1495 = vsub.f32 %v1465, %v1494
  %s1496 = sadd.f32 %s1493, 1e-05
  %v1497 = vstv %s1496
  %v1498 = vrsqrt.pop %v1497
  %s1499 = vtos %v1498
  %v1500 = vstv %s1499
  %v1501 = vmul.f32 %v1495, %v1500
  %v1503 = vsel %vm981, %v1501, 0
  %v1506 = vsel %vm985, %v146, 0
  %1508 = vmatprep.subr.mxu0 0.0
  %1509 = vmatpush1.msra.mxu0 0.0
  %1510 = vmatprep.subr.mxu0 0.0
  %1511 = vmatpush1.msra.mxu0 0.0
  %1512 = vmatprep.subr.mxu0 0.0
  %1513 = vmatpush1.msra.mxu0 0.0
  %1514 = vmatprep.subr.mxu0 0.0
  %1515 = vmatpush1.msra.mxu0 0.0
  %1516 = vmatprep.subr.mxu0 0.0
  %1517 = vmatpush1.msra.mxu0 0.0
  %1518 = vmatprep.subr.mxu0 0.0
  %1519 = vmatpush1.msra.mxu0 0.0
  %1520 = vmatprep.subr.mxu0 0.0
  %1521 = vmatpush1.msra.mxu0 0.0
  %1522 = vmatprep.subr.mxu0 0.0
  %1523 = vmatpush1.msra.mxu0 0.0
  %1524 = vmatprep.subr.mxu0 0.0
  %1525 = vmatpush1.msra.mxu0 0.0
  %1526 = vmatprep.subr.mxu0 0.0
  %1527 = vmatpush1.msra.mxu0 0.0
  %1528 = vmatprep.subr.mxu0 0.0
  %1529 = vmatpush1.msra.mxu0 0.0
  %1530 = vmatprep.subr.mxu0 0.0
  %1531 = vmatpush1.msra.mxu0 0.0
  %1532 = vmatprep.subr.mxu0 0.0
  %1533 = vmatpush1.msra.mxu0 0.0
  %1534 = vmatprep.subr.mxu0 0.0
  %1535 = vmatpush1.msra.mxu0 0.0
  %1536 = vmatprep.subr.mxu0 0.0
  %1537 = vmatpush1.msra.mxu0 %v1506
  %1538 = vmatprep.subr.mxu0 0.0
  %1539 = vmatpush1.msra.mxu0 %v145
  %1540 = vmatprep.subr.mxu0 0.0
  %1541 = vmatpush2.msra.mxu0 0.0
  %1542 = vmatprep.subr.mxu0 0.0
  %1543 = vmatpush2.msra.mxu0 0.0
  %1544 = vmatprep.subr.mxu0 0.0
  %1545 = vmatpush2.msra.mxu0 0.0
  %1546 = vmatprep.subr.mxu0 0.0
  %1547 = vmatpush2.msra.mxu0 0.0
  %1548 = vmatprep.subr.mxu0 0.0
  %1549 = vmatpush2.msra.mxu0 0.0
  %1550 = vmatprep.subr.mxu0 0.0
  %1551 = vmatpush2.msra.mxu0 0.0
  %1552 = vmatprep.subr.mxu0 0.0
  %1553 = vmatpush2.msra.mxu0 0.0
  %1554 = vmatprep.subr.mxu0 0.0
  %1555 = vmatpush2.msra.mxu0 0.0
  %1556 = vmatprep.subr.mxu0 0.0
  %1557 = vmatpush2.msra.mxu0 0.0
  %1558 = vmatprep.subr.mxu0 0.0
  %1559 = vmatpush2.msra.mxu0 0.0
  %1560 = vmatprep.subr.mxu0 0.0
  %1561 = vmatpush2.msra.mxu0 0.0
  %1562 = vmatprep.subr.mxu0 0.0
  %1563 = vmatpush2.msra.mxu0 0.0
  %1564 = vmatprep.subr.mxu0 0.0
  %1565 = vmatpush2.msra.mxu0 0.0
  %1566 = vmatprep.subr.mxu0 0.0
  %1567 = vmatpush2.msra.mxu0 0.0
  %1568 = vmatprep.subr.mxu0 0.0
  %1569 = vmatpush2.msra.mxu0 0.0
  %1570 = vmatprep.subr.mxu0 0.0
  %1571 = vmatpush2.msra.mxu0 0.0
  %1572 = vmatprep.mubr.f32.mxu0 0.0
  %1573 = vmatmul.mubr.f32.gmra.mxu0 %v1503
  %v1574 = vpop.f32.mrf.mxu0
  %v1575 = vadd.f32 %v97, %v1574
  %v1576 = vpop.f32.mrf.mxu0
  %1577 = vdwg.mxu0
  %v1578 = vmax.f32 %v1575, 0.0
  %vm1579 = vcmask 15360
  %v1580 = vsel %vm1579, %v1578, 0.0
  %1581 = vadd.xlane.f32.xlu0 %v1580
  %v1582 = vpop.xlane.xlu0 %1581
  %v1583 = vmul.f32 %v1582, 0.5
  %v1584 = vmul.f32 %v1578, %v1578
  %v1585 = vsel %vm1579, %v1584, 0.0
  %1586 = vadd.xlane.f32.xlu0 %v1585
  %v1587 = vpop.xlane.xlu0 %1586
  %v1588 = vmul.f32 %v1587, 0.5
  %v1589 = vmul.f32 %v1583, %v1583
  %v1590 = vsub.f32 %v1588, %v1589
  %v1591 = vmax.f32 %v1590, 0.0
  %v1592 = vsub.f32 %v1578, %v1583
  %v1593 = vadd.f32 %v1591, 1e-05
  %v1594 = vrsqrt.pop %v1593
  %v1595 = vmul.f32 %v1592, %v1594
  %v1596 = vmul.f32 %v1595, %v98
  %v1597 = vadd.f32 %v1596, %v99
  %v1598 = vsel %vm1579, %v1597, -inf
  %1599 = vmax.xlane.f32.xlu0 %v1598
  %v1600 = vpop.xlane.xlu0 %1599
  %v1601 = vsub.f32 %v1597, %v1600
  %v1602 = vmul.f32 %v1601, 1.442695
  %v1603 = vpow.pop %v1602
  %v1604 = vsel %vm1579, %v1603, 0.0
  %1605 = vadd.xlane.f32.xlu0 %v1604
  %v1606 = vpop.xlane.xlu0 %1605
  %v1607 = vrcp.pop %v1606
  %v1608 = vmul.f32 %v1603, %v1607
  %1610 = vset.pattern.permute.xlu0 0
  %1611 = vperm.xlu0 %1610, %v1608
  %v1612 = vpop.permute.xlu0 %1611
  %v1614 = vmul.f32 %v1501, %v1612
  %v1615 = vadd.f32 %v1614, 0.0
  %1616 = vset.pattern.permute.xlu0 1
  %1617 = vperm.xlu0 %1616, %v1608
  %v1618 = vpop.permute.xlu0 %1617
  %v1620 = vmul.f32 %v1501, %v1618
  %1622 = vrot.lane.b32.xlu0 %v1620, 123
  %v1623 = vpop.permute.xlu0 %1622
  %v1625 = vadd.f32 %v1615, %v1623
  %vm1626 = vcmask 39936
  %v1628 = vsel %vm1626, %v1625, 0
  %vm1630 = vcmask 1044480
  %v1632 = vsel %vm1630, %v86, 0
  %v1635 = vsel %vm1630, %v87, 0
  %1637 = vmatprep.subr.mxu0 0.0
  %1638 = vmatpush1.msra.mxu0 0.0
  %1639 = vmatprep.subr.mxu0 0.0
  %1640 = vmatpush1.msra.mxu0 0.0
  %1641 = vmatprep.subr.mxu0 0.0
  %1642 = vmatpush1.msra.mxu0 0.0
  %1643 = vmatprep.subr.mxu0 0.0
  %1644 = vmatpush1.msra.mxu0 0.0
  %1645 = vmatprep.subr.mxu0 0.0
  %1646 = vmatpush1.msra.mxu0 0.0
  %1647 = vmatprep.subr.mxu0 0.0
  %1648 = vmatpush1.msra.mxu0 0.0
  %1649 = vmatprep.subr.mxu0 0.0
  %1650 = vmatpush1.msra.mxu0 0.0
  %1651 = vmatprep.subr.mxu0 0.0
  %1652 = vmatpush1.msra.mxu0 0.0
  %1653 = vmatprep.subr.mxu0 0.0
  %1654 = vmatpush1.msra.mxu0 0.0
  %1655 = vmatprep.subr.mxu0 0.0
  %1656 = vmatpush1.msra.mxu0 0.0
  %1657 = vmatprep.subr.mxu0 0.0
  %1658 = vmatpush1.msra.mxu0 0.0
  %1659 = vmatprep.subr.mxu0 0.0
  %1660 = vmatpush1.msra.mxu0 0.0
  %1661 = vmatprep.subr.mxu0 0.0
  %1662 = vmatpush1.msra.mxu0 0.0
  %1663 = vmatprep.subr.mxu0 0.0
  %1664 = vmatpush1.msra.mxu0 0.0
  %1665 = vmatprep.subr.mxu0 0.0
  %1666 = vmatpush1.msra.mxu0 0.0
  %1667 = vmatprep.subr.mxu0 %v1635
  %1668 = vmatpush1.msra.mxu0 %v1632
  %1669 = vmatprep.subr.mxu0 0.0
  %1670 = vmatpush2.msra.mxu0 0.0
  %1671 = vmatprep.subr.mxu0 0.0
  %1672 = vmatpush2.msra.mxu0 0.0
  %1673 = vmatprep.subr.mxu0 0.0
  %1674 = vmatpush2.msra.mxu0 0.0
  %1675 = vmatprep.subr.mxu0 0.0
  %1676 = vmatpush2.msra.mxu0 0.0
  %1677 = vmatprep.subr.mxu0 0.0
  %1678 = vmatpush2.msra.mxu0 0.0
  %1679 = vmatprep.subr.mxu0 0.0
  %1680 = vmatpush2.msra.mxu0 0.0
  %1681 = vmatprep.subr.mxu0 0.0
  %1682 = vmatpush2.msra.mxu0 0.0
  %1683 = vmatprep.subr.mxu0 0.0
  %1684 = vmatpush2.msra.mxu0 0.0
  %1685 = vmatprep.subr.mxu0 0.0
  %1686 = vmatpush2.msra.mxu0 0.0
  %1687 = vmatprep.subr.mxu0 0.0
  %1688 = vmatpush2.msra.mxu0 0.0
  %1689 = vmatprep.subr.mxu0 0.0
  %1690 = vmatpush2.msra.mxu0 0.0
  %1691 = vmatprep.subr.mxu0 0.0
  %1692 = vmatpush2.msra.mxu0 0.0
  %1693 = vmatprep.subr.mxu0 0.0
  %1694 = vmatpush2.msra.mxu0 0.0
  %1695 = vmatprep.subr.mxu0 0.0
  %1696 = vmatpush2.msra.mxu0 0.0
  %1697 = vmatprep.subr.mxu0 0.0
  %1698 = vmatpush2.msra.mxu0 0.0
  %1699 = vmatprep.subr.mxu0 0.0
  %1700 = vmatpush2.msra.mxu0 0.0
  %1701 = vmatprep.mubr.f32.mxu0 0.0
  %1702 = vmatmul.mubr.f32.gmra.mxu0 %v1628
  %v1703 = vpop.f32.mrf.mxu0
  %v1704 = vadd.f32 0.0, %v1703
  %v1705 = vpop.f32.mrf.mxu0
  %v1706 = vadd.f32 0.0, %v1705
  %1707 = vdwg.mxu0
  %v1708 = vmul.f32 %v519, %v1704
  %v1709 = vmul.f32 %v520, %v1706
  %v1710 = vcvt.s32.f32 %v233
  %v1711 = vsel %vm1626, %v1625, -inf
  %1712 = vmax.xlane.f32.xlu0 %v1711
  %v1713 = vpop.xlane.xlu0 %1712
  %vm1714 = vcmp.ge.f32.partialorder %v1625, %v1713
  %v1715 = vsel %vm1714, %v1710, 5.0
  %v1716 = vsel %vm1626, %v1715, inf
  %1717 = vmin.xlane.f32.xlu0 %v1716
  %v1718 = vpop.xlane.xlu0 %1717
  %vm1719 = vcmp.eq.f32.partialorder %v1710, %v1718
  %v1720 = vsel %vm1719, 1, 0
  %v1721 = vcvt.s32.f32 %v1720
  %v1722 = vadd.f32 %v1721, 0.0
  %vm1723 = vcmp.gt.f32.partialorder %v1721, 0.0
  %v1724 = vsel %vm1723, -inf, %v1625
  %v1725 = vsel %vm1626, %v1724, -inf
  %1726 = vmax.xlane.f32.xlu0 %v1725
  %v1727 = vpop.xlane.xlu0 %1726
  %vm1728 = vcmp.ge.f32.partialorder %v1724, %v1727
  %v1729 = vsel %vm1728, %v1710, 5.0
  %v1730 = vsel %vm1626, %v1729, inf
  %1731 = vmin.xlane.f32.xlu0 %v1730
  %v1732 = vpop.xlane.xlu0 %1731
  %vm1733 = vcmp.eq.f32.partialorder %v1710, %v1732
  %v1734 = vsel %vm1733, 1, 0
  %v1735 = vcvt.s32.f32 %v1734
  %v1736 = vadd.f32 %v1722, %v1735
  %vm1737 = vcmp.gt.f32.partialorder %v1736, 0.5
  %v1738 = vsel %vm1737, %v1710, 5.0
  %v1739 = vsel %vm1626, %v1738, inf
  %1740 = vmin.xlane.f32.xlu0 %v1739
  %v1741 = vpop.xlane.xlu0 %1740
  %vm1742 = vcmp.eq.f32.partialorder %v1710, %v1741
  %v1743 = vsel %vm1742, 0.0, %v1736
  %vm1744 = vcmp.gt.f32.partialorder %v1743, 0.5
  %v1745 = vsel %vm1744, %v1710, 5.0
  %v1746 = vsel %vm1626, %v1745, inf
  %1747 = vmin.xlane.f32.xlu0 %v1746
  %v1748 = vpop.xlane.xlu0 %1747
  %v1749 = vsel %vm1737, %v1625, -inf
  %v1750 = vsel %vm1626, %v1749, -inf
  %1751 = vmax.xlane.f32.xlu0 %v1750
  %v1752 = vpop.xlane.xlu0 %1751
  %v1753 = vsub.f32 %v1625, %v1752
  %v1754 = vmul.f32 %v1753, 1.442695
  %v1755 = vpow.pop %v1754
  %v1756 = vmul.f32 %v1755, %v1736
  %v1757 = vsel %vm1626, %v1756, 0.0
  %1758 = vadd.xlane.f32.xlu0 %v1757
  %v1759 = vpop.xlane.xlu0 %1758
  %v1760 = vrcp.pop %v1759
  %v1761 = vmul.f32 %v1756, %v1760
  %v1762 = vlaneseq
  %v1763 = vshrl.u32 %v1762, 7
  %vm1764 = vcmp.ne.s32.totalorder %v1763, %v233
  %vm1765 = vcmp.eq.s32.totalorder %v233, 0
  %v1766 = vsel %vm1765, 0.0, %v1761
  %1768 = vset.pattern.permute.xlu0 0
  %1769 = vperm.xlu0 %1768, %v1736
  %v1770 = vpop.permute.xlu0 %1769
  %v1772 = vmul.f32 %v1766, %v1770
  %v1774 = vsel %vm1626, %v1772, 0
  %1776 = vmatprep.subr.mxu0 0.0
  %1777 = vmatpush1.xpose.msra.mxu0 0.0
  %1778 = vmatprep.subr.mxu0 0.0
  %1779 = vmatpush1.xpose.msra.mxu0 0.0
  %1780 = vmatprep.subr.mxu0 0.0
  %1781 = vmatpush1.xpose.msra.mxu0 0.0
  %1782 = vmatprep.subr.mxu0 0.0
  %1783 = vmatpush1.xpose.msra.mxu0 0.0
  %1784 = vmatprep.subr.mxu0 0.0
  %1785 = vmatpush1.xpose.msra.mxu0 0.0
  %1786 = vmatprep.subr.mxu0 0.0
  %1787 = vmatpush1.xpose.msra.mxu0 0.0
  %1788 = vmatprep.subr.mxu0 0.0
  %1789 = vmatpush1.xpose.msra.mxu0 0.0
  %1790 = vmatprep.subr.mxu0 0.0
  %1791 = vmatpush1.xpose.msra.mxu0 0.0
  %1792 = vmatprep.subr.mxu0 0.0
  %1793 = vmatpush1.xpose.msra.mxu0 0.0
  %1794 = vmatprep.subr.mxu0 0.0
  %1795 = vmatpush1.xpose.msra.mxu0 0.0
  %1796 = vmatprep.subr.mxu0 0.0
  %1797 = vmatpush1.xpose.msra.mxu0 0.0
  %1798 = vmatprep.subr.mxu0 0.0
  %1799 = vmatpush1.xpose.msra.mxu0 0.0
  %1800 = vmatprep.subr.mxu0 0.0
  %1801 = vmatpush1.xpose.msra.mxu0 0.0
  %1802 = vmatprep.subr.mxu0 0.0
  %1803 = vmatpush1.xpose.msra.mxu0 0.0
  %1804 = vmatprep.subr.mxu0 0.0
  %1805 = vmatpush1.xpose.msra.mxu0 0.0
  %1806 = vmatprep.subr.mxu0 0.0
  %1807 = vmatpush1.xpose.msra.mxu0 %v1774
  %1808 = vmatprep.subr.mxu0 0.0
  %1809 = vmatpush2.xpose.msra.mxu0 0.0
  %1810 = vmatprep.subr.mxu0 0.0
  %1811 = vmatpush2.xpose.msra.mxu0 0.0
  %1812 = vmatprep.subr.mxu0 0.0
  %1813 = vmatpush2.xpose.msra.mxu0 0.0
  %1814 = vmatprep.subr.mxu0 0.0
  %1815 = vmatpush2.xpose.msra.mxu0 0.0
  %1816 = vmatprep.subr.mxu0 0.0
  %1817 = vmatpush2.xpose.msra.mxu0 0.0
  %1818 = vmatprep.subr.mxu0 0.0
  %1819 = vmatpush2.xpose.msra.mxu0 0.0
  %1820 = vmatprep.subr.mxu0 0.0
  %1821 = vmatpush2.xpose.msra.mxu0 0.0
  %1822 = vmatprep.subr.mxu0 0.0
  %1823 = vmatpush2.xpose.msra.mxu0 0.0
  %1824 = vmatprep.subr.mxu0 0.0
  %1825 = vmatpush2.xpose.msra.mxu0 0.0
  %1826 = vmatprep.subr.mxu0 0.0
  %1827 = vmatpush2.xpose.msra.mxu0 0.0
  %1828 = vmatprep.subr.mxu0 0.0
  %1829 = vmatpush2.xpose.msra.mxu0 0.0
  %1830 = vmatprep.subr.mxu0 0.0
  %1831 = vmatpush2.xpose.msra.mxu0 0.0
  %1832 = vmatprep.subr.mxu0 0.0
  %1833 = vmatpush2.xpose.msra.mxu0 0.0
  %1834 = vmatprep.subr.mxu0 0.0
  %1835 = vmatpush2.xpose.msra.mxu0 0.0
  %1836 = vmatprep.subr.mxu0 0.0
  %1837 = vmatpush2.xpose.msra.mxu0 0.0
  %1838 = vmatprep.subr.mxu0 0.0
  %1839 = vmatpush2.xpose.msra.mxu0 0.0
  %1840 = vmatprep.mubr.f32.mxu0 0.0
  %1841 = vmatmul.mubr.f32.gmra.mxu0 %v1774
  %v1842 = vpop.f32.mrf.mxu0
  %v1843 = vadd.f32 0.0, %v1842
  %v1844 = vpop.f32.mrf.mxu0
  %1845 = vdwg.mxu0
  %vm1846 = vcmp.gt.f32.partialorder %v1843, 0.0
  %vm1847 = vmand %vm1764, %vm1846
  %v1848 = vmul.f32 %v1843, 1.442695
  %v1849 = vpow.pop %v1848
  %v1850 = vsel %vm1847, %v1849, 0.0
  %vm1851 = vcmask 64512
  %v1852 = vsel %vm1851, %v1850, 0.0
  %1853 = vadd.xlane.f32.xlu0 %v1852
  %v1854 = vpop.xlane.xlu0 %1853
  %vm1855 = vcmp.eq.s32.totalorder %v233, 1
  %v1856 = vsel %vm1855, 0.0, %v1761
  %1857 = vset.pattern.permute.xlu0 1
  %1858 = vperm.xlu0 %1857, %v1736
  %v1859 = vpop.permute.xlu0 %1858
  %v1861 = vmul.f32 %v1856, %v1859
  %v1863 = vsel %vm1626, %v1861, 0
  %1865 = vmatprep.subr.mxu0 0.0
  %1866 = vmatpush1.xpose.msra.mxu0 0.0
  %1867 = vmatprep.subr.mxu0 0.0
  %1868 = vmatpush1.xpose.msra.mxu0 0.0
  %1869 = vmatprep.subr.mxu0 0.0
  %1870 = vmatpush1.xpose.msra.mxu0 0.0
  %1871 = vmatprep.subr.mxu0 0.0
  %1872 = vmatpush1.xpose.msra.mxu0 0.0
  %1873 = vmatprep.subr.mxu0 0.0
  %1874 = vmatpush1.xpose.msra.mxu0 0.0
  %1875 = vmatprep.subr.mxu0 0.0
  %1876 = vmatpush1.xpose.msra.mxu0 0.0
  %1877 = vmatprep.subr.mxu0 0.0
  %1878 = vmatpush1.xpose.msra.mxu0 0.0
  %1879 = vmatprep.subr.mxu0 0.0
  %1880 = vmatpush1.xpose.msra.mxu0 0.0
  %1881 = vmatprep.subr.mxu0 0.0
  %1882 = vmatpush1.xpose.msra.mxu0 0.0
  %1883 = vmatprep.subr.mxu0 0.0
  %1884 = vmatpush1.xpose.msra.mxu0 0.0
  %1885 = vmatprep.subr.mxu0 0.0
  %1886 = vmatpush1.xpose.msra.mxu0 0.0
  %1887 = vmatprep.subr.mxu0 0.0
  %1888 = vmatpush1.xpose.msra.mxu0 0.0
  %1889 = vmatprep.subr.mxu0 0.0
  %1890 = vmatpush1.xpose.msra.mxu0 0.0
  %1891 = vmatprep.subr.mxu0 0.0
  %1892 = vmatpush1.xpose.msra.mxu0 0.0
  %1893 = vmatprep.subr.mxu0 0.0
  %1894 = vmatpush1.xpose.msra.mxu0 0.0
  %1895 = vmatprep.subr.mxu0 0.0
  %1896 = vmatpush1.xpose.msra.mxu0 %v1863
  %1897 = vmatprep.subr.mxu0 0.0
  %1898 = vmatpush2.xpose.msra.mxu0 0.0
  %1899 = vmatprep.subr.mxu0 0.0
  %1900 = vmatpush2.xpose.msra.mxu0 0.0
  %1901 = vmatprep.subr.mxu0 0.0
  %1902 = vmatpush2.xpose.msra.mxu0 0.0
  %1903 = vmatprep.subr.mxu0 0.0
  %1904 = vmatpush2.xpose.msra.mxu0 0.0
  %1905 = vmatprep.subr.mxu0 0.0
  %1906 = vmatpush2.xpose.msra.mxu0 0.0
  %1907 = vmatprep.subr.mxu0 0.0
  %1908 = vmatpush2.xpose.msra.mxu0 0.0
  %1909 = vmatprep.subr.mxu0 0.0
  %1910 = vmatpush2.xpose.msra.mxu0 0.0
  %1911 = vmatprep.subr.mxu0 0.0
  %1912 = vmatpush2.xpose.msra.mxu0 0.0
  %1913 = vmatprep.subr.mxu0 0.0
  %1914 = vmatpush2.xpose.msra.mxu0 0.0
  %1915 = vmatprep.subr.mxu0 0.0
  %1916 = vmatpush2.xpose.msra.mxu0 0.0
  %1917 = vmatprep.subr.mxu0 0.0
  %1918 = vmatpush2.xpose.msra.mxu0 0.0
  %1919 = vmatprep.subr.mxu0 0.0
  %1920 = vmatpush2.xpose.msra.mxu0 0.0
  %1921 = vmatprep.subr.mxu0 0.0
  %1922 = vmatpush2.xpose.msra.mxu0 0.0
  %1923 = vmatprep.subr.mxu0 0.0
  %1924 = vmatpush2.xpose.msra.mxu0 0.0
  %1925 = vmatprep.subr.mxu0 0.0
  %1926 = vmatpush2.xpose.msra.mxu0 0.0
  %1927 = vmatprep.subr.mxu0 0.0
  %1928 = vmatpush2.xpose.msra.mxu0 0.0
  %1929 = vmatprep.mubr.f32.mxu0 0.0
  %1930 = vmatmul.mubr.f32.gmra.mxu0 %v1863
  %v1931 = vpop.f32.mrf.mxu0
  %v1932 = vadd.f32 0.0, %v1931
  %v1933 = vpop.f32.mrf.mxu0
  %1934 = vdwg.mxu0
  %vm1935 = vcmp.gt.f32.partialorder %v1932, 0.0
  %vm1936 = vmand %vm1764, %vm1935
  %v1937 = vmul.f32 %v1932, 1.442695
  %v1938 = vpow.pop %v1937
  %v1939 = vsel %vm1936, %v1938, 0.0
  %v1940 = vsel %vm1851, %v1939, 0.0
  %1941 = vadd.xlane.f32.xlu0 %v1940
  %v1942 = vpop.xlane.xlu0 %1941
  %vm1943 = vcmp.eq.s32.totalorder %v233, 2
  %v1944 = vsel %vm1943, 0.0, %v1761
  %1945 = vset.pattern.permute.xlu0 2
  %1946 = vperm.xlu0 %1945, %v1736
  %v1947 = vpop.permute.xlu0 %1946
  %v1949 = vmul.f32 %v1944, %v1947
  %v1951 = vsel %vm1626, %v1949, 0
  %1953 = vmatprep.subr.mxu0 0.0
  %1954 = vmatpush1.xpose.msra.mxu0 0.0
  %1955 = vmatprep.subr.mxu0 0.0
  %1956 = vmatpush1.xpose.msra.mxu0 0.0
  %1957 = vmatprep.subr.mxu0 0.0
  %1958 = vmatpush1.xpose.msra.mxu0 0.0
  %1959 = vmatprep.subr.mxu0 0.0
  %1960 = vmatpush1.xpose.msra.mxu0 0.0
  %1961 = vmatprep.subr.mxu0 0.0
  %1962 = vmatpush1.xpose.msra.mxu0 0.0
  %1963 = vmatprep.subr.mxu0 0.0
  %1964 = vmatpush1.xpose.msra.mxu0 0.0
  %1965 = vmatprep.subr.mxu0 0.0
  %1966 = vmatpush1.xpose.msra.mxu0 0.0
  %1967 = vmatprep.subr.mxu0 0.0
  %1968 = vmatpush1.xpose.msra.mxu0 0.0
  %1969 = vmatprep.subr.mxu0 0.0
  %1970 = vmatpush1.xpose.msra.mxu0 0.0
  %1971 = vmatprep.subr.mxu0 0.0
  %1972 = vmatpush1.xpose.msra.mxu0 0.0
  %1973 = vmatprep.subr.mxu0 0.0
  %1974 = vmatpush1.xpose.msra.mxu0 0.0
  %1975 = vmatprep.subr.mxu0 0.0
  %1976 = vmatpush1.xpose.msra.mxu0 0.0
  %1977 = vmatprep.subr.mxu0 0.0
  %1978 = vmatpush1.xpose.msra.mxu0 0.0
  %1979 = vmatprep.subr.mxu0 0.0
  %1980 = vmatpush1.xpose.msra.mxu0 0.0
  %1981 = vmatprep.subr.mxu0 0.0
  %1982 = vmatpush1.xpose.msra.mxu0 0.0
  %1983 = vmatprep.subr.mxu0 0.0
  %1984 = vmatpush1.xpose.msra.mxu0 %v1951
  %1985 = vmatprep.subr.mxu0 0.0
  %1986 = vmatpush2.xpose.msra.mxu0 0.0
  %1987 = vmatprep.subr.mxu0 0.0
  %1988 = vmatpush2.xpose.msra.mxu0 0.0
  %1989 = vmatprep.subr.mxu0 0.0
  %1990 = vmatpush2.xpose.msra.mxu0 0.0
  %1991 = vmatprep.subr.mxu0 0.0
  %1992 = vmatpush2.xpose.msra.mxu0 0.0
  %1993 = vmatprep.subr.mxu0 0.0
  %1994 = vmatpush2.xpose.msra.mxu0 0.0
  %1995 = vmatprep.subr.mxu0 0.0
  %1996 = vmatpush2.xpose.msra.mxu0 0.0
  %1997 = vmatprep.subr.mxu0 0.0
  %1998 = vmatpush2.xpose.msra.mxu0 0.0
  %1999 = vmatprep.subr.mxu0 0.0
  %2000 = vmatpush2.xpose.msra.mxu0 0.0
  %2001 = vmatprep.subr.mxu0 0.0
  %2002 = vmatpush2.xpose.msra.mxu0 0.0
  %2003 = vmatprep.subr.mxu0 0.0
  %2004 = vmatpush2.xpose.msra.mxu0 0.0
  %2005 = vmatprep.subr.mxu0 0.0
  %2006 = vmatpush2.xpose.msra.mxu0 0.0
  %2007 = vmatprep.subr.mxu0 0.0
  %2008 = vmatpush2.xpose.msra.mxu0 0.0
  %2009 = vmatprep.subr.mxu0 0.0
  %2010 = vmatpush2.xpose.msra.mxu0 0.0
  %2011 = vmatprep.subr.mxu0 0.0
  %2012 = vmatpush2.xpose.msra.mxu0 0.0
  %2013 = vmatprep.subr.mxu0 0.0
  %2014 = vmatpush2.xpose.msra.mxu0 0.0
  %2015 = vmatprep.subr.mxu0 0.0
  %2016 = vmatpush2.xpose.msra.mxu0 0.0
  %2017 = vmatprep.mubr.f32.mxu0 0.0
  %2018 = vmatmul.mubr.f32.gmra.mxu0 %v1951
  %v2019 = vpop.f32.mrf.mxu0
  %v2020 = vadd.f32 0.0, %v2019
  %v2021 = vpop.f32.mrf.mxu0
  %2022 = vdwg.mxu0
  %vm2023 = vcmp.gt.f32.partialorder %v2020, 0.0
  %vm2024 = vmand %vm1764, %vm2023
  %v2025 = vmul.f32 %v2020, 1.442695
  %v2026 = vpow.pop %v2025
  %v2027 = vsel %vm2024, %v2026, 0.0
  %v2028 = vsel %vm1851, %v2027, 0.0
  %2029 = vadd.xlane.f32.xlu0 %v2028
  %v2030 = vpop.xlane.xlu0 %2029
  %vm2031 = vcmp.eq.s32.totalorder %v233, 3
  %v2032 = vsel %vm2031, 0.0, %v1761
  %2033 = vset.pattern.permute.xlu0 3
  %2034 = vperm.xlu0 %2033, %v1736
  %v2035 = vpop.permute.xlu0 %2034
  %v2037 = vmul.f32 %v2032, %v2035
  %v2039 = vsel %vm1626, %v2037, 0
  %2041 = vmatprep.subr.mxu0 0.0
  %2042 = vmatpush1.xpose.msra.mxu0 0.0
  %2043 = vmatprep.subr.mxu0 0.0
  %2044 = vmatpush1.xpose.msra.mxu0 0.0
  %2045 = vmatprep.subr.mxu0 0.0
  %2046 = vmatpush1.xpose.msra.mxu0 0.0
  %2047 = vmatprep.subr.mxu0 0.0
  %2048 = vmatpush1.xpose.msra.mxu0 0.0
  %2049 = vmatprep.subr.mxu0 0.0
  %2050 = vmatpush1.xpose.msra.mxu0 0.0
  %2051 = vmatprep.subr.mxu0 0.0
  %2052 = vmatpush1.xpose.msra.mxu0 0.0
  %2053 = vmatprep.subr.mxu0 0.0
  %2054 = vmatpush1.xpose.msra.mxu0 0.0
  %2055 = vmatprep.subr.mxu0 0.0
  %2056 = vmatpush1.xpose.msra.mxu0 0.0
  %2057 = vmatprep.subr.mxu0 0.0
  %2058 = vmatpush1.xpose.msra.mxu0 0.0
  %2059 = vmatprep.subr.mxu0 0.0
  %2060 = vmatpush1.xpose.msra.mxu0 0.0
  %2061 = vmatprep.subr.mxu0 0.0
  %2062 = vmatpush1.xpose.msra.mxu0 0.0
  %2063 = vmatprep.subr.mxu0 0.0
  %2064 = vmatpush1.xpose.msra.mxu0 0.0
  %2065 = vmatprep.subr.mxu0 0.0
  %2066 = vmatpush1.xpose.msra.mxu0 0.0
  %2067 = vmatprep.subr.mxu0 0.0
  %2068 = vmatpush1.xpose.msra.mxu0 0.0
  %2069 = vmatprep.subr.mxu0 0.0
  %2070 = vmatpush1.xpose.msra.mxu0 0.0
  %2071 = vmatprep.subr.mxu0 0.0
  %2072 = vmatpush1.xpose.msra.mxu0 %v2039
  %2073 = vmatprep.subr.mxu0 0.0
  %2074 = vmatpush2.xpose.msra.mxu0 0.0
  %2075 = vmatprep.subr.mxu0 0.0
  %2076 = vmatpush2.xpose.msra.mxu0 0.0
  %2077 = vmatprep.subr.mxu0 0.0
  %2078 = vmatpush2.xpose.msra.mxu0 0.0
  %2079 = vmatprep.subr.mxu0 0.0
  %2080 = vmatpush2.xpose.msra.mxu0 0.0
  %2081 = vmatprep.subr.mxu0 0.0
  %2082 = vmatpush2.xpose.msra.mxu0 0.0
  %2083 = vmatprep.subr.mxu0 0.0
  %2084 = vmatpush2.xpose.msra.mxu0 0.0
  %2085 = vmatprep.subr.mxu0 0.0
  %2086 = vmatpush2.xpose.msra.mxu0 0.0
  %2087 = vmatprep.subr.mxu0 0.0
  %2088 = vmatpush2.xpose.msra.mxu0 0.0
  %2089 = vmatprep.subr.mxu0 0.0
  %2090 = vmatpush2.xpose.msra.mxu0 0.0
  %2091 = vmatprep.subr.mxu0 0.0
  %2092 = vmatpush2.xpose.msra.mxu0 0.0
  %2093 = vmatprep.subr.mxu0 0.0
  %2094 = vmatpush2.xpose.msra.mxu0 0.0
  %2095 = vmatprep.subr.mxu0 0.0
  %2096 = vmatpush2.xpose.msra.mxu0 0.0
  %2097 = vmatprep.subr.mxu0 0.0
  %2098 = vmatpush2.xpose.msra.mxu0 0.0
  %2099 = vmatprep.subr.mxu0 0.0
  %2100 = vmatpush2.xpose.msra.mxu0 0.0
  %2101 = vmatprep.subr.mxu0 0.0
  %2102 = vmatpush2.xpose.msra.mxu0 0.0
  %2103 = vmatprep.subr.mxu0 0.0
  %2104 = vmatpush2.xpose.msra.mxu0 0.0
  %2105 = vmatprep.mubr.f32.mxu0 0.0
  %2106 = vmatmul.mubr.f32.gmra.mxu0 %v2039
  %v2107 = vpop.f32.mrf.mxu0
  %v2108 = vadd.f32 0.0, %v2107
  %v2109 = vpop.f32.mrf.mxu0
  %2110 = vdwg.mxu0
  %vm2111 = vcmp.gt.f32.partialorder %v2108, 0.0
  %vm2112 = vmand %vm1764, %vm2111
  %v2113 = vmul.f32 %v2108, 1.442695
  %v2114 = vpow.pop %v2113
  %v2115 = vsel %vm2112, %v2114, 0.0
  %v2116 = vsel %vm1851, %v2115, 0.0
  %2117 = vadd.xlane.f32.xlu0 %v2116
  %v2118 = vpop.xlane.xlu0 %2117
  %vm2119 = vcmp.eq.s32.totalorder %v233, 4
  %v2120 = vsel %vm2119, 0.0, %v1761
  %2121 = vset.pattern.permute.xlu0 4
  %2122 = vperm.xlu0 %2121, %v1736
  %v2123 = vpop.permute.xlu0 %2122
  %v2125 = vmul.f32 %v2120, %v2123
  %v2127 = vsel %vm1626, %v2125, 0
  %2129 = vmatprep.subr.mxu0 0.0
  %2130 = vmatpush1.xpose.msra.mxu0 0.0
  %2131 = vmatprep.subr.mxu0 0.0
  %2132 = vmatpush1.xpose.msra.mxu0 0.0
  %2133 = vmatprep.subr.mxu0 0.0
  %2134 = vmatpush1.xpose.msra.mxu0 0.0
  %2135 = vmatprep.subr.mxu0 0.0
  %2136 = vmatpush1.xpose.msra.mxu0 0.0
  %2137 = vmatprep.subr.mxu0 0.0
  %2138 = vmatpush1.xpose.msra.mxu0 0.0
  %2139 = vmatprep.subr.mxu0 0.0
  %2140 = vmatpush1.xpose.msra.mxu0 0.0
  %2141 = vmatprep.subr.mxu0 0.0
  %2142 = vmatpush1.xpose.msra.mxu0 0.0
  %2143 = vmatprep.subr.mxu0 0.0
  %2144 = vmatpush1.xpose.msra.mxu0 0.0
  %2145 = vmatprep.subr.mxu0 0.0
  %2146 = vmatpush1.xpose.msra.mxu0 0.0
  %2147 = vmatprep.subr.mxu0 0.0
  %2148 = vmatpush1.xpose.msra.mxu0 0.0
  %2149 = vmatprep.subr.mxu0 0.0
  %2150 = vmatpush1.xpose.msra.mxu0 0.0
  %2151 = vmatprep.subr.mxu0 0.0
  %2152 = vmatpush1.xpose.msra.mxu0 0.0
  %2153 = vmatprep.subr.mxu0 0.0
  %2154 = vmatpush1.xpose.msra.mxu0 0.0
  %2155 = vmatprep.subr.mxu0 0.0
  %2156 = vmatpush1.xpose.msra.mxu0 0.0
  %2157 = vmatprep.subr.mxu0 0.0
  %2158 = vmatpush1.xpose.msra.mxu0 0.0
  %2159 = vmatprep.subr.mxu0 0.0
  %2160 = vmatpush1.xpose.msra.mxu0 %v2127
  %2161 = vmatprep.subr.mxu0 0.0
  %2162 = vmatpush2.xpose.msra.mxu0 0.0
  %2163 = vmatprep.subr.mxu0 0.0
  %2164 = vmatpush2.xpose.msra.mxu0 0.0
  %2165 = vmatprep.subr.mxu0 0.0
  %2166 = vmatpush2.xpose.msra.mxu0 0.0
  %2167 = vmatprep.subr.mxu0 0.0
  %2168 = vmatpush2.xpose.msra.mxu0 0.0
  %2169 = vmatprep.subr.mxu0 0.0
  %2170 = vmatpush2.xpose.msra.mxu0 0.0
  %2171 = vmatprep.subr.mxu0 0.0
  %2172 = vmatpush2.xpose.msra.mxu0 0.0
  %2173 = vmatprep.subr.mxu0 0.0
  %2174 = vmatpush2.xpose.msra.mxu0 0.0
  %2175 = vmatprep.subr.mxu0 0.0
  %2176 = vmatpush2.xpose.msra.mxu0 0.0
  %2177 = vmatprep.subr.mxu0 0.0
  %2178 = vmatpush2.xpose.msra.mxu0 0.0
  %2179 = vmatprep.subr.mxu0 0.0
  %2180 = vmatpush2.xpose.msra.mxu0 0.0
  %2181 = vmatprep.subr.mxu0 0.0
  %2182 = vmatpush2.xpose.msra.mxu0 0.0
  %2183 = vmatprep.subr.mxu0 0.0
  %2184 = vmatpush2.xpose.msra.mxu0 0.0
  %2185 = vmatprep.subr.mxu0 0.0
  %2186 = vmatpush2.xpose.msra.mxu0 0.0
  %2187 = vmatprep.subr.mxu0 0.0
  %2188 = vmatpush2.xpose.msra.mxu0 0.0
  %2189 = vmatprep.subr.mxu0 0.0
  %2190 = vmatpush2.xpose.msra.mxu0 0.0
  %2191 = vmatprep.subr.mxu0 0.0
  %2192 = vmatpush2.xpose.msra.mxu0 0.0
  %2193 = vmatprep.mubr.f32.mxu0 0.0
  %2194 = vmatmul.mubr.f32.gmra.mxu0 %v2127
  %v2195 = vpop.f32.mrf.mxu0
  %v2196 = vadd.f32 0.0, %v2195
  %v2197 = vpop.f32.mrf.mxu0
  %2198 = vdwg.mxu0
  %vm2199 = vcmp.gt.f32.partialorder %v2196, 0.0
  %vm2200 = vmand %vm1764, %vm2199
  %v2201 = vmul.f32 %v2196, 1.442695
  %v2202 = vpow.pop %v2201
  %v2203 = vsel %vm2200, %v2202, 0.0
  %v2204 = vsel %vm1851, %v2203, 0.0
  %2205 = vadd.xlane.f32.xlu0 %v2204
  %v2206 = vpop.xlane.xlu0 %2205
  %vm2207 = vcmask 7168
  %v2208 = vsel %vm2207, %v1854, %v1942
  %v2209 = vsel %vm1579, %v2208, %v2030
  %v2210 = vsel %vm254, %v2209, %v2118
  %vm2211 = vcmask 31744
  %v2212 = vsel %vm2211, %v2210, %v2206
  %v2213 = vsel %vm1626, %v2212, 0.0
  %v2214 = vrot.slane %v2213, 4
  %v2215 = vadd.f32 %v2213, %v2214
  %v2216 = vrot.slane %v2215, 2
  %v2217 = vadd.f32 %v2215, %v2216
  %v2218 = vrot.slane %v2217, 1
  %v2219 = vadd.f32 %v2217, %v2218
  %v2220 = vmax.f32 %v2219, 1e-30
  %v2221 = vrcp.pop %v2220
  %v2222 = vmul.f32 %v2212, %v2221
  %v2223 = vadd.f32 %v2222, 1.0
  %v2224 = vrsqrt.pop %v2223
  %v2226 = vsel %vm338, %v1709, 0
  %2228 = vmatprep.subr.mxu0 0.0
  %2229 = vmatpush1.msra.mxu0 %v120
  %2230 = vmatprep.subr.mxu0 0.0
  %2231 = vmatpush1.msra.mxu0 %v119
  %2232 = vmatprep.subr.mxu0 0.0
  %2233 = vmatpush1.msra.mxu0 %v118
  %2234 = vmatprep.subr.mxu0 0.0
  %2235 = vmatpush1.msra.mxu0 %v117
  %2236 = vmatprep.subr.mxu0 0.0
  %2237 = vmatpush1.msra.mxu0 %v116
  %2238 = vmatprep.subr.mxu0 0.0
  %2239 = vmatpush1.msra.mxu0 %v115
  %2240 = vmatprep.subr.mxu0 0.0
  %2241 = vmatpush1.msra.mxu0 %v114
  %2242 = vmatprep.subr.mxu0 0.0
  %2243 = vmatpush1.msra.mxu0 %v113
  %2244 = vmatprep.subr.mxu0 0.0
  %2245 = vmatpush1.msra.mxu0 %v112
  %2246 = vmatprep.subr.mxu0 0.0
  %2247 = vmatpush1.msra.mxu0 %v111
  %2248 = vmatprep.subr.mxu0 0.0
  %2249 = vmatpush1.msra.mxu0 %v110
  %2250 = vmatprep.subr.mxu0 0.0
  %2251 = vmatpush1.msra.mxu0 %v109
  %2252 = vmatprep.subr.mxu0 0.0
  %2253 = vmatpush1.msra.mxu0 %v108
  %2254 = vmatprep.subr.mxu0 0.0
  %2255 = vmatpush1.msra.mxu0 %v107
  %2256 = vmatprep.subr.mxu0 0.0
  %2257 = vmatpush1.msra.mxu0 %v106
  %2258 = vmatprep.subr.mxu0 0.0
  %2259 = vmatpush1.msra.mxu0 %v105
  %2260 = vmatprep.subr.mxu0 0.0
  %2261 = vmatpush2.msra.mxu0 0.0
  %2262 = vmatprep.subr.mxu0 0.0
  %2263 = vmatpush2.msra.mxu0 0.0
  %2264 = vmatprep.subr.mxu0 0.0
  %2265 = vmatpush2.msra.mxu0 0.0
  %2266 = vmatprep.subr.mxu0 0.0
  %2267 = vmatpush2.msra.mxu0 0.0
  %2268 = vmatprep.subr.mxu0 0.0
  %2269 = vmatpush2.msra.mxu0 0.0
  %2270 = vmatprep.subr.mxu0 0.0
  %2271 = vmatpush2.msra.mxu0 0.0
  %2272 = vmatprep.subr.mxu0 0.0
  %2273 = vmatpush2.msra.mxu0 0.0
  %2274 = vmatprep.subr.mxu0 0.0
  %2275 = vmatpush2.msra.mxu0 0.0
  %2276 = vmatprep.subr.mxu0 0.0
  %2277 = vmatpush2.msra.mxu0 0.0
  %2278 = vmatprep.subr.mxu0 0.0
  %2279 = vmatpush2.msra.mxu0 0.0
  %2280 = vmatprep.subr.mxu0 0.0
  %2281 = vmatpush2.msra.mxu0 0.0
  %2282 = vmatprep.subr.mxu0 0.0
  %2283 = vmatpush2.msra.mxu0 0.0
  %2284 = vmatprep.subr.mxu0 0.0
  %2285 = vmatpush2.msra.mxu0 %v124
  %2286 = vmatprep.subr.mxu0 0.0
  %2287 = vmatpush2.msra.mxu0 %v123
  %2288 = vmatprep.subr.mxu0 0.0
  %2289 = vmatpush2.msra.mxu0 %v122
  %2290 = vmatprep.subr.mxu0 0.0
  %2291 = vmatpush2.msra.mxu0 %v121
  %2292 = vmatprep.mubr.f32.mxu0 %v2226
  %2293 = vmatmul.mubr.f32.gmra.mxu0 %v1708
  %v2294 = vpop.f32.mrf.mxu0
  %v2295 = vadd.f32 0.0, %v2294
  %v2296 = vpop.f32.mrf.mxu0
  %2297 = vdwg.mxu0
  %2299 = vset.pattern.permute.xlu0 0
  %2300 = vperm.xlu0 %2299, %v2224
  %v2301 = vpop.permute.xlu0 %2300
  %v2303 = vmul.f32 %v2301, %v2295
  %v2305 = vsel %vm1851, %v1850, 0
  %2307 = vmatprep.subr.mxu0 0.0
  %2308 = vmatpush1.msra.mxu0 0.0
  %2309 = vmatprep.subr.mxu0 0.0
  %2310 = vmatpush1.msra.mxu0 0.0
  %2311 = vmatprep.subr.mxu0 0.0
  %2312 = vmatpush1.msra.mxu0 0.0
  %2313 = vmatprep.subr.mxu0 0.0
  %2314 = vmatpush1.msra.mxu0 0.0
  %2315 = vmatprep.subr.mxu0 0.0
  %2316 = vmatpush1.msra.mxu0 0.0
  %2317 = vmatprep.subr.mxu0 0.0
  %2318 = vmatpush1.msra.mxu0 0.0
  %2319 = vmatprep.subr.mxu0 0.0
  %2320 = vmatpush1.msra.mxu0 0.0
  %2321 = vmatprep.subr.mxu0 0.0
  %2322 = vmatpush1.msra.mxu0 0.0
  %2323 = vmatprep.subr.mxu0 0.0
  %2324 = vmatpush1.msra.mxu0 0.0
  %2325 = vmatprep.subr.mxu0 0.0
  %2326 = vmatpush1.msra.mxu0 0.0
  %2327 = vmatprep.subr.mxu0 0.0
  %2328 = vmatpush1.msra.mxu0 0.0
  %2329 = vmatprep.subr.mxu0 0.0
  %2330 = vmatpush1.msra.mxu0 0.0
  %2331 = vmatprep.subr.mxu0 0.0
  %2332 = vmatpush1.msra.mxu0 0.0
  %2333 = vmatprep.subr.mxu0 0.0
  %2334 = vmatpush1.msra.mxu0 0.0
  %2335 = vmatprep.subr.mxu0 0.0
  %2336 = vmatpush1.msra.mxu0 0.0
  %2337 = vmatprep.subr.mxu0 0.0
  %2338 = vmatpush1.msra.mxu0 %v2303
  %2339 = vmatprep.subr.mxu0 0.0
  %2340 = vmatpush2.msra.mxu0 0.0
  %2341 = vmatprep.subr.mxu0 0.0
  %2342 = vmatpush2.msra.mxu0 0.0
  %2343 = vmatprep.subr.mxu0 0.0
  %2344 = vmatpush2.msra.mxu0 0.0
  %2345 = vmatprep.subr.mxu0 0.0
  %2346 = vmatpush2.msra.mxu0 0.0
  %2347 = vmatprep.subr.mxu0 0.0
  %2348 = vmatpush2.msra.mxu0 0.0
  %2349 = vmatprep.subr.mxu0 0.0
  %2350 = vmatpush2.msra.mxu0 0.0
  %2351 = vmatprep.subr.mxu0 0.0
  %2352 = vmatpush2.msra.mxu0 0.0
  %2353 = vmatprep.subr.mxu0 0.0
  %2354 = vmatpush2.msra.mxu0 0.0
  %2355 = vmatprep.subr.mxu0 0.0
  %2356 = vmatpush2.msra.mxu0 0.0
  %2357 = vmatprep.subr.mxu0 0.0
  %2358 = vmatpush2.msra.mxu0 0.0
  %2359 = vmatprep.subr.mxu0 0.0
  %2360 = vmatpush2.msra.mxu0 0.0
  %2361 = vmatprep.subr.mxu0 0.0
  %2362 = vmatpush2.msra.mxu0 0.0
  %2363 = vmatprep.subr.mxu0 0.0
  %2364 = vmatpush2.msra.mxu0 0.0
  %2365 = vmatprep.subr.mxu0 0.0
  %2366 = vmatpush2.msra.mxu0 0.0
  %2367 = vmatprep.subr.mxu0 0.0
  %2368 = vmatpush2.msra.mxu0 0.0
  %2369 = vmatprep.subr.mxu0 0.0
  %2370 = vmatpush2.msra.mxu0 0.0
  %2371 = vmatprep.mubr.f32.mxu0 0.0
  %2372 = vmatmul.mubr.f32.gmra.mxu0 %v2305
  %v2373 = vpop.f32.mrf.mxu0
  %v2374 = vadd.f32 0.0, %v2373
  %v2375 = vpop.f32.mrf.mxu0
  %2376 = vdwg.mxu0
  %2378 = vset.pattern.permute.xlu0 0
  %2379 = vperm.xlu0 %2378, %v2221
  %v2380 = vpop.permute.xlu0 %2379
  %v2382 = vmul.f32 %v2380, %v2374
  %v2383 = vadd.f32 %v2382, %v2303
  %v2384 = vmul.f32 %v2301, %v2383
  %v2385 = vadd.f32 %v2384, %v100
  %v2386 = vmax.f32 %v2385, 0.0
  %v2387 = vmul.f32 %v2386, %v1770
  %v2388 = vsel %vm338, %v2387, 0.0
  %2389 = vadd.xlane.f32.xlu0 %v2388
  %v2390 = vpop.xlane.xlu0 %2389
  %v2391 = vmul.f32 %v2387, %v2386
  %v2392 = vsel %vm338, %v2391, 0.0
  %2393 = vadd.xlane.f32.xlu0 %v2392
  %v2394 = vpop.xlane.xlu0 %2393
  %2395 = vset.pattern.permute.xlu0 1
  %2396 = vperm.xlu0 %2395, %v2224
  %v2397 = vpop.permute.xlu0 %2396
  %v2399 = vmul.f32 %v2397, %v2295
  %v2401 = vsel %vm1851, %v1939, 0
  %2403 = vmatprep.subr.mxu0 0.0
  %2404 = vmatpush1.msra.mxu0 0.0
  %2405 = vmatprep.subr.mxu0 0.0
  %2406 = vmatpush1.msra.mxu0 0.0
  %2407 = vmatprep.subr.mxu0 0.0
  %2408 = vmatpush1.msra.mxu0 0.0
  %2409 = vmatprep.subr.mxu0 0.0
  %2410 = vmatpush1.msra.mxu0 0.0
  %2411 = vmatprep.subr.mxu0 0.0
  %2412 = vmatpush1.msra.mxu0 0.0
  %2413 = vmatprep.subr.mxu0 0.0
  %2414 = vmatpush1.msra.mxu0 0.0
  %2415 = vmatprep.subr.mxu0 0.0
  %2416 = vmatpush1.msra.mxu0 0.0
  %2417 = vmatprep.subr.mxu0 0.0
  %2418 = vmatpush1.msra.mxu0 0.0
  %2419 = vmatprep.subr.mxu0 0.0
  %2420 = vmatpush1.msra.mxu0 0.0
  %2421 = vmatprep.subr.mxu0 0.0
  %2422 = vmatpush1.msra.mxu0 0.0
  %2423 = vmatprep.subr.mxu0 0.0
  %2424 = vmatpush1.msra.mxu0 0.0
  %2425 = vmatprep.subr.mxu0 0.0
  %2426 = vmatpush1.msra.mxu0 0.0
  %2427 = vmatprep.subr.mxu0 0.0
  %2428 = vmatpush1.msra.mxu0 0.0
  %2429 = vmatprep.subr.mxu0 0.0
  %2430 = vmatpush1.msra.mxu0 0.0
  %2431 = vmatprep.subr.mxu0 0.0
  %2432 = vmatpush1.msra.mxu0 0.0
  %2433 = vmatprep.subr.mxu0 0.0
  %2434 = vmatpush1.msra.mxu0 %v2399
  %2435 = vmatprep.subr.mxu0 0.0
  %2436 = vmatpush2.msra.mxu0 0.0
  %2437 = vmatprep.subr.mxu0 0.0
  %2438 = vmatpush2.msra.mxu0 0.0
  %2439 = vmatprep.subr.mxu0 0.0
  %2440 = vmatpush2.msra.mxu0 0.0
  %2441 = vmatprep.subr.mxu0 0.0
  %2442 = vmatpush2.msra.mxu0 0.0
  %2443 = vmatprep.subr.mxu0 0.0
  %2444 = vmatpush2.msra.mxu0 0.0
  %2445 = vmatprep.subr.mxu0 0.0
  %2446 = vmatpush2.msra.mxu0 0.0
  %2447 = vmatprep.subr.mxu0 0.0
  %2448 = vmatpush2.msra.mxu0 0.0
  %2449 = vmatprep.subr.mxu0 0.0
  %2450 = vmatpush2.msra.mxu0 0.0
  %2451 = vmatprep.subr.mxu0 0.0
  %2452 = vmatpush2.msra.mxu0 0.0
  %2453 = vmatprep.subr.mxu0 0.0
  %2454 = vmatpush2.msra.mxu0 0.0
  %2455 = vmatprep.subr.mxu0 0.0
  %2456 = vmatpush2.msra.mxu0 0.0
  %2457 = vmatprep.subr.mxu0 0.0
  %2458 = vmatpush2.msra.mxu0 0.0
  %2459 = vmatprep.subr.mxu0 0.0
  %2460 = vmatpush2.msra.mxu0 0.0
  %2461 = vmatprep.subr.mxu0 0.0
  %2462 = vmatpush2.msra.mxu0 0.0
  %2463 = vmatprep.subr.mxu0 0.0
  %2464 = vmatpush2.msra.mxu0 0.0
  %2465 = vmatprep.subr.mxu0 0.0
  %2466 = vmatpush2.msra.mxu0 0.0
  %2467 = vmatprep.mubr.f32.mxu0 0.0
  %2468 = vmatmul.mubr.f32.gmra.mxu0 %v2401
  %v2469 = vpop.f32.mrf.mxu0
  %v2470 = vadd.f32 0.0, %v2469
  %v2471 = vpop.f32.mrf.mxu0
  %2472 = vdwg.mxu0
  %2473 = vset.pattern.permute.xlu0 1
  %2474 = vperm.xlu0 %2473, %v2221
  %v2475 = vpop.permute.xlu0 %2474
  %v2477 = vmul.f32 %v2475, %v2470
  %v2478 = vadd.f32 %v2477, %v2399
  %v2479 = vmul.f32 %v2397, %v2478
  %v2480 = vadd.f32 %v2479, %v100
  %v2481 = vmax.f32 %v2480, 0.0
  %v2482 = vmul.f32 %v2481, %v1859
  %v2483 = vsel %vm338, %v2482, 0.0
  %2484 = vadd.xlane.f32.xlu0 %v2483
  %v2485 = vpop.xlane.xlu0 %2484
  %v2486 = vmul.f32 %v2482, %v2481
  %v2487 = vsel %vm338, %v2486, 0.0
  %2488 = vadd.xlane.f32.xlu0 %v2487
  %v2489 = vpop.xlane.xlu0 %2488
  %2490 = vset.pattern.permute.xlu0 2
  %2491 = vperm.xlu0 %2490, %v2224
  %v2492 = vpop.permute.xlu0 %2491
  %v2494 = vmul.f32 %v2492, %v2295
  %v2496 = vsel %vm1851, %v2027, 0
  %2498 = vmatprep.subr.mxu0 0.0
  %2499 = vmatpush1.msra.mxu0 0.0
  %2500 = vmatprep.subr.mxu0 0.0
  %2501 = vmatpush1.msra.mxu0 0.0
  %2502 = vmatprep.subr.mxu0 0.0
  %2503 = vmatpush1.msra.mxu0 0.0
  %2504 = vmatprep.subr.mxu0 0.0
  %2505 = vmatpush1.msra.mxu0 0.0
  %2506 = vmatprep.subr.mxu0 0.0
  %2507 = vmatpush1.msra.mxu0 0.0
  %2508 = vmatprep.subr.mxu0 0.0
  %2509 = vmatpush1.msra.mxu0 0.0
  %2510 = vmatprep.subr.mxu0 0.0
  %2511 = vmatpush1.msra.mxu0 0.0
  %2512 = vmatprep.subr.mxu0 0.0
  %2513 = vmatpush1.msra.mxu0 0.0
  %2514 = vmatprep.subr.mxu0 0.0
  %2515 = vmatpush1.msra.mxu0 0.0
  %2516 = vmatprep.subr.mxu0 0.0
  %2517 = vmatpush1.msra.mxu0 0.0
  %2518 = vmatprep.subr.mxu0 0.0
  %2519 = vmatpush1.msra.mxu0 0.0
  %2520 = vmatprep.subr.mxu0 0.0
  %2521 = vmatpush1.msra.mxu0 0.0
  %2522 = vmatprep.subr.mxu0 0.0
  %2523 = vmatpush1.msra.mxu0 0.0
  %2524 = vmatprep.subr.mxu0 0.0
  %2525 = vmatpush1.msra.mxu0 0.0
  %2526 = vmatprep.subr.mxu0 0.0
  %2527 = vmatpush1.msra.mxu0 0.0
  %2528 = vmatprep.subr.mxu0 0.0
  %2529 = vmatpush1.msra.mxu0 %v2494
  %2530 = vmatprep.subr.mxu0 0.0
  %2531 = vmatpush2.msra.mxu0 0.0
  %2532 = vmatprep.subr.mxu0 0.0
  %2533 = vmatpush2.msra.mxu0 0.0
  %2534 = vmatprep.subr.mxu0 0.0
  %2535 = vmatpush2.msra.mxu0 0.0
  %2536 = vmatprep.subr.mxu0 0.0
  %2537 = vmatpush2.msra.mxu0 0.0
  %2538 = vmatprep.subr.mxu0 0.0
  %2539 = vmatpush2.msra.mxu0 0.0
  %2540 = vmatprep.subr.mxu0 0.0
  %2541 = vmatpush2.msra.mxu0 0.0
  %2542 = vmatprep.subr.mxu0 0.0
  %2543 = vmatpush2.msra.mxu0 0.0
  %2544 = vmatprep.subr.mxu0 0.0
  %2545 = vmatpush2.msra.mxu0 0.0
  %2546 = vmatprep.subr.mxu0 0.0
  %2547 = vmatpush2.msra.mxu0 0.0
  %2548 = vmatprep.subr.mxu0 0.0
  %2549 = vmatpush2.msra.mxu0 0.0
  %2550 = vmatprep.subr.mxu0 0.0
  %2551 = vmatpush2.msra.mxu0 0.0
  %2552 = vmatprep.subr.mxu0 0.0
  %2553 = vmatpush2.msra.mxu0 0.0
  %2554 = vmatprep.subr.mxu0 0.0
  %2555 = vmatpush2.msra.mxu0 0.0
  %2556 = vmatprep.subr.mxu0 0.0
  %2557 = vmatpush2.msra.mxu0 0.0
  %2558 = vmatprep.subr.mxu0 0.0
  %2559 = vmatpush2.msra.mxu0 0.0
  %2560 = vmatprep.subr.mxu0 0.0
  %2561 = vmatpush2.msra.mxu0 0.0
  %2562 = vmatprep.mubr.f32.mxu0 0.0
  %2563 = vmatmul.mubr.f32.gmra.mxu0 %v2496
  %v2564 = vpop.f32.mrf.mxu0
  %v2565 = vadd.f32 0.0, %v2564
  %v2566 = vpop.f32.mrf.mxu0
  %2567 = vdwg.mxu0
  %2568 = vset.pattern.permute.xlu0 2
  %2569 = vperm.xlu0 %2568, %v2221
  %v2570 = vpop.permute.xlu0 %2569
  %v2572 = vmul.f32 %v2570, %v2565
  %v2573 = vadd.f32 %v2572, %v2494
  %v2574 = vmul.f32 %v2492, %v2573
  %v2575 = vadd.f32 %v2574, %v100
  %v2576 = vmax.f32 %v2575, 0.0
  %v2577 = vmul.f32 %v2576, %v1947
  %v2578 = vsel %vm338, %v2577, 0.0
  %2579 = vadd.xlane.f32.xlu0 %v2578
  %v2580 = vpop.xlane.xlu0 %2579
  %v2581 = vmul.f32 %v2577, %v2576
  %v2582 = vsel %vm338, %v2581, 0.0
  %2583 = vadd.xlane.f32.xlu0 %v2582
  %v2584 = vpop.xlane.xlu0 %2583
  %2585 = vset.pattern.permute.xlu0 3
  %2586 = vperm.xlu0 %2585, %v2224
  %v2587 = vpop.permute.xlu0 %2586
  %v2589 = vmul.f32 %v2587, %v2295
  %v2591 = vsel %vm1851, %v2115, 0
  %2593 = vmatprep.subr.mxu0 0.0
  %2594 = vmatpush1.msra.mxu0 0.0
  %2595 = vmatprep.subr.mxu0 0.0
  %2596 = vmatpush1.msra.mxu0 0.0
  %2597 = vmatprep.subr.mxu0 0.0
  %2598 = vmatpush1.msra.mxu0 0.0
  %2599 = vmatprep.subr.mxu0 0.0
  %2600 = vmatpush1.msra.mxu0 0.0
  %2601 = vmatprep.subr.mxu0 0.0
  %2602 = vmatpush1.msra.mxu0 0.0
  %2603 = vmatprep.subr.mxu0 0.0
  %2604 = vmatpush1.msra.mxu0 0.0
  %2605 = vmatprep.subr.mxu0 0.0
  %2606 = vmatpush1.msra.mxu0 0.0
  %2607 = vmatprep.subr.mxu0 0.0
  %2608 = vmatpush1.msra.mxu0 0.0
  %2609 = vmatprep.subr.mxu0 0.0
  %2610 = vmatpush1.msra.mxu0 0.0
  %2611 = vmatprep.subr.mxu0 0.0
  %2612 = vmatpush1.msra.mxu0 0.0
  %2613 = vmatprep.subr.mxu0 0.0
  %2614 = vmatpush1.msra.mxu0 0.0
  %2615 = vmatprep.subr.mxu0 0.0
  %2616 = vmatpush1.msra.mxu0 0.0
  %2617 = vmatprep.subr.mxu0 0.0
  %2618 = vmatpush1.msra.mxu0 0.0
  %2619 = vmatprep.subr.mxu0 0.0
  %2620 = vmatpush1.msra.mxu0 0.0
  %2621 = vmatprep.subr.mxu0 0.0
  %2622 = vmatpush1.msra.mxu0 0.0
  %2623 = vmatprep.subr.mxu0 0.0
  %2624 = vmatpush1.msra.mxu0 %v2589
  %2625 = vmatprep.subr.mxu0 0.0
  %2626 = vmatpush2.msra.mxu0 0.0
  %2627 = vmatprep.subr.mxu0 0.0
  %2628 = vmatpush2.msra.mxu0 0.0
  %2629 = vmatprep.subr.mxu0 0.0
  %2630 = vmatpush2.msra.mxu0 0.0
  %2631 = vmatprep.subr.mxu0 0.0
  %2632 = vmatpush2.msra.mxu0 0.0
  %2633 = vmatprep.subr.mxu0 0.0
  %2634 = vmatpush2.msra.mxu0 0.0
  %2635 = vmatprep.subr.mxu0 0.0
  %2636 = vmatpush2.msra.mxu0 0.0
  %2637 = vmatprep.subr.mxu0 0.0
  %2638 = vmatpush2.msra.mxu0 0.0
  %2639 = vmatprep.subr.mxu0 0.0
  %2640 = vmatpush2.msra.mxu0 0.0
  %2641 = vmatprep.subr.mxu0 0.0
  %2642 = vmatpush2.msra.mxu0 0.0
  %2643 = vmatprep.subr.mxu0 0.0
  %2644 = vmatpush2.msra.mxu0 0.0
  %2645 = vmatprep.subr.mxu0 0.0
  %2646 = vmatpush2.msra.mxu0 0.0
  %2647 = vmatprep.subr.mxu0 0.0
  %2648 = vmatpush2.msra.mxu0 0.0
  %2649 = vmatprep.subr.mxu0 0.0
  %2650 = vmatpush2.msra.mxu0 0.0
  %2651 = vmatprep.subr.mxu0 0.0
  %2652 = vmatpush2.msra.mxu0 0.0
  %2653 = vmatprep.subr.mxu0 0.0
  %2654 = vmatpush2.msra.mxu0 0.0
  %2655 = vmatprep.subr.mxu0 0.0
  %2656 = vmatpush2.msra.mxu0 0.0
  %2657 = vmatprep.mubr.f32.mxu0 0.0
  %2658 = vmatmul.mubr.f32.gmra.mxu0 %v2591
  %v2659 = vpop.f32.mrf.mxu0
  %v2660 = vadd.f32 0.0, %v2659
  %v2661 = vpop.f32.mrf.mxu0
  %2662 = vdwg.mxu0
  %2663 = vset.pattern.permute.xlu0 3
  %2664 = vperm.xlu0 %2663, %v2221
  %v2665 = vpop.permute.xlu0 %2664
  %v2667 = vmul.f32 %v2665, %v2660
  %v2668 = vadd.f32 %v2667, %v2589
  %v2669 = vmul.f32 %v2587, %v2668
  %v2670 = vadd.f32 %v2669, %v100
  %v2671 = vmax.f32 %v2670, 0.0
  %v2672 = vmul.f32 %v2671, %v2035
  %v2673 = vsel %vm338, %v2672, 0.0
  %2674 = vadd.xlane.f32.xlu0 %v2673
  %v2675 = vpop.xlane.xlu0 %2674
  %v2676 = vmul.f32 %v2672, %v2671
  %v2677 = vsel %vm338, %v2676, 0.0
  %2678 = vadd.xlane.f32.xlu0 %v2677
  %v2679 = vpop.xlane.xlu0 %2678
  %2680 = vset.pattern.permute.xlu0 4
  %2681 = vperm.xlu0 %2680, %v2224
  %v2682 = vpop.permute.xlu0 %2681
  %v2684 = vmul.f32 %v2682, %v2295
  %v2686 = vsel %vm1851, %v2203, 0
  %2688 = vmatprep.subr.mxu0 0.0
  %2689 = vmatpush1.msra.mxu0 0.0
  %2690 = vmatprep.subr.mxu0 0.0
  %2691 = vmatpush1.msra.mxu0 0.0
  %2692 = vmatprep.subr.mxu0 0.0
  %2693 = vmatpush1.msra.mxu0 0.0
  %2694 = vmatprep.subr.mxu0 0.0
  %2695 = vmatpush1.msra.mxu0 0.0
  %2696 = vmatprep.subr.mxu0 0.0
  %2697 = vmatpush1.msra.mxu0 0.0
  %2698 = vmatprep.subr.mxu0 0.0
  %2699 = vmatpush1.msra.mxu0 0.0
  %2700 = vmatprep.subr.mxu0 0.0
  %2701 = vmatpush1.msra.mxu0 0.0
  %2702 = vmatprep.subr.mxu0 0.0
  %2703 = vmatpush1.msra.mxu0 0.0
  %2704 = vmatprep.subr.mxu0 0.0
  %2705 = vmatpush1.msra.mxu0 0.0
  %2706 = vmatprep.subr.mxu0 0.0
  %2707 = vmatpush1.msra.mxu0 0.0
  %2708 = vmatprep.subr.mxu0 0.0
  %2709 = vmatpush1.msra.mxu0 0.0
  %2710 = vmatprep.subr.mxu0 0.0
  %2711 = vmatpush1.msra.mxu0 0.0
  %2712 = vmatprep.subr.mxu0 0.0
  %2713 = vmatpush1.msra.mxu0 0.0
  %2714 = vmatprep.subr.mxu0 0.0
  %2715 = vmatpush1.msra.mxu0 0.0
  %2716 = vmatprep.subr.mxu0 0.0
  %2717 = vmatpush1.msra.mxu0 0.0
  %2718 = vmatprep.subr.mxu0 0.0
  %2719 = vmatpush1.msra.mxu0 %v2684
  %2720 = vmatprep.subr.mxu0 0.0
  %2721 = vmatpush2.msra.mxu0 0.0
  %2722 = vmatprep.subr.mxu0 0.0
  %2723 = vmatpush2.msra.mxu0 0.0
  %2724 = vmatprep.subr.mxu0 0.0
  %2725 = vmatpush2.msra.mxu0 0.0
  %2726 = vmatprep.subr.mxu0 0.0
  %2727 = vmatpush2.msra.mxu0 0.0
  %2728 = vmatprep.subr.mxu0 0.0
  %2729 = vmatpush2.msra.mxu0 0.0
  %2730 = vmatprep.subr.mxu0 0.0
  %2731 = vmatpush2.msra.mxu0 0.0
  %2732 = vmatprep.subr.mxu0 0.0
  %2733 = vmatpush2.msra.mxu0 0.0
  %2734 = vmatprep.subr.mxu0 0.0
  %2735 = vmatpush2.msra.mxu0 0.0
  %2736 = vmatprep.subr.mxu0 0.0
  %2737 = vmatpush2.msra.mxu0 0.0
  %2738 = vmatprep.subr.mxu0 0.0
  %2739 = vmatpush2.msra.mxu0 0.0
  %2740 = vmatprep.subr.mxu0 0.0
  %2741 = vmatpush2.msra.mxu0 0.0
  %2742 = vmatprep.subr.mxu0 0.0
  %2743 = vmatpush2.msra.mxu0 0.0
  %2744 = vmatprep.subr.mxu0 0.0
  %2745 = vmatpush2.msra.mxu0 0.0
  %2746 = vmatprep.subr.mxu0 0.0
  %2747 = vmatpush2.msra.mxu0 0.0
  %2748 = vmatprep.subr.mxu0 0.0
  %2749 = vmatpush2.msra.mxu0 0.0
  %2750 = vmatprep.subr.mxu0 0.0
  %2751 = vmatpush2.msra.mxu0 0.0
  %2752 = vmatprep.mubr.f32.mxu0 0.0
  %2753 = vmatmul.mubr.f32.gmra.mxu0 %v2686
  %v2754 = vpop.f32.mrf.mxu0
  %v2755 = vadd.f32 0.0, %v2754
  %v2756 = vpop.f32.mrf.mxu0
  %2757 = vdwg.mxu0
  %2758 = vset.pattern.permute.xlu0 4
  %2759 = vperm.xlu0 %2758, %v2221
  %v2760 = vpop.permute.xlu0 %2759
  %v2762 = vmul.f32 %v2760, %v2755
  %v2763 = vadd.f32 %v2762, %v2684
  %v2764 = vmul.f32 %v2682, %v2763
  %v2765 = vadd.f32 %v2764, %v100
  %v2766 = vmax.f32 %v2765, 0.0
  %v2767 = vmul.f32 %v2766, %v2123
  %v2768 = vsel %vm338, %v2767, 0.0
  %2769 = vadd.xlane.f32.xlu0 %v2768
  %v2770 = vpop.xlane.xlu0 %2769
  %v2771 = vmul.f32 %v2767, %v2766
  %v2772 = vsel %vm338, %v2771, 0.0
  %2773 = vadd.xlane.f32.xlu0 %v2772
  %v2774 = vpop.xlane.xlu0 %2773
  %v2775 = vsel %vm2207, %v2390, %v2485
  %v2776 = vsel %vm1579, %v2775, %v2580
  %v2777 = vsel %vm254, %v2776, %v2675
  %v2778 = vsel %vm2211, %v2777, %v2770
  %v2779 = vsel %vm1626, %v2778, 0.0
  %v2780 = vrot.slane %v2779, 4
  %v2781 = vadd.f32 %v2779, %v2780
  %v2782 = vrot.slane %v2781, 2
  %v2783 = vadd.f32 %v2781, %v2782
  %v2784 = vrot.slane %v2783, 1
  %v2785 = vadd.f32 %v2783, %v2784
  %v2786 = vsel %vm2207, %v2394, %v2489
  %v2787 = vsel %vm1579, %v2786, %v2584
  %v2788 = vsel %vm254, %v2787, %v2679
  %v2789 = vsel %vm2211, %v2788, %v2774
  %v2790 = vsel %vm1626, %v2789, 0.0
  %v2791 = vrot.slane %v2790, 4
  %v2792 = vadd.f32 %v2790, %v2791
  %v2793 = vrot.slane %v2792, 2
  %v2794 = vadd.f32 %v2792, %v2793
  %v2795 = vrot.slane %v2794, 1
  %v2796 = vadd.f32 %v2794, %v2795
  %v2797 = vsel %vm1626, %v1736, 0.0
  %v2798 = vrot.slane %v2797, 4
  %v2799 = vadd.f32 %v2797, %v2798
  %v2800 = vrot.slane %v2799, 2
  %v2801 = vadd.f32 %v2799, %v2800
  %v2802 = vrot.slane %v2801, 1
  %v2803 = vadd.f32 %v2801, %v2802
  %v2804 = vmax.f32 %v2803, 1.0
  %v2805 = vmul.f32 %v2804, 32.0
  %v2806 = vrcp.pop %v2805
  %v2807 = vmul.f32 %v2785, %v2806
  %v2808 = vmul.f32 %v2796, %v2806
  %v2809 = vmul.f32 %v2807, %v2807
  %v2810 = vsub.f32 %v2808, %v2809
  %v2811 = vmax.f32 %v2810, 0.0
  %v2812 = vadd.f32 %v2811, 1e-05
  %v2813 = vrsqrt.pop %v2812
  %2815 = vset.pattern.permute.xlu0 0
  %2816 = vperm.xlu0 %2815, %v2807
  %v2817 = vpop.permute.xlu0 %2816
  %v2819 = vsub.f32 %v2386, %v2817
  %2821 = vset.pattern.permute.xlu0 0
  %2822 = vperm.xlu0 %2821, %v2813
  %v2823 = vpop.permute.xlu0 %2822
  %v2825 = vmul.f32 %v2819, %v2823
  %vm2826 = vcmp.eq.f32.partialorder %v1741, 0.0
  %v2827 = vsel %vm2826, 1, 0
  %v2828 = vcvt.s32.f32 %v2827
  %v2829 = vmul.f32 %v2828, %v2825
  %v2830 = vadd.f32 %v2829, 0.0
  %vm2831 = vcmp.eq.f32.partialorder %v1748, 0.0
  %v2832 = vsel %vm2831, 1, 0
  %v2833 = vcvt.s32.f32 %v2832
  %v2834 = vmul.f32 %v2833, %v2825
  %v2835 = vadd.f32 %v2834, 0.0
  %2836 = vset.pattern.permute.xlu0 1
  %2837 = vperm.xlu0 %2836, %v2807
  %v2838 = vpop.permute.xlu0 %2837
  %v2840 = vsub.f32 %v2481, %v2838
  %2841 = vset.pattern.permute.xlu0 1
  %2842 = vperm.xlu0 %2841, %v2813
  %v2843 = vpop.permute.xlu0 %2842
  %v2845 = vmul.f32 %v2840, %v2843
  %vm2846 = vcmp.eq.f32.partialorder %v1741, 1.0
  %v2847 = vsel %vm2846, 1, 0
  %v2848 = vcvt.s32.f32 %v2847
  %v2849 = vmul.f32 %v2848, %v2845
  %v2850 = vadd.f32 %v2830, %v2849
  %vm2851 = vcmp.eq.f32.partialorder %v1748, 1.0
  %v2852 = vsel %vm2851, 1, 0
  %v2853 = vcvt.s32.f32 %v2852
  %v2854 = vmul.f32 %v2853, %v2845
  %v2855 = vadd.f32 %v2835, %v2854
  %2856 = vset.pattern.permute.xlu0 2
  %2857 = vperm.xlu0 %2856, %v2807
  %v2858 = vpop.permute.xlu0 %2857
  %v2860 = vsub.f32 %v2576, %v2858
  %2861 = vset.pattern.permute.xlu0 2
  %2862 = vperm.xlu0 %2861, %v2813
  %v2863 = vpop.permute.xlu0 %2862
  %v2865 = vmul.f32 %v2860, %v2863
  %vm2866 = vcmp.eq.f32.partialorder %v1741, 2.0
  %v2867 = vsel %vm2866, 1, 0
  %v2868 = vcvt.s32.f32 %v2867
  %v2869 = vmul.f32 %v2868, %v2865
  %v2870 = vadd.f32 %v2850, %v2869
  %vm2871 = vcmp.eq.f32.partialorder %v1748, 2.0
  %v2872 = vsel %vm2871, 1, 0
  %v2873 = vcvt.s32.f32 %v2872
  %v2874 = vmul.f32 %v2873, %v2865
  %v2875 = vadd.f32 %v2855, %v2874
  %2876 = vset.pattern.permute.xlu0 3
  %2877 = vperm.xlu0 %2876, %v2807
  %v2878 = vpop.permute.xlu0 %2877
  %v2880 = vsub.f32 %v2671, %v2878
  %2881 = vset.pattern.permute.xlu0 3
  %2882 = vperm.xlu0 %2881, %v2813
  %v2883 = vpop.permute.xlu0 %2882
  %v2885 = vmul.f32 %v2880, %v2883
  %vm2886 = vcmp.eq.f32.partialorder %v1741, 3.0
  %v2887 = vsel %vm2886, 1, 0
  %v2888 = vcvt.s32.f32 %v2887
  %v2889 = vmul.f32 %v2888, %v2885
  %v2890 = vadd.f32 %v2870, %v2889
  %vm2891 = vcmp.eq.f32.partialorder %v1748, 3.0
  %v2892 = vsel %vm2891, 1, 0
  %v2893 = vcvt.s32.f32 %v2892
  %v2894 = vmul.f32 %v2893, %v2885
  %v2895 = vadd.f32 %v2875, %v2894
  %2896 = vset.pattern.permute.xlu0 4
  %2897 = vperm.xlu0 %2896, %v2807
  %v2898 = vpop.permute.xlu0 %2897
  %v2900 = vsub.f32 %v2766, %v2898
  %2901 = vset.pattern.permute.xlu0 4
  %2902 = vperm.xlu0 %2901, %v2813
  %v2903 = vpop.permute.xlu0 %2902
  %v2905 = vmul.f32 %v2900, %v2903
  %vm2906 = vcmp.eq.f32.partialorder %v1741, 4.0
  %v2907 = vsel %vm2906, 1, 0
  %v2908 = vcvt.s32.f32 %v2907
  %v2909 = vmul.f32 %v2908, %v2905
  %v2910 = vadd.f32 %v2890, %v2909
  %vm2911 = vcmp.eq.f32.partialorder %v1748, 4.0
  %v2912 = vsel %vm2911, 1, 0
  %v2913 = vcvt.s32.f32 %v2912
  %v2914 = vmul.f32 %v2913, %v2905
  %v2915 = vadd.f32 %v2895, %v2914
  %2916 = vmatprep.subr.mxu0 0.0
  %2917 = vmatpush1.msra.mxu0 %v140
  %2918 = vmatprep.subr.mxu0 0.0
  %2919 = vmatpush1.msra.mxu0 %v139
  %2920 = vmatprep.subr.mxu0 0.0
  %2921 = vmatpush1.msra.mxu0 %v138
  %2922 = vmatprep.subr.mxu0 0.0
  %2923 = vmatpush1.msra.mxu0 %v137
  %2924 = vmatprep.subr.mxu0 0.0
  %2925 = vmatpush1.msra.mxu0 %v136
  %2926 = vmatprep.subr.mxu0 0.0
  %2927 = vmatpush1.msra.mxu0 %v135
  %2928 = vmatprep.subr.mxu0 0.0
  %2929 = vmatpush1.msra.mxu0 %v134
  %2930 = vmatprep.subr.mxu0 0.0
  %2931 = vmatpush1.msra.mxu0 %v133
  %2932 = vmatprep.subr.mxu0 0.0
  %2933 = vmatpush1.msra.mxu0 %v132
  %2934 = vmatprep.subr.mxu0 0.0
  %2935 = vmatpush1.msra.mxu0 %v131
  %2936 = vmatprep.subr.mxu0 0.0
  %2937 = vmatpush1.msra.mxu0 %v130
  %2938 = vmatprep.subr.mxu0 0.0
  %2939 = vmatpush1.msra.mxu0 %v129
  %2940 = vmatprep.subr.mxu0 0.0
  %2941 = vmatpush1.msra.mxu0 %v128
  %2942 = vmatprep.subr.mxu0 0.0
  %2943 = vmatpush1.msra.mxu0 %v127
  %2944 = vmatprep.subr.mxu0 0.0
  %2945 = vmatpush1.msra.mxu0 %v126
  %2946 = vmatprep.subr.mxu0 0.0
  %2947 = vmatpush1.msra.mxu0 %v125
  %2948 = vmatprep.subr.mxu0 0.0
  %2949 = vmatpush2.msra.mxu0 0.0
  %2950 = vmatprep.subr.mxu0 0.0
  %2951 = vmatpush2.msra.mxu0 0.0
  %2952 = vmatprep.subr.mxu0 0.0
  %2953 = vmatpush2.msra.mxu0 0.0
  %2954 = vmatprep.subr.mxu0 0.0
  %2955 = vmatpush2.msra.mxu0 0.0
  %2956 = vmatprep.subr.mxu0 0.0
  %2957 = vmatpush2.msra.mxu0 0.0
  %2958 = vmatprep.subr.mxu0 0.0
  %2959 = vmatpush2.msra.mxu0 0.0
  %2960 = vmatprep.subr.mxu0 0.0
  %2961 = vmatpush2.msra.mxu0 0.0
  %2962 = vmatprep.subr.mxu0 0.0
  %2963 = vmatpush2.msra.mxu0 0.0
  %2964 = vmatprep.subr.mxu0 0.0
  %2965 = vmatpush2.msra.mxu0 0.0
  %2966 = vmatprep.subr.mxu0 0.0
  %2967 = vmatpush2.msra.mxu0 0.0
  %2968 = vmatprep.subr.mxu0 0.0
  %2969 = vmatpush2.msra.mxu0 0.0
  %2970 = vmatprep.subr.mxu0 0.0
  %2971 = vmatpush2.msra.mxu0 0.0
  %2972 = vmatprep.subr.mxu0 0.0
  %2973 = vmatpush2.msra.mxu0 %v144
  %2974 = vmatprep.subr.mxu0 0.0
  %2975 = vmatpush2.msra.mxu0 %v143
  %2976 = vmatprep.subr.mxu0 0.0
  %2977 = vmatpush2.msra.mxu0 %v142
  %2978 = vmatprep.subr.mxu0 0.0
  %2979 = vmatpush2.msra.mxu0 %v141
  %2980 = vmatprep.mubr.f32.mxu0 %v2226
  %2981 = vmatmul.mubr.f32.gmra.mxu0 %v1708
  %v2982 = vpop.f32.mrf.mxu0
  %v2983 = vadd.f32 %v101, %v2982
  %v2984 = vpop.f32.mrf.mxu0
  %2985 = vdwg.mxu0
  %v2986 = vld [vmem:[%s2 + $0x140] sm:$0xff]
  %v2987 = vld [vmem:[%s2 + $0x148] sm:$0xff]
  %v2988 = vld [vmem:[%s2 + $0x150] sm:$0xff]
  %v2989 = vld [vmem:[%s2 + $0x158] sm:$0xff]
  %v2991 = vsel %vm338, %v2910, 0
  %2993 = vmatprep.subr.mxu0 0.0
  %2994 = vmatpush1.msra.mxu0 0.0
  %2995 = vmatprep.subr.mxu0 0.0
  %2996 = vmatpush1.msra.mxu0 0.0
  %2997 = vmatprep.subr.mxu0 0.0
  %2998 = vmatpush1.msra.mxu0 0.0
  %2999 = vmatprep.subr.mxu0 0.0
  %3000 = vmatpush1.msra.mxu0 0.0
  %3001 = vmatprep.subr.mxu0 0.0
  %3002 = vmatpush1.msra.mxu0 0.0
  %3003 = vmatprep.subr.mxu0 0.0
  %3004 = vmatpush1.msra.mxu0 0.0
  %3005 = vmatprep.subr.mxu0 0.0
  %3006 = vmatpush1.msra.mxu0 0.0
  %3007 = vmatprep.subr.mxu0 0.0
  %3008 = vmatpush1.msra.mxu0 0.0
  %3009 = vmatprep.subr.mxu0 0.0
  %3010 = vmatpush1.msra.mxu0 0.0
  %3011 = vmatprep.subr.mxu0 0.0
  %3012 = vmatpush1.msra.mxu0 0.0
  %3013 = vmatprep.subr.mxu0 0.0
  %3014 = vmatpush1.msra.mxu0 0.0
  %3015 = vmatprep.subr.mxu0 0.0
  %3016 = vmatpush1.msra.mxu0 0.0
  %3017 = vmatprep.subr.mxu0 0.0
  %3018 = vmatpush1.msra.mxu0 %v2989
  %3019 = vmatprep.subr.mxu0 0.0
  %3020 = vmatpush1.msra.mxu0 %v2988
  %3021 = vmatprep.subr.mxu0 0.0
  %3022 = vmatpush1.msra.mxu0 %v2987
  %3023 = vmatprep.subr.mxu0 0.0
  %3024 = vmatpush1.msra.mxu0 %v2986
  %3025 = vmatprep.subr.mxu0 0.0
  %3026 = vmatpush2.msra.mxu0 0.0
  %3027 = vmatprep.subr.mxu0 0.0
  %3028 = vmatpush2.msra.mxu0 0.0
  %3029 = vmatprep.subr.mxu0 0.0
  %3030 = vmatpush2.msra.mxu0 0.0
  %3031 = vmatprep.subr.mxu0 0.0
  %3032 = vmatpush2.msra.mxu0 0.0
  %3033 = vmatprep.subr.mxu0 0.0
  %3034 = vmatpush2.msra.mxu0 0.0
  %3035 = vmatprep.subr.mxu0 0.0
  %3036 = vmatpush2.msra.mxu0 0.0
  %3037 = vmatprep.subr.mxu0 0.0
  %3038 = vmatpush2.msra.mxu0 0.0
  %3039 = vmatprep.subr.mxu0 0.0
  %3040 = vmatpush2.msra.mxu0 0.0
  %3041 = vmatprep.subr.mxu0 0.0
  %3042 = vmatpush2.msra.mxu0 0.0
  %3043 = vmatprep.subr.mxu0 0.0
  %3044 = vmatpush2.msra.mxu0 0.0
  %3045 = vmatprep.subr.mxu0 0.0
  %3046 = vmatpush2.msra.mxu0 0.0
  %3047 = vmatprep.subr.mxu0 0.0
  %3048 = vmatpush2.msra.mxu0 0.0
  %3049 = vmatprep.subr.mxu0 0.0
  %3050 = vmatpush2.msra.mxu0 0.0
  %3051 = vmatprep.subr.mxu0 0.0
  %3052 = vmatpush2.msra.mxu0 0.0
  %3053 = vmatprep.subr.mxu0 0.0
  %3054 = vmatpush2.msra.mxu0 0.0
  %3055 = vmatprep.subr.mxu0 0.0
  %3056 = vmatpush2.msra.mxu0 0.0
  %3057 = vmatprep.mubr.f32.mxu0 0.0
  %3058 = vmatmul.mubr.f32.gmra.mxu0 %v2991
  %v3059 = vpop.f32.mrf.mxu0
  %v3060 = vadd.f32 0.0, %v3059
  %v3061 = vpop.f32.mrf.mxu0
  %3062 = vdwg.mxu0
  %v3063 = vadd.f32 %v2983, %v3060
  %v3064 = vld [vmem:[%s2 + $0x160] sm:$0xff]
  %v3065 = vld [vmem:[%s2 + $0x168] sm:$0xff]
  %v3066 = vld [vmem:[%s2 + $0x170] sm:$0xff]
  %v3067 = vld [vmem:[%s2 + $0x178] sm:$0xff]
  %v3069 = vsel %vm338, %v2915, 0
  %3071 = vmatprep.subr.mxu0 0.0
  %3072 = vmatpush1.msra.mxu0 0.0
  %3073 = vmatprep.subr.mxu0 0.0
  %3074 = vmatpush1.msra.mxu0 0.0
  %3075 = vmatprep.subr.mxu0 0.0
  %3076 = vmatpush1.msra.mxu0 0.0
  %3077 = vmatprep.subr.mxu0 0.0
  %3078 = vmatpush1.msra.mxu0 0.0
  %3079 = vmatprep.subr.mxu0 0.0
  %3080 = vmatpush1.msra.mxu0 0.0
  %3081 = vmatprep.subr.mxu0 0.0
  %3082 = vmatpush1.msra.mxu0 0.0
  %3083 = vmatprep.subr.mxu0 0.0
  %3084 = vmatpush1.msra.mxu0 0.0
  %3085 = vmatprep.subr.mxu0 0.0
  %3086 = vmatpush1.msra.mxu0 0.0
  %3087 = vmatprep.subr.mxu0 0.0
  %3088 = vmatpush1.msra.mxu0 0.0
  %3089 = vmatprep.subr.mxu0 0.0
  %3090 = vmatpush1.msra.mxu0 0.0
  %3091 = vmatprep.subr.mxu0 0.0
  %3092 = vmatpush1.msra.mxu0 0.0
  %3093 = vmatprep.subr.mxu0 0.0
  %3094 = vmatpush1.msra.mxu0 0.0
  %3095 = vmatprep.subr.mxu0 0.0
  %3096 = vmatpush1.msra.mxu0 %v3067
  %3097 = vmatprep.subr.mxu0 0.0
  %3098 = vmatpush1.msra.mxu0 %v3066
  %3099 = vmatprep.subr.mxu0 0.0
  %3100 = vmatpush1.msra.mxu0 %v3065
  %3101 = vmatprep.subr.mxu0 0.0
  %3102 = vmatpush1.msra.mxu0 %v3064
  %3103 = vmatprep.subr.mxu0 0.0
  %3104 = vmatpush2.msra.mxu0 0.0
  %3105 = vmatprep.subr.mxu0 0.0
  %3106 = vmatpush2.msra.mxu0 0.0
  %3107 = vmatprep.subr.mxu0 0.0
  %3108 = vmatpush2.msra.mxu0 0.0
  %3109 = vmatprep.subr.mxu0 0.0
  %3110 = vmatpush2.msra.mxu0 0.0
  %3111 = vmatprep.subr.mxu0 0.0
  %3112 = vmatpush2.msra.mxu0 0.0
  %3113 = vmatprep.subr.mxu0 0.0
  %3114 = vmatpush2.msra.mxu0 0.0
  %3115 = vmatprep.subr.mxu0 0.0
  %3116 = vmatpush2.msra.mxu0 0.0
  %3117 = vmatprep.subr.mxu0 0.0
  %3118 = vmatpush2.msra.mxu0 0.0
  %3119 = vmatprep.subr.mxu0 0.0
  %3120 = vmatpush2.msra.mxu0 0.0
  %3121 = vmatprep.subr.mxu0 0.0
  %3122 = vmatpush2.msra.mxu0 0.0
  %3123 = vmatprep.subr.mxu0 0.0
  %3124 = vmatpush2.msra.mxu0 0.0
  %3125 = vmatprep.subr.mxu0 0.0
  %3126 = vmatpush2.msra.mxu0 0.0
  %3127 = vmatprep.subr.mxu0 0.0
  %3128 = vmatpush2.msra.mxu0 0.0
  %3129 = vmatprep.subr.mxu0 0.0
  %3130 = vmatpush2.msra.mxu0 0.0
  %3131 = vmatprep.subr.mxu0 0.0
  %3132 = vmatpush2.msra.mxu0 0.0
  %3133 = vmatprep.subr.mxu0 0.0
  %3134 = vmatpush2.msra.mxu0 0.0
  %3135 = vmatprep.mubr.f32.mxu0 0.0
  %3136 = vmatmul.mubr.f32.gmra.mxu0 %v3069
  %v3137 = vpop.f32.mrf.mxu0
  %v3138 = vadd.f32 0.0, %v3137
  %v3139 = vpop.f32.mrf.mxu0
  %3140 = vdwg.mxu0
  %v3141 = vadd.f32 %v3063, %v3138
  %v3142 = vmax.f32 %v3141, 0.0
  %v3143 = vsel %vm338, %v3142, 0.0
  %3144 = vadd.xlane.f32.xlu0 %v3143
  %v3145 = vpop.xlane.xlu0 %3144
  %v3146 = vmul.f32 %v3145, 0.03125
  %v3147 = vmul.f32 %v3142, %v3142
  %v3148 = vsel %vm338, %v3147, 0.0
  %3149 = vadd.xlane.f32.xlu0 %v3148
  %v3150 = vpop.xlane.xlu0 %3149
  %v3151 = vmul.f32 %v3150, 0.03125
  %v3152 = vmul.f32 %v3146, %v3146
  %v3153 = vsub.f32 %v3151, %v3152
  %v3154 = vmax.f32 %v3153, 0.0
  %v3155 = vsub.f32 %v3142, %v3146
  %v3156 = vadd.f32 %v3154, 1e-05
  %v3157 = vrsqrt.pop %v3156
  %v3158 = vmul.f32 %v3155, %v3157
  %v3159 = vmul.f32 %v3158, %v102
  %v3160 = vadd.f32 %v3159, %v103
  %v3162 = vsel %vm338, %v3160, 0
  %3164 = vmatprep.subr.mxu0 0.0
  %3165 = vmatpush1.msra.mxu0 0.0
  %3166 = vmatprep.subr.mxu0 0.0
  %3167 = vmatpush1.msra.mxu0 0.0
  %3168 = vmatprep.subr.mxu0 0.0
  %3169 = vmatpush1.msra.mxu0 0.0
  %3170 = vmatprep.subr.mxu0 0.0
  %3171 = vmatpush1.msra.mxu0 0.0
  %3172 = vmatprep.subr.mxu0 0.0
  %3173 = vmatpush1.msra.mxu0 0.0
  %3174 = vmatprep.subr.mxu0 0.0
  %3175 = vmatpush1.msra.mxu0 0.0
  %3176 = vmatprep.subr.mxu0 0.0
  %3177 = vmatpush1.msra.mxu0 0.0
  %3178 = vmatprep.subr.mxu0 0.0
  %3179 = vmatpush1.msra.mxu0 0.0
  %3180 = vmatprep.subr.mxu0 0.0
  %3181 = vmatpush1.msra.mxu0 0.0
  %3182 = vmatprep.subr.mxu0 0.0
  %3183 = vmatpush1.msra.mxu0 0.0
  %3184 = vmatprep.subr.mxu0 0.0
  %3185 = vmatpush1.msra.mxu0 0.0
  %3186 = vmatprep.subr.mxu0 0.0
  %3187 = vmatpush1.msra.mxu0 0.0
  %3188 = vmatprep.subr.mxu0 0.0
  %3189 = vmatpush1.msra.mxu0 %v150
  %3190 = vmatprep.subr.mxu0 0.0
  %3191 = vmatpush1.msra.mxu0 %v149
  %3192 = vmatprep.subr.mxu0 0.0
  %3193 = vmatpush1.msra.mxu0 %v148
  %3194 = vmatprep.subr.mxu0 0.0
  %3195 = vmatpush1.msra.mxu0 %v147
  %3196 = vmatprep.subr.mxu0 0.0
  %3197 = vmatpush2.msra.mxu0 0.0
  %3198 = vmatprep.subr.mxu0 0.0
  %3199 = vmatpush2.msra.mxu0 0.0
  %3200 = vmatprep.subr.mxu0 0.0
  %3201 = vmatpush2.msra.mxu0 0.0
  %3202 = vmatprep.subr.mxu0 0.0
  %3203 = vmatpush2.msra.mxu0 0.0
  %3204 = vmatprep.subr.mxu0 0.0
  %3205 = vmatpush2.msra.mxu0 0.0
  %3206 = vmatprep.subr.mxu0 0.0
  %3207 = vmatpush2.msra.mxu0 0.0
  %3208 = vmatprep.subr.mxu0 0.0
  %3209 = vmatpush2.msra.mxu0 0.0
  %3210 = vmatprep.subr.mxu0 0.0
  %3211 = vmatpush2.msra.mxu0 0.0
  %3212 = vmatprep.subr.mxu0 0.0
  %3213 = vmatpush2.msra.mxu0 0.0
  %3214 = vmatprep.subr.mxu0 0.0
  %3215 = vmatpush2.msra.mxu0 0.0
  %3216 = vmatprep.subr.mxu0 0.0
  %3217 = vmatpush2.msra.mxu0 0.0
  %3218 = vmatprep.subr.mxu0 0.0
  %3219 = vmatpush2.msra.mxu0 0.0
  %3220 = vmatprep.subr.mxu0 0.0
  %3221 = vmatpush2.msra.mxu0 0.0
  %3222 = vmatprep.subr.mxu0 0.0
  %3223 = vmatpush2.msra.mxu0 0.0
  %3224 = vmatprep.subr.mxu0 0.0
  %3225 = vmatpush2.msra.mxu0 0.0
  %3226 = vmatprep.subr.mxu0 0.0
  %3227 = vmatpush2.msra.mxu0 0.0
  %3228 = vmatprep.mubr.f32.mxu0 0.0
  %3229 = vmatmul.mubr.f32.gmra.mxu0 %v3162
  %v3230 = vpop.f32.mrf.mxu0
  %v3231 = vadd.f32 %v104, %v3230
  %v3232 = vpop.f32.mrf.mxu0
  %3233 = vdwg.mxu0
  %3234 = vst.msk [vmem:[%s3] sm:$0xff] %vm254, %v3231
  // Predicated region
  $region14: #{tpu_custom_call.1} parent=0 // pred_check
    _
  $region15: #{tpu_custom_call.1} parent=0 // pred_check_branch
    %3236 = sbr.rel (0) target = $region17
  $region16: #{tpu_custom_call.1} parent=0 // pred_region
    _
  $region17: #{tpu_custom_call.1} parent=0 // pred_fallthru
    _
  // Predicated region
  $region18: #{tpu_custom_call.1} parent=0 // pred_check
    _
  $region19: #{tpu_custom_call.1} parent=0 // pred_check_branch
    %3238 = sbr.rel (0) target = $region21
  $region20: #{tpu_custom_call.1} parent=0 // pred_region
    _
  $region21: #{tpu_custom_call.1} parent=0 // pred_fallthru
    _

</llo_original>
